<compile_context>
chip_gen: v6e
topology: v6e:2x2x1
jax: 0.10.0
libtpu: 0.0.40
codegen_flags: <defaults>
</compile_context>

<pallas_src>
import functools

import jax
import jax.numpy as jnp
import numpy as np
from jax.experimental import pallas as pl
from jax.experimental.pallas import tpu as pltpu


def _conv3x3_accum(x, w9_ref, dil, H, W, row, col):
    """3x3 dilated conv with zero padding via 9 per-tap (roll + mask + matmul) steps.

    x      : (Cin, HWs) f32 value.
    w9_ref : Ref of shape (9, Cout, Cin) f32, tap order (ky, kx) row-major.
    row/col: (1, HWs) int32 index planes (precomputed in the wrapper).
    Returns (Cout, HWs) f32 accumulator.
    """
    HW = x.shape[1]
    col_lo = col >= dil            # valid for dx = -dil
    col_hi = col < (W - dil)       # valid for dx = +dil
    row_lo = row >= dil            # valid for dy = -dil
    row_hi = row < (H - dil)       # valid for dy = +dil

    acc = None
    t = 0
    for dy, rmask in ((-dil, row_lo), (0, None), (dil, row_hi)):
        for dx, cmask in ((-dil, col_lo), (0, None), (dil, col_hi)):
            off = dy * W + dx
            tap = x if off == 0 else pltpu.roll(x, shift=(-off) % HW, axis=1)
            m = rmask
            if cmask is not None:
                m = cmask if m is None else jnp.logical_and(m, cmask)
            if m is not None:
                tap = jnp.where(m, tap, 0.0)
            contrib = jnp.dot(w9_ref[t], tap, preferred_element_type=jnp.float32)
            acc = contrib if acc is None else acc + contrib
            t += 1
    return acc


def _combine_kernel(use_low, H, W, *refs):
    if use_low:
        (high_ref, low_ref, row_ref, col_ref,
         w0t_ref, w1_ref, w2_ref, bn1s_ref, bn1b_ref,
         wlowt_ref, bn2s_ref, bn2b_ref,
         a1_ref, wr_ref, bn3s_ref, bn3b_ref, a2_ref, out_ref) = refs
    else:
        (high_ref, row_ref, col_ref,
         w0t_ref, w1_ref, w2_ref, bn1s_ref, bn1b_ref,
         a1_ref, wr_ref, bn3s_ref, bn3b_ref, a2_ref, out_ref) = refs
        low_ref = wlowt_ref = bn2s_ref = bn2b_ref = None

    n = w1_ref.shape[1]

    # bf16 only at the HBM boundary; cast to f32 once for all vreg math.
    high = high_ref[0].astype(jnp.float32)                 # (Cin_high, HW)
    row = row_ref[...]                                     # (1, HW) int32, resident
    col = col_ref[...]

    # conv0 (1x1): (cmid, Cin) @ (Cin, HW) -> (cmid, HW)
    x0 = jnp.dot(w0t_ref[...], high, preferred_element_type=jnp.float32)

    # DilatedParallelConvBlockD2: two dilated 3x3 branches (dil=1 on first n channels,
    # dil=2 on the rest), per-tap accumulated (no im2col buffer).
    b1 = _conv3x3_accum(x0[:n, :], w1_ref, 1, H, W, row, col)   # (n,  HW)
    b2 = _conv3x3_accum(x0[n:, :], w2_ref, 2, H, W, row, col)   # (n2, HW)
    hf = jnp.concatenate([b1, b2], axis=0)                      # (cmid, HW)
    s = hf * bn1s_ref[...] + bn1b_ref[...]                      # BatchNorm2d (eval, folded)

    if use_low:
        low = low_ref[0].astype(jnp.float32)
        lf = jnp.dot(wlowt_ref[...], low, preferred_element_type=jnp.float32)  # up2_low 1x1
        s = s + (lf * bn2s_ref[...] + bn2b_ref[...])            # up2_bn2 (eval, folded)

    # up2_act: PReLU with per-channel alpha
    act = jnp.where(s >= 0.0, s, a1_ref[...] * s)

    # refine: 3x3 conv (per-tap accumulated) -> BatchNorm -> PReLU (single alpha)
    r = _conv3x3_accum(act, wr_ref, 1, H, W, row, col)
    r = r * bn3s_ref[...] + bn3b_ref[...]
    out = jnp.where(r >= 0.0, r, a2_ref[...] * r)
    out_ref[0] = out.astype(out_ref.dtype)                      # lane-dense store


def prepare_params(params):
    """One-time weight prep (hoisted out of the forward path).  All tiny tensors."""
    cmid = params["w0"].shape[-1]
    n = (cmid + 1) // 2
    n2 = cmid - n
    prep = {}
    prep["w0t"] = jnp.transpose(params["w0"]).astype(jnp.float32)      # (cmid, Cin_high)
    prep["wlowt"] = jnp.transpose(params["wlow"]).astype(jnp.float32)  # (cmid, Cin_low)
    # Per-tap weights, tap order (ky, kx) row-major; each tap is (Cout, Cin).
    prep["w1_9"] = jnp.transpose(params["w1"], (0, 1, 3, 2)).reshape(9, n, n).astype(jnp.float32)
    prep["w2_9"] = jnp.transpose(params["w2"], (0, 1, 3, 2)).reshape(9, n2, n2).astype(jnp.float32)
    prep["wr_9"] = jnp.transpose(params["wr"], (0, 1, 3, 2)).reshape(9, cmid, cmid).astype(jnp.float32)
    for src, dst in (("bn1_scale", "bn1s"), ("bn1_bias", "bn1b"),
                     ("bn2_scale", "bn2s"), ("bn2_bias", "bn2b"),
                     ("bn3_scale", "bn3s"), ("bn3_bias", "bn3b"),
                     ("alpha1", "alpha1")):
        prep[dst] = jnp.asarray(params[src]).reshape(cmid, 1).astype(jnp.float32)
    prep["alpha2"] = jnp.asarray(params["alpha2"]).reshape(1, 1).astype(jnp.float32)
    return prep


def conbine_feature_forward(prep, high_nchw, low_nchw=None, out_dtype=jnp.bfloat16):
    B, ch, H, W = high_nchw.shape
    cmid = prep["w0t"].shape[0]
    use_low = low_nchw is not None
    HW = H * W

    # Free metadata reshape only (no NCHW<->NHWC transpose); bf16 at the HBM boundary.
    high = high_nchw.reshape(B, ch, HW).astype(jnp.bfloat16)

    # Row / col index planes precomputed host-side (become compile-time constants under
    # jit); constant index maps below mean they are DMA'd exactly once.
    idx = np.arange(HW, dtype=np.int32)
    row_plane = jnp.asarray((idx // W).reshape(1, HW))
    col_plane = jnp.asarray((idx % W).reshape(1, HW))

    def fixed(shape):
        nd = len(shape)
        return pl.BlockSpec(shape, lambda b, _nd=nd: (0,) * _nd)

    in_specs = [pl.BlockSpec((1, ch, HW), lambda b: (b, 0, 0))]
    args = [high]
    if use_low:
        cl = low_nchw.shape[1]
        low = low_nchw.reshape(B, cl, HW).astype(jnp.bfloat16)
        in_specs.append(pl.BlockSpec((1, cl, HW), lambda b: (b, 0, 0)))
        args.append(low)

    for arr in (row_plane, col_plane):
        in_specs.append(fixed(arr.shape))
        args.append(arr)

    keys = ["w0t", "w1_9", "w2_9", "bn1s", "bn1b"]
    if use_low:
        keys += ["wlowt", "bn2s", "bn2b"]
    keys += ["alpha1", "wr_9", "bn3s", "bn3b", "alpha2"]
    for k in keys:
        arr = prep[k]
        in_specs.append(fixed(arr.shape))
        args.append(arr)

    kernel = functools.partial(_combine_kernel, use_low, H, W)
    out = pl.pallas_call(
        kernel,
        grid=(B,),
        in_specs=in_specs,
        out_specs=pl.BlockSpec((1, cmid, HW), lambda b: (b, 0, 0)),
        out_shape=jax.ShapeDtypeStruct((B, cmid, HW), out_dtype),
        compiler_params=pltpu.CompilerParams(
            dimension_semantics=("parallel",),
            vmem_limit_bytes=64 * 1024 * 1024),
    )(*args)
    return out.reshape(B, cmid, H, W)  # free reshape back to NCHW


# -------------------- deterministic parameter init --------------------

def init_params(key, high_channel, low_channel, middle_channel):
    n = (middle_channel + 1) // 2
    n2 = middle_channel - n
    ks = jax.random.split(key, 20)

    def normal(k, shape, scale=0.1):
        return (scale * jax.random.normal(k, shape)).astype(jnp.float32)

    def bn(kg, kb, km, kv, c):
        # eval-mode BatchNorm folded into per-channel scale / bias
        gamma = 1.0 + 0.1 * jax.random.normal(kg, (c,))
        beta = 0.1 * jax.random.normal(kb, (c,))
        mean = 0.1 * jax.random.normal(km, (c,))
        var = 1.0 + 0.1 * jnp.abs(jax.random.normal(kv, (c,)))
        scale = gamma * jax.lax.rsqrt(var + 1e-5)
        bias = beta - mean * scale
        return (scale.reshape(1, c).astype(jnp.float32),
                bias.reshape(1, c).astype(jnp.float32))

    p = {}
    p["w0"] = normal(ks[0], (high_channel, middle_channel))        # conv0 1x1
    p["w1"] = normal(ks[1], (3, 3, n, n))                          # conv1 3x3 dil1
    p["w2"] = normal(ks[2], (3, 3, n2, n2))                        # conv2 3x3 dil2
    p["bn1_scale"], p["bn1_bias"] = bn(ks[3], ks[4], ks[5], ks[6], middle_channel)
    p["wlow"] = normal(ks[7], (low_channel, middle_channel))       # up2_low 1x1
    p["bn2_scale"], p["bn2_bias"] = bn(ks[8], ks[9], ks[10], ks[11], middle_channel)
    p["alpha1"] = jnp.full((1, middle_channel), 0.25, jnp.float32)  # PReLU(middle)
    p["wr"] = normal(ks[12], (3, 3, middle_channel, middle_channel))  # refine conv
    p["bn3_scale"], p["bn3_bias"] = bn(ks[13], ks[14], ks[15], ks[16], middle_channel)
    p["alpha2"] = jnp.full((1, 1), 0.25, jnp.float32)               # PReLU() (single)
    # TODO(synk): training-mode BatchNorm (batch-stat computation/update) is not
    # implemented; eval-mode running stats are folded into scale/bias instead.
    return p


# -------------------- pure-JAX reference (for validation) --------------------

def _conv1x1_ref(x, w):
    return jax.lax.conv_general_dilated(
        x, w[None, None], (1, 1), "VALID",
        dimension_numbers=("NHWC", "HWIO", "NHWC"),
        precision=jax.lax.Precision.HIGHEST)


def _conv3x3_ref(x, w, dil):
    return jax.lax.conv_general_dilated(
        x, w, (1, 1), ((dil, dil), (dil, dil)), rhs_dilation=(dil, dil),
        dimension_numbers=("NHWC", "HWIO", "NHWC"),
        precision=jax.lax.Precision.HIGHEST)


def reference_forward(params, high_nchw, low_nchw=None):
    cmid = params["w0"].shape[-1]
    n = (cmid + 1) // 2
    x = jnp.transpose(high_nchw, (0, 2, 3, 1)).astype(jnp.float32)
    x0 = _conv1x1_ref(x, params["w0"])
    b1 = _conv3x3_ref(x0[..., :n], params["w1"], 1)
    b2 = _conv3x3_ref(x0[..., n:], params["w2"], 2)
    hf = jnp.concatenate([b1, b2], axis=-1)
    hf = hf * params["bn1_scale"][0] + params["bn1_bias"][0]
    if low_nchw is not None:
        xl = jnp.transpose(low_nchw, (0, 2, 3, 1)).astype(jnp.float32)
        lf = _conv1x1_ref(xl, params["wlow"])
        lf = lf * params["bn2_scale"][0] + params["bn2_bias"][0]
        s = hf + lf
    else:
        s = hf
    a1 = params["alpha1"][0]
    act = jnp.where(s >= 0, s, a1 * s)
    r = _conv3x3_ref(act, params["wr"], 1)
    r = r * params["bn3_scale"][0] + params["bn3_bias"][0]
    a2 = params["alpha2"][0, 0]
    out = jnp.where(r >= 0, r, a2 * r)
    return jnp.transpose(out, (0, 3, 1, 2))


if __name__ == "__main__":
    key = jax.random.PRNGKey(0)
    kp, kh, kl = jax.random.split(key, 3)

    B, H, W = 2, 16, 16
    high_channel, low_channel, middle_channel = 32, 32, 16

    params = init_params(kp, high_channel, low_channel, middle_channel)
    prep = prepare_params(params)   # one-time weight prep (hoisted out of forward)

    # bf16 activations at the HBM boundary; quantize once here so the f32 reference
    # consumes exactly the same input values as the kernel.
    high = jax.random.normal(kh, (B, high_channel, H, W), jnp.float32).astype(jnp.bfloat16)
    low = jax.random.normal(kl, (B, low_channel, H, W), jnp.float32).astype(jnp.bfloat16)

    fwd = jax.jit(conbine_feature_forward)

    # Path with low_fea
    out = jax.block_until_ready(fwd(prep, high, low))
    ref = jax.block_until_ready(reference_forward(params, high, low))
    assert out.shape == (B, middle_channel, H, W)
    np.testing.assert_allclose(np.asarray(out.astype(jnp.float32)), np.asarray(ref),
                               rtol=2e-2, atol=2e-2)

    # Path without low_fea (low_fea=None)
    out2 = jax.block_until_ready(fwd(prep, high, None))
    ref2 = jax.block_until_ready(reference_forward(params, high, None))
    np.testing.assert_allclose(np.asarray(out2.astype(jnp.float32)), np.asarray(ref2),
                               rtol=2e-2, atol=2e-2)

    print("KERNEL_OK")
</pallas_src>

<mosaic_0001>
module attributes {stable_mosaic.version = 11 : i64} {
  func.func @_combine_kernel(%arg0: i32, %arg1: memref<1x32x256xbf16, #tpu.memory_space<vmem>>, %arg2: memref<1x32x256xbf16, #tpu.memory_space<vmem>>, %arg3: memref<1x256xi32, #tpu.memory_space<vmem>>, %arg4: memref<1x256xi32, #tpu.memory_space<vmem>>, %arg5: memref<16x32xf32, #tpu.memory_space<vmem>>, %arg6: memref<9x8x8xf32, #tpu.memory_space<vmem>>, %arg7: memref<9x8x8xf32, #tpu.memory_space<vmem>>, %arg8: memref<16x1xf32, #tpu.memory_space<vmem>>, %arg9: memref<16x1xf32, #tpu.memory_space<vmem>>, %arg10: memref<16x32xf32, #tpu.memory_space<vmem>>, %arg11: memref<16x1xf32, #tpu.memory_space<vmem>>, %arg12: memref<16x1xf32, #tpu.memory_space<vmem>>, %arg13: memref<16x1xf32, #tpu.memory_space<vmem>>, %arg14: memref<9x16x16xf32, #tpu.memory_space<vmem>>, %arg15: memref<16x1xf32, #tpu.memory_space<vmem>>, %arg16: memref<16x1xf32, #tpu.memory_space<vmem>>, %arg17: memref<1x1xf32, #tpu.memory_space<vmem>>, %arg18: memref<1x16x256xbf16, #tpu.memory_space<vmem>>) attributes {dimension_semantics = [#tpu.dimension_semantics<parallel>], iteration_bounds = array<i64: 2>, scalar_prefetch = 0 : i64, scratch_operands = 0 : i64, tpu.core_type = #tpu.core_type<tc>, window_params = [{transform_indices = @transform_0, window_bounds = array<i64: 1, 32, 256>}, {transform_indices = @transform_1, window_bounds = array<i64: 1, 32, 256>}, {pipeline_mode = #tpu.pipeline_mode<synchronous>, transform_indices = @transform_2, window_bounds = array<i64: 1, 256>}, {pipeline_mode = #tpu.pipeline_mode<synchronous>, transform_indices = @transform_3, window_bounds = array<i64: 1, 256>}, {pipeline_mode = #tpu.pipeline_mode<synchronous>, transform_indices = @transform_4, window_bounds = array<i64: 16, 32>}, {pipeline_mode = #tpu.pipeline_mode<synchronous>, transform_indices = @transform_5, window_bounds = array<i64: 9, 8, 8>}, {pipeline_mode = #tpu.pipeline_mode<synchronous>, transform_indices = @transform_6, window_bounds = array<i64: 9, 8, 8>}, {pipeline_mode = #tpu.pipeline_mode<synchronous>, transform_indices = @transform_7, window_bounds = array<i64: 16, 1>}, {pipeline_mode = #tpu.pipeline_mode<synchronous>, transform_indices = @transform_8, window_bounds = array<i64: 16, 1>}, {pipeline_mode = #tpu.pipeline_mode<synchronous>, transform_indices = @transform_9, window_bounds = array<i64: 16, 32>}, {pipeline_mode = #tpu.pipeline_mode<synchronous>, transform_indices = @transform_10, window_bounds = array<i64: 16, 1>}, {pipeline_mode = #tpu.pipeline_mode<synchronous>, transform_indices = @transform_11, window_bounds = array<i64: 16, 1>}, {pipeline_mode = #tpu.pipeline_mode<synchronous>, transform_indices = @transform_12, window_bounds = array<i64: 16, 1>}, {pipeline_mode = #tpu.pipeline_mode<synchronous>, transform_indices = @transform_13, window_bounds = array<i64: 9, 16, 16>}, {pipeline_mode = #tpu.pipeline_mode<synchronous>, transform_indices = @transform_14, window_bounds = array<i64: 16, 1>}, {pipeline_mode = #tpu.pipeline_mode<synchronous>, transform_indices = @transform_15, window_bounds = array<i64: 16, 1>}, {pipeline_mode = #tpu.pipeline_mode<synchronous>, transform_indices = @transform_16, window_bounds = array<i64: 1, 1>}, {transform_indices = @transform_17, window_bounds = array<i64: 1, 16, 256>}]} {
    %c0 = arith.constant 0 : index
    %c0_0 = arith.constant 0 : index
    %c0_1 = arith.constant 0 : index
    %0 = vector.load %arg1[%c0, %c0_0, %c0_1] : memref<1x32x256xbf16, #tpu.memory_space<vmem>>, vector<1x32x256xbf16>
    %1 = vector.shape_cast %0 : vector<1x32x256xbf16> to vector<32x256xbf16>
    %2 = arith.extf %1 : vector<32x256xbf16> to vector<32x256xf32>
    %c0_2 = arith.constant 0 : index
    %c0_3 = arith.constant 0 : index
    %3 = vector.load %arg3[%c0_2, %c0_3] : memref<1x256xi32, #tpu.memory_space<vmem>>, vector<1x256xi32>
    %c0_4 = arith.constant 0 : index
    %c0_5 = arith.constant 0 : index
    %4 = vector.load %arg4[%c0_4, %c0_5] : memref<1x256xi32, #tpu.memory_space<vmem>>, vector<1x256xi32>
    %c0_6 = arith.constant 0 : index
    %c0_7 = arith.constant 0 : index
    %5 = vector.load %arg5[%c0_6, %c0_7] : memref<16x32xf32, #tpu.memory_space<vmem>>, vector<16x32xf32>
    %cst = arith.constant dense<0.000000e+00> : vector<16x256xf32>
    %6 = tpu.matmul %5, %2, %cst {dimension_numbers = #tpu.dot_dimension_numbers<[1], [0], [0], [1], [0, 0, 1, 1], [], []>} : vector<16x32xf32>, vector<32x256xf32>, vector<16x256xf32> -> vector<16x256xf32>
    %7 = vector.extract_strided_slice %6 {offsets = [0, 0], sizes = [8, 256], strides = [1, 1]} : vector<16x256xf32> to vector<8x256xf32>
    %c1_i32 = arith.constant 1 : i32
    %8 = vector.broadcast %c1_i32 : i32 to vector<1x256xi32>
    %9 = arith.cmpi sge, %4, %8 : vector<1x256xi32>
    %c15_i32 = arith.constant 15 : i32
    %10 = vector.broadcast %c15_i32 : i32 to vector<1x256xi32>
    %11 = arith.cmpi slt, %4, %10 : vector<1x256xi32>
    %c1_i32_8 = arith.constant 1 : i32
    %12 = vector.broadcast %c1_i32_8 : i32 to vector<1x256xi32>
    %13 = arith.cmpi sge, %3, %12 : vector<1x256xi32>
    %c15_i32_9 = arith.constant 15 : i32
    %14 = vector.broadcast %c15_i32_9 : i32 to vector<1x256xi32>
    %15 = arith.cmpi slt, %3, %14 : vector<1x256xi32>
    %c17_i32 = arith.constant 17 : i32
    %16 = tpu.dynamic_rotate %7 by %c17_i32 dim 1 : vector<8x256xf32>, i32 -> vector<8x256xf32>
    %17 = arith.andi %13, %9 : vector<1x256xi1>
    %cst_10 = arith.constant 0.000000e+00 : f32
    %18 = vector.shape_cast %17 : vector<1x256xi1> to vector<1x256xi1>
    %19 = vector.broadcast %18 : vector<1x256xi1> to vector<8x256xi1>
    %20 = vector.broadcast %cst_10 : f32 to vector<8x256xf32>
    %21 = arith.select %19, %16, %20 : vector<8x256xi1>, vector<8x256xf32>
    %c0_11 = arith.constant 0 : index
    %c0_12 = arith.constant 0 : index
    %c0_13 = arith.constant 0 : index
    %22 = vector.load %arg6[%c0_11, %c0_12, %c0_13] : memref<9x8x8xf32, #tpu.memory_space<vmem>>, vector<1x8x8xf32>
    %23 = vector.shape_cast %22 : vector<1x8x8xf32> to vector<8x8xf32>
    %cst_14 = arith.constant dense<0.000000e+00> : vector<8x256xf32>
    %24 = tpu.matmul %23, %21, %cst_14 {dimension_numbers = #tpu.dot_dimension_numbers<[1], [0], [0], [1], [0, 0, 1, 1], [], []>} : vector<8x8xf32>, vector<8x256xf32>, vector<8x256xf32> -> vector<8x256xf32>
    %c16_i32 = arith.constant 16 : i32
    %25 = tpu.dynamic_rotate %7 by %c16_i32 dim 1 : vector<8x256xf32>, i32 -> vector<8x256xf32>
    %cst_15 = arith.constant 0.000000e+00 : f32
    %26 = vector.shape_cast %13 : vector<1x256xi1> to vector<1x256xi1>
    %27 = vector.broadcast %26 : vector<1x256xi1> to vector<8x256xi1>
    %28 = vector.broadcast %cst_15 : f32 to vector<8x256xf32>
    %29 = arith.select %27, %25, %28 : vector<8x256xi1>, vector<8x256xf32>
    %c1 = arith.constant 1 : index
    %c0_16 = arith.constant 0 : index
    %c0_17 = arith.constant 0 : index
    %30 = vector.load %arg6[%c1, %c0_16, %c0_17] : memref<9x8x8xf32, #tpu.memory_space<vmem>>, vector<1x8x8xf32>
    %31 = vector.shape_cast %30 : vector<1x8x8xf32> to vector<8x8xf32>
    %cst_18 = arith.constant dense<0.000000e+00> : vector<8x256xf32>
    %32 = tpu.matmul %31, %29, %cst_18 {dimension_numbers = #tpu.dot_dimension_numbers<[1], [0], [0], [1], [0, 0, 1, 1], [], []>} : vector<8x8xf32>, vector<8x256xf32>, vector<8x256xf32> -> vector<8x256xf32>
    %33 = arith.addf %24, %32 : vector<8x256xf32>
    %c15_i32_19 = arith.constant 15 : i32
    %34 = tpu.dynamic_rotate %7 by %c15_i32_19 dim 1 : vector<8x256xf32>, i32 -> vector<8x256xf32>
    %35 = arith.andi %13, %11 : vector<1x256xi1>
    %cst_20 = arith.constant 0.000000e+00 : f32
    %36 = vector.shape_cast %35 : vector<1x256xi1> to vector<1x256xi1>
    %37 = vector.broadcast %36 : vector<1x256xi1> to vector<8x256xi1>
    %38 = vector.broadcast %cst_20 : f32 to vector<8x256xf32>
    %39 = arith.select %37, %34, %38 : vector<8x256xi1>, vector<8x256xf32>
    %c2 = arith.constant 2 : index
    %c0_21 = arith.constant 0 : index
    %c0_22 = arith.constant 0 : index
    %40 = vector.load %arg6[%c2, %c0_21, %c0_22] : memref<9x8x8xf32, #tpu.memory_space<vmem>>, vector<1x8x8xf32>
    %41 = vector.shape_cast %40 : vector<1x8x8xf32> to vector<8x8xf32>
    %cst_23 = arith.constant dense<0.000000e+00> : vector<8x256xf32>
    %42 = tpu.matmul %41, %39, %cst_23 {dimension_numbers = #tpu.dot_dimension_numbers<[1], [0], [0], [1], [0, 0, 1, 1], [], []>} : vector<8x8xf32>, vector<8x256xf32>, vector<8x256xf32> -> vector<8x256xf32>
    %43 = arith.addf %33, %42 : vector<8x256xf32>
    %c1_i32_24 = arith.constant 1 : i32
    %44 = tpu.dynamic_rotate %7 by %c1_i32_24 dim 1 : vector<8x256xf32>, i32 -> vector<8x256xf32>
    %cst_25 = arith.constant 0.000000e+00 : f32
    %45 = vector.shape_cast %9 : vector<1x256xi1> to vector<1x256xi1>
    %46 = vector.broadcast %45 : vector<1x256xi1> to vector<8x256xi1>
    %47 = vector.broadcast %cst_25 : f32 to vector<8x256xf32>
    %48 = arith.select %46, %44, %47 : vector<8x256xi1>, vector<8x256xf32>
    %c3 = arith.constant 3 : index
    %c0_26 = arith.constant 0 : index
    %c0_27 = arith.constant 0 : index
    %49 = vector.load %arg6[%c3, %c0_26, %c0_27] : memref<9x8x8xf32, #tpu.memory_space<vmem>>, vector<1x8x8xf32>
    %50 = vector.shape_cast %49 : vector<1x8x8xf32> to vector<8x8xf32>
    %cst_28 = arith.constant dense<0.000000e+00> : vector<8x256xf32>
    %51 = tpu.matmul %50, %48, %cst_28 {dimension_numbers = #tpu.dot_dimension_numbers<[1], [0], [0], [1], [0, 0, 1, 1], [], []>} : vector<8x8xf32>, vector<8x256xf32>, vector<8x256xf32> -> vector<8x256xf32>
    %52 = arith.addf %43, %51 : vector<8x256xf32>
    %c4 = arith.constant 4 : index
    %c0_29 = arith.constant 0 : index
    %c0_30 = arith.constant 0 : index
    %53 = vector.load %arg6[%c4, %c0_29, %c0_30] : memref<9x8x8xf32, #tpu.memory_space<vmem>>, vector<1x8x8xf32>
    %54 = vector.shape_cast %53 : vector<1x8x8xf32> to vector<8x8xf32>
    %cst_31 = arith.constant dense<0.000000e+00> : vector<8x256xf32>
    %55 = tpu.matmul %54, %7, %cst_31 {dimension_numbers = #tpu.dot_dimension_numbers<[1], [0], [0], [1], [0, 0, 1, 1], [], []>} : vector<8x8xf32>, vector<8x256xf32>, vector<8x256xf32> -> vector<8x256xf32>
    %56 = arith.addf %52, %55 : vector<8x256xf32>
    %c255_i32 = arith.constant 255 : i32
    %57 = tpu.dynamic_rotate %7 by %c255_i32 dim 1 : vector<8x256xf32>, i32 -> vector<8x256xf32>
    %cst_32 = arith.constant 0.000000e+00 : f32
    %58 = vector.shape_cast %11 : vector<1x256xi1> to vector<1x256xi1>
    %59 = vector.broadcast %58 : vector<1x256xi1> to vector<8x256xi1>
    %60 = vector.broadcast %cst_32 : f32 to vector<8x256xf32>
    %61 = arith.select %59, %57, %60 : vector<8x256xi1>, vector<8x256xf32>
    %c5 = arith.constant 5 : index
    %c0_33 = arith.constant 0 : index
    %c0_34 = arith.constant 0 : index
    %62 = vector.load %arg6[%c5, %c0_33, %c0_34] : memref<9x8x8xf32, #tpu.memory_space<vmem>>, vector<1x8x8xf32>
    %63 = vector.shape_cast %62 : vector<1x8x8xf32> to vector<8x8xf32>
    %cst_35 = arith.constant dense<0.000000e+00> : vector<8x256xf32>
    %64 = tpu.matmul %63, %61, %cst_35 {dimension_numbers = #tpu.dot_dimension_numbers<[1], [0], [0], [1], [0, 0, 1, 1], [], []>} : vector<8x8xf32>, vector<8x256xf32>, vector<8x256xf32> -> vector<8x256xf32>
    %65 = arith.addf %56, %64 : vector<8x256xf32>
    %c241_i32 = arith.constant 241 : i32
    %66 = tpu.dynamic_rotate %7 by %c241_i32 dim 1 : vector<8x256xf32>, i32 -> vector<8x256xf32>
    %67 = arith.andi %15, %9 : vector<1x256xi1>
    %cst_36 = arith.constant 0.000000e+00 : f32
    %68 = vector.shape_cast %67 : vector<1x256xi1> to vector<1x256xi1>
    %69 = vector.broadcast %68 : vector<1x256xi1> to vector<8x256xi1>
    %70 = vector.broadcast %cst_36 : f32 to vector<8x256xf32>
    %71 = arith.select %69, %66, %70 : vector<8x256xi1>, vector<8x256xf32>
    %c6 = arith.constant 6 : index
    %c0_37 = arith.constant 0 : index
    %c0_38 = arith.constant 0 : index
    %72 = vector.load %arg6[%c6, %c0_37, %c0_38] : memref<9x8x8xf32, #tpu.memory_space<vmem>>, vector<1x8x8xf32>
    %73 = vector.shape_cast %72 : vector<1x8x8xf32> to vector<8x8xf32>
    %cst_39 = arith.constant dense<0.000000e+00> : vector<8x256xf32>
    %74 = tpu.matmul %73, %71, %cst_39 {dimension_numbers = #tpu.dot_dimension_numbers<[1], [0], [0], [1], [0, 0, 1, 1], [], []>} : vector<8x8xf32>, vector<8x256xf32>, vector<8x256xf32> -> vector<8x256xf32>
    %75 = arith.addf %65, %74 : vector<8x256xf32>
    %c240_i32 = arith.constant 240 : i32
    %76 = tpu.dynamic_rotate %7 by %c240_i32 dim 1 : vector<8x256xf32>, i32 -> vector<8x256xf32>
    %cst_40 = arith.constant 0.000000e+00 : f32
    %77 = vector.shape_cast %15 : vector<1x256xi1> to vector<1x256xi1>
    %78 = vector.broadcast %77 : vector<1x256xi1> to vector<8x256xi1>
    %79 = vector.broadcast %cst_40 : f32 to vector<8x256xf32>
    %80 = arith.select %78, %76, %79 : vector<8x256xi1>, vector<8x256xf32>
    %c7 = arith.constant 7 : index
    %c0_41 = arith.constant 0 : index
    %c0_42 = arith.constant 0 : index
    %81 = vector.load %arg6[%c7, %c0_41, %c0_42] : memref<9x8x8xf32, #tpu.memory_space<vmem>>, vector<1x8x8xf32>
    %82 = vector.shape_cast %81 : vector<1x8x8xf32> to vector<8x8xf32>
    %cst_43 = arith.constant dense<0.000000e+00> : vector<8x256xf32>
    %83 = tpu.matmul %82, %80, %cst_43 {dimension_numbers = #tpu.dot_dimension_numbers<[1], [0], [0], [1], [0, 0, 1, 1], [], []>} : vector<8x8xf32>, vector<8x256xf32>, vector<8x256xf32> -> vector<8x256xf32>
    %84 = arith.addf %75, %83 : vector<8x256xf32>
    %c239_i32 = arith.constant 239 : i32
    %85 = tpu.dynamic_rotate %7 by %c239_i32 dim 1 : vector<8x256xf32>, i32 -> vector<8x256xf32>
    %86 = arith.andi %15, %11 : vector<1x256xi1>
    %cst_44 = arith.constant 0.000000e+00 : f32
    %87 = vector.shape_cast %86 : vector<1x256xi1> to vector<1x256xi1>
    %88 = vector.broadcast %87 : vector<1x256xi1> to vector<8x256xi1>
    %89 = vector.broadcast %cst_44 : f32 to vector<8x256xf32>
    %90 = arith.select %88, %85, %89 : vector<8x256xi1>, vector<8x256xf32>
    %c8 = arith.constant 8 : index
    %c0_45 = arith.constant 0 : index
    %c0_46 = arith.constant 0 : index
    %91 = vector.load %arg6[%c8, %c0_45, %c0_46] : memref<9x8x8xf32, #tpu.memory_space<vmem>>, vector<1x8x8xf32>
    %92 = vector.shape_cast %91 : vector<1x8x8xf32> to vector<8x8xf32>
    %cst_47 = arith.constant dense<0.000000e+00> : vector<8x256xf32>
    %93 = tpu.matmul %92, %90, %cst_47 {dimension_numbers = #tpu.dot_dimension_numbers<[1], [0], [0], [1], [0, 0, 1, 1], [], []>} : vector<8x8xf32>, vector<8x256xf32>, vector<8x256xf32> -> vector<8x256xf32>
    %94 = arith.addf %84, %93 : vector<8x256xf32>
    %95 = vector.extract_strided_slice %6 {offsets = [8, 0], sizes = [8, 256], strides = [1, 1]} : vector<16x256xf32> to vector<8x256xf32>
    %c2_i32 = arith.constant 2 : i32
    %96 = vector.broadcast %c2_i32 : i32 to vector<1x256xi32>
    %97 = arith.cmpi sge, %4, %96 : vector<1x256xi32>
    %c14_i32 = arith.constant 14 : i32
    %98 = vector.broadcast %c14_i32 : i32 to vector<1x256xi32>
    %99 = arith.cmpi slt, %4, %98 : vector<1x256xi32>
    %c2_i32_48 = arith.constant 2 : i32
    %100 = vector.broadcast %c2_i32_48 : i32 to vector<1x256xi32>
    %101 = arith.cmpi sge, %3, %100 : vector<1x256xi32>
    %c14_i32_49 = arith.constant 14 : i32
    %102 = vector.broadcast %c14_i32_49 : i32 to vector<1x256xi32>
    %103 = arith.cmpi slt, %3, %102 : vector<1x256xi32>
    %c34_i32 = arith.constant 34 : i32
    %104 = tpu.dynamic_rotate %95 by %c34_i32 dim 1 : vector<8x256xf32>, i32 -> vector<8x256xf32>
    %105 = arith.andi %101, %97 : vector<1x256xi1>
    %cst_50 = arith.constant 0.000000e+00 : f32
    %106 = vector.shape_cast %105 : vector<1x256xi1> to vector<1x256xi1>
    %107 = vector.broadcast %106 : vector<1x256xi1> to vector<8x256xi1>
    %108 = vector.broadcast %cst_50 : f32 to vector<8x256xf32>
    %109 = arith.select %107, %104, %108 : vector<8x256xi1>, vector<8x256xf32>
    %c0_51 = arith.constant 0 : index
    %c0_52 = arith.constant 0 : index
    %c0_53 = arith.constant 0 : index
    %110 = vector.load %arg7[%c0_51, %c0_52, %c0_53] : memref<9x8x8xf32, #tpu.memory_space<vmem>>, vector<1x8x8xf32>
    %111 = vector.shape_cast %110 : vector<1x8x8xf32> to vector<8x8xf32>
    %cst_54 = arith.constant dense<0.000000e+00> : vector<8x256xf32>
    %112 = tpu.matmul %111, %109, %cst_54 {dimension_numbers = #tpu.dot_dimension_numbers<[1], [0], [0], [1], [0, 0, 1, 1], [], []>} : vector<8x8xf32>, vector<8x256xf32>, vector<8x256xf32> -> vector<8x256xf32>
    %c32_i32 = arith.constant 32 : i32
    %113 = tpu.dynamic_rotate %95 by %c32_i32 dim 1 : vector<8x256xf32>, i32 -> vector<8x256xf32>
    %cst_55 = arith.constant 0.000000e+00 : f32
    %114 = vector.shape_cast %101 : vector<1x256xi1> to vector<1x256xi1>
    %115 = vector.broadcast %114 : vector<1x256xi1> to vector<8x256xi1>
    %116 = vector.broadcast %cst_55 : f32 to vector<8x256xf32>
    %117 = arith.select %115, %113, %116 : vector<8x256xi1>, vector<8x256xf32>
    %c1_56 = arith.constant 1 : index
    %c0_57 = arith.constant 0 : index
    %c0_58 = arith.constant 0 : index
    %118 = vector.load %arg7[%c1_56, %c0_57, %c0_58] : memref<9x8x8xf32, #tpu.memory_space<vmem>>, vector<1x8x8xf32>
    %119 = vector.shape_cast %118 : vector<1x8x8xf32> to vector<8x8xf32>
    %cst_59 = arith.constant dense<0.000000e+00> : vector<8x256xf32>
    %120 = tpu.matmul %119, %117, %cst_59 {dimension_numbers = #tpu.dot_dimension_numbers<[1], [0], [0], [1], [0, 0, 1, 1], [], []>} : vector<8x8xf32>, vector<8x256xf32>, vector<8x256xf32> -> vector<8x256xf32>
    %121 = arith.addf %112, %120 : vector<8x256xf32>
    %c30_i32 = arith.constant 30 : i32
    %122 = tpu.dynamic_rotate %95 by %c30_i32 dim 1 : vector<8x256xf32>, i32 -> vector<8x256xf32>
    %123 = arith.andi %101, %99 : vector<1x256xi1>
    %cst_60 = arith.constant 0.000000e+00 : f32
    %124 = vector.shape_cast %123 : vector<1x256xi1> to vector<1x256xi1>
    %125 = vector.broadcast %124 : vector<1x256xi1> to vector<8x256xi1>
    %126 = vector.broadcast %cst_60 : f32 to vector<8x256xf32>
    %127 = arith.select %125, %122, %126 : vector<8x256xi1>, vector<8x256xf32>
    %c2_61 = arith.constant 2 : index
    %c0_62 = arith.constant 0 : index
    %c0_63 = arith.constant 0 : index
    %128 = vector.load %arg7[%c2_61, %c0_62, %c0_63] : memref<9x8x8xf32, #tpu.memory_space<vmem>>, vector<1x8x8xf32>
    %129 = vector.shape_cast %128 : vector<1x8x8xf32> to vector<8x8xf32>
    %cst_64 = arith.constant dense<0.000000e+00> : vector<8x256xf32>
    %130 = tpu.matmul %129, %127, %cst_64 {dimension_numbers = #tpu.dot_dimension_numbers<[1], [0], [0], [1], [0, 0, 1, 1], [], []>} : vector<8x8xf32>, vector<8x256xf32>, vector<8x256xf32> -> vector<8x256xf32>
    %131 = arith.addf %121, %130 : vector<8x256xf32>
    %c2_i32_65 = arith.constant 2 : i32
    %132 = tpu.dynamic_rotate %95 by %c2_i32_65 dim 1 : vector<8x256xf32>, i32 -> vector<8x256xf32>
    %cst_66 = arith.constant 0.000000e+00 : f32
    %133 = vector.shape_cast %97 : vector<1x256xi1> to vector<1x256xi1>
    %134 = vector.broadcast %133 : vector<1x256xi1> to vector<8x256xi1>
    %135 = vector.broadcast %cst_66 : f32 to vector<8x256xf32>
    %136 = arith.select %134, %132, %135 : vector<8x256xi1>, vector<8x256xf32>
    %c3_67 = arith.constant 3 : index
    %c0_68 = arith.constant 0 : index
    %c0_69 = arith.constant 0 : index
    %137 = vector.load %arg7[%c3_67, %c0_68, %c0_69] : memref<9x8x8xf32, #tpu.memory_space<vmem>>, vector<1x8x8xf32>
    %138 = vector.shape_cast %137 : vector<1x8x8xf32> to vector<8x8xf32>
    %cst_70 = arith.constant dense<0.000000e+00> : vector<8x256xf32>
    %139 = tpu.matmul %138, %136, %cst_70 {dimension_numbers = #tpu.dot_dimension_numbers<[1], [0], [0], [1], [0, 0, 1, 1], [], []>} : vector<8x8xf32>, vector<8x256xf32>, vector<8x256xf32> -> vector<8x256xf32>
    %140 = arith.addf %131, %139 : vector<8x256xf32>
    %c4_71 = arith.constant 4 : index
    %c0_72 = arith.constant 0 : index
    %c0_73 = arith.constant 0 : index
    %141 = vector.load %arg7[%c4_71, %c0_72, %c0_73] : memref<9x8x8xf32, #tpu.memory_space<vmem>>, vector<1x8x8xf32>
    %142 = vector.shape_cast %141 : vector<1x8x8xf32> to vector<8x8xf32>
    %cst_74 = arith.constant dense<0.000000e+00> : vector<8x256xf32>
    %143 = tpu.matmul %142, %95, %cst_74 {dimension_numbers = #tpu.dot_dimension_numbers<[1], [0], [0], [1], [0, 0, 1, 1], [], []>} : vector<8x8xf32>, vector<8x256xf32>, vector<8x256xf32> -> vector<8x256xf32>
    %144 = arith.addf %140, %143 : vector<8x256xf32>
    %c254_i32 = arith.constant 254 : i32
    %145 = tpu.dynamic_rotate %95 by %c254_i32 dim 1 : vector<8x256xf32>, i32 -> vector<8x256xf32>
    %cst_75 = arith.constant 0.000000e+00 : f32
    %146 = vector.shape_cast %99 : vector<1x256xi1> to vector<1x256xi1>
    %147 = vector.broadcast %146 : vector<1x256xi1> to vector<8x256xi1>
    %148 = vector.broadcast %cst_75 : f32 to vector<8x256xf32>
    %149 = arith.select %147, %145, %148 : vector<8x256xi1>, vector<8x256xf32>
    %c5_76 = arith.constant 5 : index
    %c0_77 = arith.constant 0 : index
    %c0_78 = arith.constant 0 : index
    %150 = vector.load %arg7[%c5_76, %c0_77, %c0_78] : memref<9x8x8xf32, #tpu.memory_space<vmem>>, vector<1x8x8xf32>
    %151 = vector.shape_cast %150 : vector<1x8x8xf32> to vector<8x8xf32>
    %cst_79 = arith.constant dense<0.000000e+00> : vector<8x256xf32>
    %152 = tpu.matmul %151, %149, %cst_79 {dimension_numbers = #tpu.dot_dimension_numbers<[1], [0], [0], [1], [0, 0, 1, 1], [], []>} : vector<8x8xf32>, vector<8x256xf32>, vector<8x256xf32> -> vector<8x256xf32>
    %153 = arith.addf %144, %152 : vector<8x256xf32>
    %c226_i32 = arith.constant 226 : i32
    %154 = tpu.dynamic_rotate %95 by %c226_i32 dim 1 : vector<8x256xf32>, i32 -> vector<8x256xf32>
    %155 = arith.andi %103, %97 : vector<1x256xi1>
    %cst_80 = arith.constant 0.000000e+00 : f32
    %156 = vector.shape_cast %155 : vector<1x256xi1> to vector<1x256xi1>
    %157 = vector.broadcast %156 : vector<1x256xi1> to vector<8x256xi1>
    %158 = vector.broadcast %cst_80 : f32 to vector<8x256xf32>
    %159 = arith.select %157, %154, %158 : vector<8x256xi1>, vector<8x256xf32>
    %c6_81 = arith.constant 6 : index
    %c0_82 = arith.constant 0 : index
    %c0_83 = arith.constant 0 : index
    %160 = vector.load %arg7[%c6_81, %c0_82, %c0_83] : memref<9x8x8xf32, #tpu.memory_space<vmem>>, vector<1x8x8xf32>
    %161 = vector.shape_cast %160 : vector<1x8x8xf32> to vector<8x8xf32>
    %cst_84 = arith.constant dense<0.000000e+00> : vector<8x256xf32>
    %162 = tpu.matmul %161, %159, %cst_84 {dimension_numbers = #tpu.dot_dimension_numbers<[1], [0], [0], [1], [0, 0, 1, 1], [], []>} : vector<8x8xf32>, vector<8x256xf32>, vector<8x256xf32> -> vector<8x256xf32>
    %163 = arith.addf %153, %162 : vector<8x256xf32>
    %c224_i32 = arith.constant 224 : i32
    %164 = tpu.dynamic_rotate %95 by %c224_i32 dim 1 : vector<8x256xf32>, i32 -> vector<8x256xf32>
    %cst_85 = arith.constant 0.000000e+00 : f32
    %165 = vector.shape_cast %103 : vector<1x256xi1> to vector<1x256xi1>
    %166 = vector.broadcast %165 : vector<1x256xi1> to vector<8x256xi1>
    %167 = vector.broadcast %cst_85 : f32 to vector<8x256xf32>
    %168 = arith.select %166, %164, %167 : vector<8x256xi1>, vector<8x256xf32>
    %c7_86 = arith.constant 7 : index
    %c0_87 = arith.constant 0 : index
    %c0_88 = arith.constant 0 : index
    %169 = vector.load %arg7[%c7_86, %c0_87, %c0_88] : memref<9x8x8xf32, #tpu.memory_space<vmem>>, vector<1x8x8xf32>
    %170 = vector.shape_cast %169 : vector<1x8x8xf32> to vector<8x8xf32>
    %cst_89 = arith.constant dense<0.000000e+00> : vector<8x256xf32>
    %171 = tpu.matmul %170, %168, %cst_89 {dimension_numbers = #tpu.dot_dimension_numbers<[1], [0], [0], [1], [0, 0, 1, 1], [], []>} : vector<8x8xf32>, vector<8x256xf32>, vector<8x256xf32> -> vector<8x256xf32>
    %172 = arith.addf %163, %171 : vector<8x256xf32>
    %c222_i32 = arith.constant 222 : i32
    %173 = tpu.dynamic_rotate %95 by %c222_i32 dim 1 : vector<8x256xf32>, i32 -> vector<8x256xf32>
    %174 = arith.andi %103, %99 : vector<1x256xi1>
    %cst_90 = arith.constant 0.000000e+00 : f32
    %175 = vector.shape_cast %174 : vector<1x256xi1> to vector<1x256xi1>
    %176 = vector.broadcast %175 : vector<1x256xi1> to vector<8x256xi1>
    %177 = vector.broadcast %cst_90 : f32 to vector<8x256xf32>
    %178 = arith.select %176, %173, %177 : vector<8x256xi1>, vector<8x256xf32>
    %c8_91 = arith.constant 8 : index
    %c0_92 = arith.constant 0 : index
    %c0_93 = arith.constant 0 : index
    %179 = vector.load %arg7[%c8_91, %c0_92, %c0_93] : memref<9x8x8xf32, #tpu.memory_space<vmem>>, vector<1x8x8xf32>
    %180 = vector.shape_cast %179 : vector<1x8x8xf32> to vector<8x8xf32>
    %cst_94 = arith.constant dense<0.000000e+00> : vector<8x256xf32>
    %181 = tpu.matmul %180, %178, %cst_94 {dimension_numbers = #tpu.dot_dimension_numbers<[1], [0], [0], [1], [0, 0, 1, 1], [], []>} : vector<8x8xf32>, vector<8x256xf32>, vector<8x256xf32> -> vector<8x256xf32>
    %182 = arith.addf %172, %181 : vector<8x256xf32>
    %183 = tpu.concatenate %94, %182 in 0 : vector<8x256xf32>, vector<8x256xf32> -> vector<16x256xf32>
    %c0_95 = arith.constant 0 : index
    %c0_96 = arith.constant 0 : index
    %184 = vector.load %arg8[%c0_95, %c0_96] : memref<16x1xf32, #tpu.memory_space<vmem>>, vector<16x1xf32>
    %185 = vector.broadcast %184 : vector<16x1xf32> to vector<16x256xf32>
    %186 = arith.mulf %183, %185 : vector<16x256xf32>
    %c0_97 = arith.constant 0 : index
    %c0_98 = arith.constant 0 : index
    %187 = vector.load %arg9[%c0_97, %c0_98] : memref<16x1xf32, #tpu.memory_space<vmem>>, vector<16x1xf32>
    %188 = vector.broadcast %187 : vector<16x1xf32> to vector<16x256xf32>
    %189 = arith.addf %186, %188 : vector<16x256xf32>
    %c0_99 = arith.constant 0 : index
    %c0_100 = arith.constant 0 : index
    %c0_101 = arith.constant 0 : index
    %190 = vector.load %arg2[%c0_99, %c0_100, %c0_101] : memref<1x32x256xbf16, #tpu.memory_space<vmem>>, vector<1x32x256xbf16>
    %191 = vector.shape_cast %190 : vector<1x32x256xbf16> to vector<32x256xbf16>
    %192 = arith.extf %191 : vector<32x256xbf16> to vector<32x256xf32>
    %c0_102 = arith.constant 0 : index
    %c0_103 = arith.constant 0 : index
    %193 = vector.load %arg10[%c0_102, %c0_103] : memref<16x32xf32, #tpu.memory_space<vmem>>, vector<16x32xf32>
    %cst_104 = arith.constant dense<0.000000e+00> : vector<16x256xf32>
    %194 = tpu.matmul %193, %192, %cst_104 {dimension_numbers = #tpu.dot_dimension_numbers<[1], [0], [0], [1], [0, 0, 1, 1], [], []>} : vector<16x32xf32>, vector<32x256xf32>, vector<16x256xf32> -> vector<16x256xf32>
    %c0_105 = arith.constant 0 : index
    %c0_106 = arith.constant 0 : index
    %195 = vector.load %arg11[%c0_105, %c0_106] : memref<16x1xf32, #tpu.memory_space<vmem>>, vector<16x1xf32>
    %196 = vector.broadcast %195 : vector<16x1xf32> to vector<16x256xf32>
    %197 = arith.mulf %194, %196 : vector<16x256xf32>
    %c0_107 = arith.constant 0 : index
    %c0_108 = arith.constant 0 : index
    %198 = vector.load %arg12[%c0_107, %c0_108] : memref<16x1xf32, #tpu.memory_space<vmem>>, vector<16x1xf32>
    %199 = vector.broadcast %198 : vector<16x1xf32> to vector<16x256xf32>
    %200 = arith.addf %197, %199 : vector<16x256xf32>
    %201 = arith.addf %189, %200 : vector<16x256xf32>
    %cst_109 = arith.constant 0.000000e+00 : f32
    %202 = vector.broadcast %cst_109 : f32 to vector<16x256xf32>
    %203 = arith.cmpf oge, %201, %202 : vector<16x256xf32>
    %c0_110 = arith.constant 0 : index
    %c0_111 = arith.constant 0 : index
    %204 = vector.load %arg13[%c0_110, %c0_111] : memref<16x1xf32, #tpu.memory_space<vmem>>, vector<16x1xf32>
    %205 = vector.broadcast %204 : vector<16x1xf32> to vector<16x256xf32>
    %206 = arith.mulf %205, %201 : vector<16x256xf32>
    %207 = arith.select %203, %201, %206 : vector<16x256xi1>, vector<16x256xf32>
    %c1_i32_112 = arith.constant 1 : i32
    %208 = vector.broadcast %c1_i32_112 : i32 to vector<1x256xi32>
    %209 = arith.cmpi sge, %4, %208 : vector<1x256xi32>
    %c15_i32_113 = arith.constant 15 : i32
    %210 = vector.broadcast %c15_i32_113 : i32 to vector<1x256xi32>
    %211 = arith.cmpi slt, %4, %210 : vector<1x256xi32>
    %c1_i32_114 = arith.constant 1 : i32
    %212 = vector.broadcast %c1_i32_114 : i32 to vector<1x256xi32>
    %213 = arith.cmpi sge, %3, %212 : vector<1x256xi32>
    %c15_i32_115 = arith.constant 15 : i32
    %214 = vector.broadcast %c15_i32_115 : i32 to vector<1x256xi32>
    %215 = arith.cmpi slt, %3, %214 : vector<1x256xi32>
    %c17_i32_116 = arith.constant 17 : i32
    %216 = tpu.dynamic_rotate %207 by %c17_i32_116 dim 1 : vector<16x256xf32>, i32 -> vector<16x256xf32>
    %217 = arith.andi %213, %209 : vector<1x256xi1>
    %cst_117 = arith.constant 0.000000e+00 : f32
    %218 = vector.shape_cast %217 : vector<1x256xi1> to vector<1x256xi1>
    %219 = vector.broadcast %218 : vector<1x256xi1> to vector<16x256xi1>
    %220 = vector.broadcast %cst_117 : f32 to vector<16x256xf32>
    %221 = arith.select %219, %216, %220 : vector<16x256xi1>, vector<16x256xf32>
    %c0_118 = arith.constant 0 : index
    %c0_119 = arith.constant 0 : index
    %c0_120 = arith.constant 0 : index
    %222 = vector.load %arg14[%c0_118, %c0_119, %c0_120] : memref<9x16x16xf32, #tpu.memory_space<vmem>>, vector<1x16x16xf32>
    %223 = vector.shape_cast %222 : vector<1x16x16xf32> to vector<16x16xf32>
    %cst_121 = arith.constant dense<0.000000e+00> : vector<16x256xf32>
    %224 = tpu.matmul %223, %221, %cst_121 {dimension_numbers = #tpu.dot_dimension_numbers<[1], [0], [0], [1], [0, 0, 1, 1], [], []>} : vector<16x16xf32>, vector<16x256xf32>, vector<16x256xf32> -> vector<16x256xf32>
    %c16_i32_122 = arith.constant 16 : i32
    %225 = tpu.dynamic_rotate %207 by %c16_i32_122 dim 1 : vector<16x256xf32>, i32 -> vector<16x256xf32>
    %cst_123 = arith.constant 0.000000e+00 : f32
    %226 = vector.shape_cast %213 : vector<1x256xi1> to vector<1x256xi1>
    %227 = vector.broadcast %226 : vector<1x256xi1> to vector<16x256xi1>
    %228 = vector.broadcast %cst_123 : f32 to vector<16x256xf32>
    %229 = arith.select %227, %225, %228 : vector<16x256xi1>, vector<16x256xf32>
    %c1_124 = arith.constant 1 : index
    %c0_125 = arith.constant 0 : index
    %c0_126 = arith.constant 0 : index
    %230 = vector.load %arg14[%c1_124, %c0_125, %c0_126] : memref<9x16x16xf32, #tpu.memory_space<vmem>>, vector<1x16x16xf32>
    %231 = vector.shape_cast %230 : vector<1x16x16xf32> to vector<16x16xf32>
    %cst_127 = arith.constant dense<0.000000e+00> : vector<16x256xf32>
    %232 = tpu.matmul %231, %229, %cst_127 {dimension_numbers = #tpu.dot_dimension_numbers<[1], [0], [0], [1], [0, 0, 1, 1], [], []>} : vector<16x16xf32>, vector<16x256xf32>, vector<16x256xf32> -> vector<16x256xf32>
    %233 = arith.addf %224, %232 : vector<16x256xf32>
    %c15_i32_128 = arith.constant 15 : i32
    %234 = tpu.dynamic_rotate %207 by %c15_i32_128 dim 1 : vector<16x256xf32>, i32 -> vector<16x256xf32>
    %235 = arith.andi %213, %211 : vector<1x256xi1>
    %cst_129 = arith.constant 0.000000e+00 : f32
    %236 = vector.shape_cast %235 : vector<1x256xi1> to vector<1x256xi1>
    %237 = vector.broadcast %236 : vector<1x256xi1> to vector<16x256xi1>
    %238 = vector.broadcast %cst_129 : f32 to vector<16x256xf32>
    %239 = arith.select %237, %234, %238 : vector<16x256xi1>, vector<16x256xf32>
    %c2_130 = arith.constant 2 : index
    %c0_131 = arith.constant 0 : index
    %c0_132 = arith.constant 0 : index
    %240 = vector.load %arg14[%c2_130, %c0_131, %c0_132] : memref<9x16x16xf32, #tpu.memory_space<vmem>>, vector<1x16x16xf32>
    %241 = vector.shape_cast %240 : vector<1x16x16xf32> to vector<16x16xf32>
    %cst_133 = arith.constant dense<0.000000e+00> : vector<16x256xf32>
    %242 = tpu.matmul %241, %239, %cst_133 {dimension_numbers = #tpu.dot_dimension_numbers<[1], [0], [0], [1], [0, 0, 1, 1], [], []>} : vector<16x16xf32>, vector<16x256xf32>, vector<16x256xf32> -> vector<16x256xf32>
    %243 = arith.addf %233, %242 : vector<16x256xf32>
    %c1_i32_134 = arith.constant 1 : i32
    %244 = tpu.dynamic_rotate %207 by %c1_i32_134 dim 1 : vector<16x256xf32>, i32 -> vector<16x256xf32>
    %cst_135 = arith.constant 0.000000e+00 : f32
    %245 = vector.shape_cast %209 : vector<1x256xi1> to vector<1x256xi1>
    %246 = vector.broadcast %245 : vector<1x256xi1> to vector<16x256xi1>
    %247 = vector.broadcast %cst_135 : f32 to vector<16x256xf32>
    %248 = arith.select %246, %244, %247 : vector<16x256xi1>, vector<16x256xf32>
    %c3_136 = arith.constant 3 : index
    %c0_137 = arith.constant 0 : index
    %c0_138 = arith.constant 0 : index
    %249 = vector.load %arg14[%c3_136, %c0_137, %c0_138] : memref<9x16x16xf32, #tpu.memory_space<vmem>>, vector<1x16x16xf32>
    %250 = vector.shape_cast %249 : vector<1x16x16xf32> to vector<16x16xf32>
    %cst_139 = arith.constant dense<0.000000e+00> : vector<16x256xf32>
    %251 = tpu.matmul %250, %248, %cst_139 {dimension_numbers = #tpu.dot_dimension_numbers<[1], [0], [0], [1], [0, 0, 1, 1], [], []>} : vector<16x16xf32>, vector<16x256xf32>, vector<16x256xf32> -> vector<16x256xf32>
    %252 = arith.addf %243, %251 : vector<16x256xf32>
    %c4_140 = arith.constant 4 : index
    %c0_141 = arith.constant 0 : index
    %c0_142 = arith.constant 0 : index
    %253 = vector.load %arg14[%c4_140, %c0_141, %c0_142] : memref<9x16x16xf32, #tpu.memory_space<vmem>>, vector<1x16x16xf32>
    %254 = vector.shape_cast %253 : vector<1x16x16xf32> to vector<16x16xf32>
    %cst_143 = arith.constant dense<0.000000e+00> : vector<16x256xf32>
    %255 = tpu.matmul %254, %207, %cst_143 {dimension_numbers = #tpu.dot_dimension_numbers<[1], [0], [0], [1], [0, 0, 1, 1], [], []>} : vector<16x16xf32>, vector<16x256xf32>, vector<16x256xf32> -> vector<16x256xf32>
    %256 = arith.addf %252, %255 : vector<16x256xf32>
    %c255_i32_144 = arith.constant 255 : i32
    %257 = tpu.dynamic_rotate %207 by %c255_i32_144 dim 1 : vector<16x256xf32>, i32 -> vector<16x256xf32>
    %cst_145 = arith.constant 0.000000e+00 : f32
    %258 = vector.shape_cast %211 : vector<1x256xi1> to vector<1x256xi1>
    %259 = vector.broadcast %258 : vector<1x256xi1> to vector<16x256xi1>
    %260 = vector.broadcast %cst_145 : f32 to vector<16x256xf32>
    %261 = arith.select %259, %257, %260 : vector<16x256xi1>, vector<16x256xf32>
    %c5_146 = arith.constant 5 : index
    %c0_147 = arith.constant 0 : index
    %c0_148 = arith.constant 0 : index
    %262 = vector.load %arg14[%c5_146, %c0_147, %c0_148] : memref<9x16x16xf32, #tpu.memory_space<vmem>>, vector<1x16x16xf32>
    %263 = vector.shape_cast %262 : vector<1x16x16xf32> to vector<16x16xf32>
    %cst_149 = arith.constant dense<0.000000e+00> : vector<16x256xf32>
    %264 = tpu.matmul %263, %261, %cst_149 {dimension_numbers = #tpu.dot_dimension_numbers<[1], [0], [0], [1], [0, 0, 1, 1], [], []>} : vector<16x16xf32>, vector<16x256xf32>, vector<16x256xf32> -> vector<16x256xf32>
    %265 = arith.addf %256, %264 : vector<16x256xf32>
    %c241_i32_150 = arith.constant 241 : i32
    %266 = tpu.dynamic_rotate %207 by %c241_i32_150 dim 1 : vector<16x256xf32>, i32 -> vector<16x256xf32>
    %267 = arith.andi %215, %209 : vector<1x256xi1>
    %cst_151 = arith.constant 0.000000e+00 : f32
    %268 = vector.shape_cast %267 : vector<1x256xi1> to vector<1x256xi1>
    %269 = vector.broadcast %268 : vector<1x256xi1> to vector<16x256xi1>
    %270 = vector.broadcast %cst_151 : f32 to vector<16x256xf32>
    %271 = arith.select %269, %266, %270 : vector<16x256xi1>, vector<16x256xf32>
    %c6_152 = arith.constant 6 : index
    %c0_153 = arith.constant 0 : index
    %c0_154 = arith.constant 0 : index
    %272 = vector.load %arg14[%c6_152, %c0_153, %c0_154] : memref<9x16x16xf32, #tpu.memory_space<vmem>>, vector<1x16x16xf32>
    %273 = vector.shape_cast %272 : vector<1x16x16xf32> to vector<16x16xf32>
    %cst_155 = arith.constant dense<0.000000e+00> : vector<16x256xf32>
    %274 = tpu.matmul %273, %271, %cst_155 {dimension_numbers = #tpu.dot_dimension_numbers<[1], [0], [0], [1], [0, 0, 1, 1], [], []>} : vector<16x16xf32>, vector<16x256xf32>, vector<16x256xf32> -> vector<16x256xf32>
    %275 = arith.addf %265, %274 : vector<16x256xf32>
    %c240_i32_156 = arith.constant 240 : i32
    %276 = tpu.dynamic_rotate %207 by %c240_i32_156 dim 1 : vector<16x256xf32>, i32 -> vector<16x256xf32>
    %cst_157 = arith.constant 0.000000e+00 : f32
    %277 = vector.shape_cast %215 : vector<1x256xi1> to vector<1x256xi1>
    %278 = vector.broadcast %277 : vector<1x256xi1> to vector<16x256xi1>
    %279 = vector.broadcast %cst_157 : f32 to vector<16x256xf32>
    %280 = arith.select %278, %276, %279 : vector<16x256xi1>, vector<16x256xf32>
    %c7_158 = arith.constant 7 : index
    %c0_159 = arith.constant 0 : index
    %c0_160 = arith.constant 0 : index
    %281 = vector.load %arg14[%c7_158, %c0_159, %c0_160] : memref<9x16x16xf32, #tpu.memory_space<vmem>>, vector<1x16x16xf32>
    %282 = vector.shape_cast %281 : vector<1x16x16xf32> to vector<16x16xf32>
    %cst_161 = arith.constant dense<0.000000e+00> : vector<16x256xf32>
    %283 = tpu.matmul %282, %280, %cst_161 {dimension_numbers = #tpu.dot_dimension_numbers<[1], [0], [0], [1], [0, 0, 1, 1], [], []>} : vector<16x16xf32>, vector<16x256xf32>, vector<16x256xf32> -> vector<16x256xf32>
    %284 = arith.addf %275, %283 : vector<16x256xf32>
    %c239_i32_162 = arith.constant 239 : i32
    %285 = tpu.dynamic_rotate %207 by %c239_i32_162 dim 1 : vector<16x256xf32>, i32 -> vector<16x256xf32>
    %286 = arith.andi %215, %211 : vector<1x256xi1>
    %cst_163 = arith.constant 0.000000e+00 : f32
    %287 = vector.shape_cast %286 : vector<1x256xi1> to vector<1x256xi1>
    %288 = vector.broadcast %287 : vector<1x256xi1> to vector<16x256xi1>
    %289 = vector.broadcast %cst_163 : f32 to vector<16x256xf32>
    %290 = arith.select %288, %285, %289 : vector<16x256xi1>, vector<16x256xf32>
    %c8_164 = arith.constant 8 : index
    %c0_165 = arith.constant 0 : index
    %c0_166 = arith.constant 0 : index
    %291 = vector.load %arg14[%c8_164, %c0_165, %c0_166] : memref<9x16x16xf32, #tpu.memory_space<vmem>>, vector<1x16x16xf32>
    %292 = vector.shape_cast %291 : vector<1x16x16xf32> to vector<16x16xf32>
    %cst_167 = arith.constant dense<0.000000e+00> : vector<16x256xf32>
    %293 = tpu.matmul %292, %290, %cst_167 {dimension_numbers = #tpu.dot_dimension_numbers<[1], [0], [0], [1], [0, 0, 1, 1], [], []>} : vector<16x16xf32>, vector<16x256xf32>, vector<16x256xf32> -> vector<16x256xf32>
    %294 = arith.addf %284, %293 : vector<16x256xf32>
    %c0_168 = arith.constant 0 : index
    %c0_169 = arith.constant 0 : index
    %295 = vector.load %arg15[%c0_168, %c0_169] : memref<16x1xf32, #tpu.memory_space<vmem>>, vector<16x1xf32>
    %296 = vector.broadcast %295 : vector<16x1xf32> to vector<16x256xf32>
    %297 = arith.mulf %294, %296 : vector<16x256xf32>
    %c0_170 = arith.constant 0 : index
    %c0_171 = arith.constant 0 : index
    %298 = vector.load %arg16[%c0_170, %c0_171] : memref<16x1xf32, #tpu.memory_space<vmem>>, vector<16x1xf32>
    %299 = vector.broadcast %298 : vector<16x1xf32> to vector<16x256xf32>
    %300 = arith.addf %297, %299 : vector<16x256xf32>
    %cst_172 = arith.constant 0.000000e+00 : f32
    %301 = vector.broadcast %cst_172 : f32 to vector<16x256xf32>
    %302 = arith.cmpf oge, %300, %301 : vector<16x256xf32>
    %c0_173 = arith.constant 0 : index
    %c0_174 = arith.constant 0 : index
    %303 = vector.load %arg17[%c0_173, %c0_174] : memref<1x1xf32, #tpu.memory_space<vmem>>, vector<1x1xf32>
    %304 = vector.broadcast %303 : vector<1x1xf32> to vector<16x256xf32>
    %305 = arith.mulf %304, %300 : vector<16x256xf32>
    %306 = arith.select %302, %300, %305 : vector<16x256xi1>, vector<16x256xf32>
    %307 = arith.truncf %306 : vector<16x256xf32> to vector<16x256xbf16>
    %c0_175 = arith.constant 0 : index
    %c0_176 = arith.constant 0 : index
    %c0_177 = arith.constant 0 : index
    %308 = vector.load %arg18[%c0_175, %c0_176, %c0_177] : memref<1x16x256xbf16, #tpu.memory_space<vmem>>, vector<1x16x256xbf16>
    %309 = vector.shape_cast %308 : vector<1x16x256xbf16> to vector<16x256xbf16>
    %310 = vector.shape_cast %307 : vector<16x256xbf16> to vector<1x16x256xbf16>
    tpu.vector_store %arg18[%c0_175, %c0_176, %c0_177], %310 {strides = array<i32>} : memref<1x16x256xbf16, #tpu.memory_space<vmem>>, vector<1x16x256xbf16>,
    return
  }
  func.func @transform_0(%arg0: i32) -> (i32, i32, i32) {
    %c0_i32 = arith.constant 0 : i32
    %c0_i32_0 = arith.constant 0 : i32
    %c0_i32_1 = arith.constant 0 : i32
    return %arg0, %c0_i32, %c0_i32_0 : i32, i32, i32
  }
  func.func @transform_1(%arg0: i32) -> (i32, i32, i32) {
    %c0_i32 = arith.constant 0 : i32
    %c0_i32_0 = arith.constant 0 : i32
    %c0_i32_1 = arith.constant 0 : i32
    return %arg0, %c0_i32, %c0_i32_0 : i32, i32, i32
  }
  func.func @transform_2(%arg0: i32) -> (i32, i32) {
    %c0_i32 = arith.constant 0 : i32
    %c0_i32_0 = arith.constant 0 : i32
    %c0_i32_1 = arith.constant 0 : i32
    return %c0_i32, %c0_i32_0 : i32, i32
  }
  func.func @transform_3(%arg0: i32) -> (i32, i32) {
    %c0_i32 = arith.constant 0 : i32
    %c0_i32_0 = arith.constant 0 : i32
    %c0_i32_1 = arith.constant 0 : i32
    return %c0_i32, %c0_i32_0 : i32, i32
  }
  func.func @transform_4(%arg0: i32) -> (i32, i32) {
    %c0_i32 = arith.constant 0 : i32
    %c0_i32_0 = arith.constant 0 : i32
    %c0_i32_1 = arith.constant 0 : i32
    return %c0_i32, %c0_i32_0 : i32, i32
  }
  func.func @transform_5(%arg0: i32) -> (i32, i32, i32) {
    %c0_i32 = arith.constant 0 : i32
    %c0_i32_0 = arith.constant 0 : i32
    %c0_i32_1 = arith.constant 0 : i32
    %c0_i32_2 = arith.constant 0 : i32
    return %c0_i32, %c0_i32_0, %c0_i32_1 : i32, i32, i32
  }
  func.func @transform_6(%arg0: i32) -> (i32, i32, i32) {
    %c0_i32 = arith.constant 0 : i32
    %c0_i32_0 = arith.constant 0 : i32
    %c0_i32_1 = arith.constant 0 : i32
    %c0_i32_2 = arith.constant 0 : i32
    return %c0_i32, %c0_i32_0, %c0_i32_1 : i32, i32, i32
  }
  func.func @transform_7(%arg0: i32) -> (i32, i32) {
    %c0_i32 = arith.constant 0 : i32
    %c0_i32_0 = arith.constant 0 : i32
    %c0_i32_1 = arith.constant 0 : i32
    return %c0_i32, %c0_i32_0 : i32, i32
  }
  func.func @transform_8(%arg0: i32) -> (i32, i32) {
    %c0_i32 = arith.constant 0 : i32
    %c0_i32_0 = arith.constant 0 : i32
    %c0_i32_1 = arith.constant 0 : i32
    return %c0_i32, %c0_i32_0 : i32, i32
  }
  func.func @transform_9(%arg0: i32) -> (i32, i32) {
    %c0_i32 = arith.constant 0 : i32
    %c0_i32_0 = arith.constant 0 : i32
    %c0_i32_1 = arith.constant 0 : i32
    return %c0_i32, %c0_i32_0 : i32, i32
  }
  func.func @transform_10(%arg0: i32) -> (i32, i32) {
    %c0_i32 = arith.constant 0 : i32
    %c0_i32_0 = arith.constant 0 : i32
    %c0_i32_1 = arith.constant 0 : i32
    return %c0_i32, %c0_i32_0 : i32, i32
  }
  func.func @transform_11(%arg0: i32) -> (i32, i32) {
    %c0_i32 = arith.constant 0 : i32
    %c0_i32_0 = arith.constant 0 : i32
    %c0_i32_1 = arith.constant 0 : i32
    return %c0_i32, %c0_i32_0 : i32, i32
  }
  func.func @transform_12(%arg0: i32) -> (i32, i32) {
    %c0_i32 = arith.constant 0 : i32
    %c0_i32_0 = arith.constant 0 : i32
    %c0_i32_1 = arith.constant 0 : i32
    return %c0_i32, %c0_i32_0 : i32, i32
  }
  func.func @transform_13(%arg0: i32) -> (i32, i32, i32) {
    %c0_i32 = arith.constant 0 : i32
    %c0_i32_0 = arith.constant 0 : i32
    %c0_i32_1 = arith.constant 0 : i32
    %c0_i32_2 = arith.constant 0 : i32
    return %c0_i32, %c0_i32_0, %c0_i32_1 : i32, i32, i32
  }
  func.func @transform_14(%arg0: i32) -> (i32, i32) {
    %c0_i32 = arith.constant 0 : i32
    %c0_i32_0 = arith.constant 0 : i32
    %c0_i32_1 = arith.constant 0 : i32
    return %c0_i32, %c0_i32_0 : i32, i32
  }
  func.func @transform_15(%arg0: i32) -> (i32, i32) {
    %c0_i32 = arith.constant 0 : i32
    %c0_i32_0 = arith.constant 0 : i32
    %c0_i32_1 = arith.constant 0 : i32
    return %c0_i32, %c0_i32_0 : i32, i32
  }
  func.func @transform_16(%arg0: i32) -> (i32, i32) {
    %c0_i32 = arith.constant 0 : i32
    %c0_i32_0 = arith.constant 0 : i32
    %c0_i32_1 = arith.constant 0 : i32
    return %c0_i32, %c0_i32_0 : i32, i32
  }
  func.func @transform_17(%arg0: i32) -> (i32, i32, i32) {
    %c0_i32 = arith.constant 0 : i32
    %c0_i32_0 = arith.constant 0 : i32
    %c0_i32_1 = arith.constant 0 : i32
    return %arg0, %c0_i32, %c0_i32_0 : i32, i32, i32
  }
}

</mosaic_0001>

<llo_original>
// kernel: conbine_feature_forward.1
$region0: #{conbine_feature_forward.1}
  #allocation0 [shape = 'u32[]', space=smem, size = 0x4, offset = 0x4, fixed_abs, tag = 'smem constant byte address 0x4 - core index']
  #allocation1 [shape = 'u32[144,128]{1,0:T(1,128)}', space=vmem, size = 0x12000, scoped, tag = 'internal scratch']
  #allocation2 [shape = 'f32[1,1]{1,0:T(1,128)S(1)}', space=vmem, size = 0x200, scoped, tag = 'scoped memory for conbine_feature_forward.1']
  %s0 = inlined_call_operand.vmem [shape: bf16[2,32,256], index: 0, kind: input, shape index: {}]
  %s1 = inlined_call_operand.vmem [shape: bf16[2,32,256], index: 1, kind: input, shape index: {}]
  %s2 = inlined_call_operand.vmem [shape: s32[1,256], index: 2, kind: input, shape index: {}]
  %s3 = inlined_call_operand.vmem [shape: s32[1,256], index: 3, kind: input, shape index: {}]
  %s4 = inlined_call_operand.vmem [shape: f32[16,32], index: 4, kind: input, shape index: {}]
  %s5 = inlined_call_operand.vmem [shape: f32[9,8,8], index: 5, kind: input, shape index: {}]
  %s6 = inlined_call_operand.vmem [shape: f32[9,8,8], index: 6, kind: input, shape index: {}]
  %s7 = inlined_call_operand.vmem [shape: f32[16,1], index: 7, kind: input, shape index: {}]
  %s8 = inlined_call_operand.vmem [shape: f32[16,1], index: 8, kind: input, shape index: {}]
  %s9 = inlined_call_operand.vmem [shape: f32[16,32], index: 9, kind: input, shape index: {}]
  %s10 = inlined_call_operand.vmem [shape: f32[16,1], index: 10, kind: input, shape index: {}]
  %s11 = inlined_call_operand.vmem [shape: f32[16,1], index: 11, kind: input, shape index: {}]
  %s12 = inlined_call_operand.vmem [shape: f32[16,1], index: 12, kind: input, shape index: {}]
  %s13 = inlined_call_operand.vmem [shape: f32[9,16,16], index: 13, kind: input, shape index: {}]
  %s14 = inlined_call_operand.vmem [shape: f32[16,1], index: 14, kind: input, shape index: {}]
  %s15 = inlined_call_operand.vmem [shape: f32[16,1], index: 15, kind: input, shape index: {}]
  %s16 = inlined_call_operand.<no memory space> [shape: f32[1,1], index: 16, kind: input, shape index: {}]
  %s17 = inlined_call_operand.vmem [shape: bf16[2,16,256], index: 17, kind: output, shape index: {}]
  %s18 = sld [smem:[#allocation0]]
  $region101: #{conbine_feature_forward.1} parent=0
    _
  %s20 = ssub.s32 1, %s18
  %s21 = scalar_select 0, %s20, %s18
  %v22 = vstv %s16
  %23 = vst [vmem:[#allocation2] sm:$0x1] %v22
  loop: start=0, step=1, limit=4
  $region2: #{conbine_feature_forward.1} parent=0 // loop_pre_header
    _
  $region3: #{conbine_feature_forward.1} parent=0 // loop_header
    %s25 = sphi 0, %s29
    %p26 = scmp.ge.s32.totalorder %s25, 4
    %s35 = sphi 0, %s37
    %s38 = sphi 0, %s35
    %s39 = sphi 0, %s38
    %s55 = sphi 0, %s39
    %s61 = sphi 0, %s63
    %s64 = sphi 0, %s61
    %s65 = sphi 0, %s64
    %s81 = sphi 0, %s65
    %s85 = sphi 0, %s85
    %s87 = sphi 0, %s85
    %s88 = sphi 0, %s87
    %s102 = sphi 0, %s88
    %s106 = sphi 0, %s106
    %s108 = sphi 0, %s106
    %s109 = sphi 0, %s108
    %s123 = sphi 0, %s109
    %s127 = sphi 0, %s127
    %s129 = sphi 0, %s127
    %s130 = sphi 0, %s129
    %s144 = sphi 0, %s130
    %s148 = sphi 0, %s148
    %s150 = sphi 0, %s148
    %s151 = sphi 0, %s150
    %s165 = sphi 0, %s151
    %s169 = sphi 0, %s169
    %s171 = sphi 0, %s169
    %s172 = sphi 0, %s171
    %s186 = sphi 0, %s172
    %s190 = sphi 0, %s190
    %s192 = sphi 0, %s190
    %s193 = sphi 0, %s192
    %s207 = sphi 0, %s193
    %s211 = sphi 0, %s211
    %s213 = sphi 0, %s211
    %s214 = sphi 0, %s213
    %s228 = sphi 0, %s214
    %s232 = sphi 0, %s232
    %s234 = sphi 0, %s232
    %s235 = sphi 0, %s234
    %s249 = sphi 0, %s235
    %s253 = sphi 0, %s253
    %s255 = sphi 0, %s253
    %s256 = sphi 0, %s255
    %s270 = sphi 0, %s256
    %s274 = sphi 0, %s274
    %s276 = sphi 0, %s274
    %s277 = sphi 0, %s276
    %s291 = sphi 0, %s277
    %s295 = sphi 0, %s295
    %s297 = sphi 0, %s295
    %s298 = sphi 0, %s297
    %s312 = sphi 0, %s298
    %s316 = sphi 0, %s316
    %s318 = sphi 0, %s316
    %s319 = sphi 0, %s318
    %s333 = sphi 0, %s319
    %s337 = sphi 0, %s337
    %s339 = sphi 0, %s337
    %s340 = sphi 0, %s339
    %s354 = sphi 0, %s340
    %s358 = sphi 0, %s358
    %s360 = sphi 0, %s358
    %s361 = sphi 0, %s360
    %s375 = sphi 0, %s361
    %s379 = sphi 0, %s379
    %s381 = sphi 0, %s379
    %s382 = sphi 0, %s381
    %s396 = sphi 0, %s382
    %s402 = sphi 0, %s404
    %s405 = sphi 0, %s402
    %s406 = sphi 0, %s405
    %s422 = sphi 0, %s406
  $region4: #{conbine_feature_forward.1} parent=0 // loop_header_branch
    %28 = sbr.rel (%p26) target = $region8
  $region5: #{conbine_feature_forward.1} parent=0 // loop_body
    %s30 = ssub.s32 %s25, 1
    %s31 = ssub.s32 %s25, 2
    %s32 = sadd.s32 %s25, 1
    %s33 = ssub.s32 %s25, %s32
    %p34 = scmp.eq.s32.totalorder %s33, 0
    %s36 = sadd.s32 %s35, 1
    %s37 = scalar_select %p34, %s35, %s36
    %p40 = pneg %p34
    %p41 = scmp.eq.s32.totalorder %s25, 1
    %p42 = por %p40, %p41
    %p43 = scmp.ne.s32.totalorder %s35, %s38
    %p44 = scmp.eq.s32.totalorder %s25, 0
    %p45 = por %p43, %p44
    %p46 = scmp.ne.s32.totalorder %s35, %s38
    %p47 = scmp.eq.s32.totalorder %s30, 1
    %p48 = por %p46, %p47
    %p49 = scmp.ne.s32.totalorder %s38, %s39
    %p50 = scmp.eq.s32.totalorder %s30, 0
    %p51 = por %p49, %p50
    %p52 = scmp.ne.s32.totalorder %s38, %s39
    %p53 = scmp.eq.s32.totalorder %s31, 1
    %p54 = por %p52, %p53
    %p56 = scmp.ne.s32.totalorder %s39, %s55
    %p57 = scmp.eq.s32.totalorder %s31, 0
    %p58 = por %p56, %p57
    %s59 = ssub.s32 %s25, %s32
    %p60 = scmp.eq.s32.totalorder %s59, 0
    %s62 = sadd.s32 %s61, 1
    %s63 = scalar_select %p60, %s61, %s62
    %p66 = pneg %p60
    %p67 = scmp.eq.s32.totalorder %s25, 1
    %p68 = por %p66, %p67
    %p69 = scmp.ne.s32.totalorder %s61, %s64
    %p70 = scmp.eq.s32.totalorder %s25, 0
    %p71 = por %p69, %p70
    %p72 = scmp.ne.s32.totalorder %s61, %s64
    %p73 = scmp.eq.s32.totalorder %s30, 1
    %p74 = por %p72, %p73
    %p75 = scmp.ne.s32.totalorder %s64, %s65
    %p76 = scmp.eq.s32.totalorder %s30, 0
    %p77 = por %p75, %p76
    %p78 = scmp.ne.s32.totalorder %s64, %s65
    %p79 = scmp.eq.s32.totalorder %s31, 1
    %p80 = por %p78, %p79
    %p82 = scmp.ne.s32.totalorder %s65, %s81
    %p83 = scmp.eq.s32.totalorder %s31, 0
    %p84 = por %p82, %p83
    %s86 = sadd.s32 %s85, 1
    %p89 = scmp.eq.s32.totalorder %s25, 1
    %p90 = scmp.ne.s32.totalorder %s85, %s87
    %p91 = scmp.eq.s32.totalorder %s25, 0
    %p92 = por %p90, %p91
    %p93 = scmp.ne.s32.totalorder %s85, %s87
    %p94 = scmp.eq.s32.totalorder %s30, 1
    %p95 = por %p93, %p94
    %p96 = scmp.ne.s32.totalorder %s87, %s88
    %p97 = scmp.eq.s32.totalorder %s30, 0
    %p98 = por %p96, %p97
    %p99 = scmp.ne.s32.totalorder %s87, %s88
    %p100 = scmp.eq.s32.totalorder %s31, 1
    %p101 = por %p99, %p100
    %p103 = scmp.ne.s32.totalorder %s88, %s102
    %p104 = scmp.eq.s32.totalorder %s31, 0
    %p105 = por %p103, %p104
    %s107 = sadd.s32 %s106, 1
    %p110 = scmp.eq.s32.totalorder %s25, 1
    %p111 = scmp.ne.s32.totalorder %s106, %s108
    %p112 = scmp.eq.s32.totalorder %s25, 0
    %p113 = por %p111, %p112
    %p114 = scmp.ne.s32.totalorder %s106, %s108
    %p115 = scmp.eq.s32.totalorder %s30, 1
    %p116 = por %p114, %p115
    %p117 = scmp.ne.s32.totalorder %s108, %s109
    %p118 = scmp.eq.s32.totalorder %s30, 0
    %p119 = por %p117, %p118
    %p120 = scmp.ne.s32.totalorder %s108, %s109
    %p121 = scmp.eq.s32.totalorder %s31, 1
    %p122 = por %p120, %p121
    %p124 = scmp.ne.s32.totalorder %s109, %s123
    %p125 = scmp.eq.s32.totalorder %s31, 0
    %p126 = por %p124, %p125
    %s128 = sadd.s32 %s127, 1
    %p131 = scmp.eq.s32.totalorder %s25, 1
    %p132 = scmp.ne.s32.totalorder %s127, %s129
    %p133 = scmp.eq.s32.totalorder %s25, 0
    %p134 = por %p132, %p133
    %p135 = scmp.ne.s32.totalorder %s127, %s129
    %p136 = scmp.eq.s32.totalorder %s30, 1
    %p137 = por %p135, %p136
    %p138 = scmp.ne.s32.totalorder %s129, %s130
    %p139 = scmp.eq.s32.totalorder %s30, 0
    %p140 = por %p138, %p139
    %p141 = scmp.ne.s32.totalorder %s129, %s130
    %p142 = scmp.eq.s32.totalorder %s31, 1
    %p143 = por %p141, %p142
    %p145 = scmp.ne.s32.totalorder %s130, %s144
    %p146 = scmp.eq.s32.totalorder %s31, 0
    %p147 = por %p145, %p146
    %s149 = sadd.s32 %s148, 1
    %p152 = scmp.eq.s32.totalorder %s25, 1
    %p153 = scmp.ne.s32.totalorder %s148, %s150
    %p154 = scmp.eq.s32.totalorder %s25, 0
    %p155 = por %p153, %p154
    %p156 = scmp.ne.s32.totalorder %s148, %s150
    %p157 = scmp.eq.s32.totalorder %s30, 1
    %p158 = por %p156, %p157
    %p159 = scmp.ne.s32.totalorder %s150, %s151
    %p160 = scmp.eq.s32.totalorder %s30, 0
    %p161 = por %p159, %p160
    %p162 = scmp.ne.s32.totalorder %s150, %s151
    %p163 = scmp.eq.s32.totalorder %s31, 1
    %p164 = por %p162, %p163
    %p166 = scmp.ne.s32.totalorder %s151, %s165
    %p167 = scmp.eq.s32.totalorder %s31, 0
    %p168 = por %p166, %p167
    %s170 = sadd.s32 %s169, 1
    %p173 = scmp.eq.s32.totalorder %s25, 1
    %p174 = scmp.ne.s32.totalorder %s169, %s171
    %p175 = scmp.eq.s32.totalorder %s25, 0
    %p176 = por %p174, %p175
    %p177 = scmp.ne.s32.totalorder %s169, %s171
    %p178 = scmp.eq.s32.totalorder %s30, 1
    %p179 = por %p177, %p178
    %p180 = scmp.ne.s32.totalorder %s171, %s172
    %p181 = scmp.eq.s32.totalorder %s30, 0
    %p182 = por %p180, %p181
    %p183 = scmp.ne.s32.totalorder %s171, %s172
    %p184 = scmp.eq.s32.totalorder %s31, 1
    %p185 = por %p183, %p184
    %p187 = scmp.ne.s32.totalorder %s172, %s186
    %p188 = scmp.eq.s32.totalorder %s31, 0
    %p189 = por %p187, %p188
    %s191 = sadd.s32 %s190, 1
    %p194 = scmp.eq.s32.totalorder %s25, 1
    %p195 = scmp.ne.s32.totalorder %s190, %s192
    %p196 = scmp.eq.s32.totalorder %s25, 0
    %p197 = por %p195, %p196
    %p198 = scmp.ne.s32.totalorder %s190, %s192
    %p199 = scmp.eq.s32.totalorder %s30, 1
    %p200 = por %p198, %p199
    %p201 = scmp.ne.s32.totalorder %s192, %s193
    %p202 = scmp.eq.s32.totalorder %s30, 0
    %p203 = por %p201, %p202
    %p204 = scmp.ne.s32.totalorder %s192, %s193
    %p205 = scmp.eq.s32.totalorder %s31, 1
    %p206 = por %p204, %p205
    %p208 = scmp.ne.s32.totalorder %s193, %s207
    %p209 = scmp.eq.s32.totalorder %s31, 0
    %p210 = por %p208, %p209
    %s212 = sadd.s32 %s211, 1
    %p215 = scmp.eq.s32.totalorder %s25, 1
    %p216 = scmp.ne.s32.totalorder %s211, %s213
    %p217 = scmp.eq.s32.totalorder %s25, 0
    %p218 = por %p216, %p217
    %p219 = scmp.ne.s32.totalorder %s211, %s213
    %p220 = scmp.eq.s32.totalorder %s30, 1
    %p221 = por %p219, %p220
    %p222 = scmp.ne.s32.totalorder %s213, %s214
    %p223 = scmp.eq.s32.totalorder %s30, 0
    %p224 = por %p222, %p223
    %p225 = scmp.ne.s32.totalorder %s213, %s214
    %p226 = scmp.eq.s32.totalorder %s31, 1
    %p227 = por %p225, %p226
    %p229 = scmp.ne.s32.totalorder %s214, %s228
    %p230 = scmp.eq.s32.totalorder %s31, 0
    %p231 = por %p229, %p230
    %s233 = sadd.s32 %s232, 1
    %p236 = scmp.eq.s32.totalorder %s25, 1
    %p237 = scmp.ne.s32.totalorder %s232, %s234
    %p238 = scmp.eq.s32.totalorder %s25, 0
    %p239 = por %p237, %p238
    %p240 = scmp.ne.s32.totalorder %s232, %s234
    %p241 = scmp.eq.s32.totalorder %s30, 1
    %p242 = por %p240, %p241
    %p243 = scmp.ne.s32.totalorder %s234, %s235
    %p244 = scmp.eq.s32.totalorder %s30, 0
    %p245 = por %p243, %p244
    %p246 = scmp.ne.s32.totalorder %s234, %s235
    %p247 = scmp.eq.s32.totalorder %s31, 1
    %p248 = por %p246, %p247
    %p250 = scmp.ne.s32.totalorder %s235, %s249
    %p251 = scmp.eq.s32.totalorder %s31, 0
    %p252 = por %p250, %p251
    %s254 = sadd.s32 %s253, 1
    %p257 = scmp.eq.s32.totalorder %s25, 1
    %p258 = scmp.ne.s32.totalorder %s253, %s255
    %p259 = scmp.eq.s32.totalorder %s25, 0
    %p260 = por %p258, %p259
    %p261 = scmp.ne.s32.totalorder %s253, %s255
    %p262 = scmp.eq.s32.totalorder %s30, 1
    %p263 = por %p261, %p262
    %p264 = scmp.ne.s32.totalorder %s255, %s256
    %p265 = scmp.eq.s32.totalorder %s30, 0
    %p266 = por %p264, %p265
    %p267 = scmp.ne.s32.totalorder %s255, %s256
    %p268 = scmp.eq.s32.totalorder %s31, 1
    %p269 = por %p267, %p268
    %p271 = scmp.ne.s32.totalorder %s256, %s270
    %p272 = scmp.eq.s32.totalorder %s31, 0
    %p273 = por %p271, %p272
    %s275 = sadd.s32 %s274, 1
    %p278 = scmp.eq.s32.totalorder %s25, 1
    %p279 = scmp.ne.s32.totalorder %s274, %s276
    %p280 = scmp.eq.s32.totalorder %s25, 0
    %p281 = por %p279, %p280
    %p282 = scmp.ne.s32.totalorder %s274, %s276
    %p283 = scmp.eq.s32.totalorder %s30, 1
    %p284 = por %p282, %p283
    %p285 = scmp.ne.s32.totalorder %s276, %s277
    %p286 = scmp.eq.s32.totalorder %s30, 0
    %p287 = por %p285, %p286
    %p288 = scmp.ne.s32.totalorder %s276, %s277
    %p289 = scmp.eq.s32.totalorder %s31, 1
    %p290 = por %p288, %p289
    %p292 = scmp.ne.s32.totalorder %s277, %s291
    %p293 = scmp.eq.s32.totalorder %s31, 0
    %p294 = por %p292, %p293
    %s296 = sadd.s32 %s295, 1
    %p299 = scmp.eq.s32.totalorder %s25, 1
    %p300 = scmp.ne.s32.totalorder %s295, %s297
    %p301 = scmp.eq.s32.totalorder %s25, 0
    %p302 = por %p300, %p301
    %p303 = scmp.ne.s32.totalorder %s295, %s297
    %p304 = scmp.eq.s32.totalorder %s30, 1
    %p305 = por %p303, %p304
    %p306 = scmp.ne.s32.totalorder %s297, %s298
    %p307 = scmp.eq.s32.totalorder %s30, 0
    %p308 = por %p306, %p307
    %p309 = scmp.ne.s32.totalorder %s297, %s298
    %p310 = scmp.eq.s32.totalorder %s31, 1
    %p311 = por %p309, %p310
    %p313 = scmp.ne.s32.totalorder %s298, %s312
    %p314 = scmp.eq.s32.totalorder %s31, 0
    %p315 = por %p313, %p314
    %s317 = sadd.s32 %s316, 1
    %p320 = scmp.eq.s32.totalorder %s25, 1
    %p321 = scmp.ne.s32.totalorder %s316, %s318
    %p322 = scmp.eq.s32.totalorder %s25, 0
    %p323 = por %p321, %p322
    %p324 = scmp.ne.s32.totalorder %s316, %s318
    %p325 = scmp.eq.s32.totalorder %s30, 1
    %p326 = por %p324, %p325
    %p327 = scmp.ne.s32.totalorder %s318, %s319
    %p328 = scmp.eq.s32.totalorder %s30, 0
    %p329 = por %p327, %p328
    %p330 = scmp.ne.s32.totalorder %s318, %s319
    %p331 = scmp.eq.s32.totalorder %s31, 1
    %p332 = por %p330, %p331
    %p334 = scmp.ne.s32.totalorder %s319, %s333
    %p335 = scmp.eq.s32.totalorder %s31, 0
    %p336 = por %p334, %p335
    %s338 = sadd.s32 %s337, 1
    %p341 = scmp.eq.s32.totalorder %s25, 1
    %p342 = scmp.ne.s32.totalorder %s337, %s339
    %p343 = scmp.eq.s32.totalorder %s25, 0
    %p344 = por %p342, %p343
    %p345 = scmp.ne.s32.totalorder %s337, %s339
    %p346 = scmp.eq.s32.totalorder %s30, 1
    %p347 = por %p345, %p346
    %p348 = scmp.ne.s32.totalorder %s339, %s340
    %p349 = scmp.eq.s32.totalorder %s30, 0
    %p350 = por %p348, %p349
    %p351 = scmp.ne.s32.totalorder %s339, %s340
    %p352 = scmp.eq.s32.totalorder %s31, 1
    %p353 = por %p351, %p352
    %p355 = scmp.ne.s32.totalorder %s340, %s354
    %p356 = scmp.eq.s32.totalorder %s31, 0
    %p357 = por %p355, %p356
    %s359 = sadd.s32 %s358, 1
    %p362 = scmp.eq.s32.totalorder %s25, 1
    %p363 = scmp.ne.s32.totalorder %s358, %s360
    %p364 = scmp.eq.s32.totalorder %s25, 0
    %p365 = por %p363, %p364
    %p366 = scmp.ne.s32.totalorder %s358, %s360
    %p367 = scmp.eq.s32.totalorder %s30, 1
    %p368 = por %p366, %p367
    %p369 = scmp.ne.s32.totalorder %s360, %s361
    %p370 = scmp.eq.s32.totalorder %s30, 0
    %p371 = por %p369, %p370
    %p372 = scmp.ne.s32.totalorder %s360, %s361
    %p373 = scmp.eq.s32.totalorder %s31, 1
    %p374 = por %p372, %p373
    %p376 = scmp.ne.s32.totalorder %s361, %s375
    %p377 = scmp.eq.s32.totalorder %s31, 0
    %p378 = por %p376, %p377
    %s380 = sadd.s32 %s379, 1
    %p383 = scmp.eq.s32.totalorder %s25, 1
    %p384 = scmp.ne.s32.totalorder %s379, %s381
    %p385 = scmp.eq.s32.totalorder %s25, 0
    %p386 = por %p384, %p385
    %p387 = scmp.ne.s32.totalorder %s379, %s381
    %p388 = scmp.eq.s32.totalorder %s30, 1
    %p389 = por %p387, %p388
    %p390 = scmp.ne.s32.totalorder %s381, %s382
    %p391 = scmp.eq.s32.totalorder %s30, 0
    %p392 = por %p390, %p391
    %p393 = scmp.ne.s32.totalorder %s381, %s382
    %p394 = scmp.eq.s32.totalorder %s31, 1
    %p395 = por %p393, %p394
    %p397 = scmp.ne.s32.totalorder %s382, %s396
    %p398 = scmp.eq.s32.totalorder %s31, 0
    %p399 = por %p397, %p398
    %s400 = ssub.s32 %s25, %s32
    %p401 = scmp.eq.s32.totalorder %s400, 0
    %s403 = sadd.s32 %s402, 1
    %s404 = scalar_select %p401, %s402, %s403
    %p407 = pneg %p401
    %p408 = scmp.eq.s32.totalorder %s25, 1
    %p409 = por %p407, %p408
    %p410 = scmp.ne.s32.totalorder %s402, %s405
    %p411 = scmp.eq.s32.totalorder %s25, 0
    %p412 = por %p410, %p411
    %p413 = scmp.ne.s32.totalorder %s402, %s405
    %p414 = scmp.eq.s32.totalorder %s30, 1
    %p415 = por %p413, %p414
    %p416 = scmp.ne.s32.totalorder %s405, %s406
    %p417 = scmp.eq.s32.totalorder %s30, 0
    %p418 = por %p416, %p417
    %p419 = scmp.ne.s32.totalorder %s405, %s406
    %p420 = scmp.eq.s32.totalorder %s31, 1
    %p421 = por %p419, %p420
    %p423 = scmp.ne.s32.totalorder %s406, %s422
    %p424 = scmp.eq.s32.totalorder %s31, 0
    %p425 = por %p423, %p424
    %p426 = scmp.le.s32.totalorder 1, %s25
    %p427 = scmp.lt.s32.totalorder %s25, 3
    %p428 = pnand %p426, %p427
    %p429 = pneg %p428
    // Predicated region
    $region9: #{conbine_feature_forward.1} parent=5 // pred_check
      _
    $region10: #{conbine_feature_forward.1} parent=5 // pred_check_branch
      %431 = sbr.rel (%p428) target = $region12
    $region11: #{conbine_feature_forward.1} parent=5 // pred_region
      %s432 = ssub.s32 %s25, 1
      // Predicated region
      $region13: #{conbine_feature_forward.1} parent=11 // pred_check
        %p433 = pneg %p98
      $region14: #{conbine_feature_forward.1} parent=11 // pred_check_branch
        %435 = sbr.rel (%p433) target = $region16
      $region15: #{conbine_feature_forward.1} parent=11 // pred_region
        _
      $region16: #{conbine_feature_forward.1} parent=11 // pred_fallthru
        _
      // Predicated region
      $region17: #{conbine_feature_forward.1} parent=11 // pred_check
        %p436 = pneg %p119
      $region18: #{conbine_feature_forward.1} parent=11 // pred_check_branch
        %438 = sbr.rel (%p436) target = $region20
      $region19: #{conbine_feature_forward.1} parent=11 // pred_region
        _
      $region20: #{conbine_feature_forward.1} parent=11 // pred_fallthru
        _
      // Predicated region
      $region21: #{conbine_feature_forward.1} parent=11 // pred_check
        %p439 = pneg %p140
      $region22: #{conbine_feature_forward.1} parent=11 // pred_check_branch
        %441 = sbr.rel (%p439) target = $region24
      $region23: #{conbine_feature_forward.1} parent=11 // pred_region
        _
      $region24: #{conbine_feature_forward.1} parent=11 // pred_fallthru
        _
      // Predicated region
      $region25: #{conbine_feature_forward.1} parent=11 // pred_check
        %p442 = pneg %p161
      $region26: #{conbine_feature_forward.1} parent=11 // pred_check_branch
        %444 = sbr.rel (%p442) target = $region28
      $region27: #{conbine_feature_forward.1} parent=11 // pred_region
        _
      $region28: #{conbine_feature_forward.1} parent=11 // pred_fallthru
        _
      // Predicated region
      $region29: #{conbine_feature_forward.1} parent=11 // pred_check
        %p445 = pneg %p182
      $region30: #{conbine_feature_forward.1} parent=11 // pred_check_branch
        %447 = sbr.rel (%p445) target = $region32
      $region31: #{conbine_feature_forward.1} parent=11 // pred_region
        _
      $region32: #{conbine_feature_forward.1} parent=11 // pred_fallthru
        _
      // Predicated region
      $region33: #{conbine_feature_forward.1} parent=11 // pred_check
        %p448 = pneg %p203
      $region34: #{conbine_feature_forward.1} parent=11 // pred_check_branch
        %450 = sbr.rel (%p448) target = $region36
      $region35: #{conbine_feature_forward.1} parent=11 // pred_region
        _
      $region36: #{conbine_feature_forward.1} parent=11 // pred_fallthru
        _
      // Predicated region
      $region37: #{conbine_feature_forward.1} parent=11 // pred_check
        %p451 = pneg %p224
      $region38: #{conbine_feature_forward.1} parent=11 // pred_check_branch
        %453 = sbr.rel (%p451) target = $region40
      $region39: #{conbine_feature_forward.1} parent=11 // pred_region
        _
      $region40: #{conbine_feature_forward.1} parent=11 // pred_fallthru
        _
      // Predicated region
      $region41: #{conbine_feature_forward.1} parent=11 // pred_check
        %p454 = pneg %p245
      $region42: #{conbine_feature_forward.1} parent=11 // pred_check_branch
        %456 = sbr.rel (%p454) target = $region44
      $region43: #{conbine_feature_forward.1} parent=11 // pred_region
        _
      $region44: #{conbine_feature_forward.1} parent=11 // pred_fallthru
        _
      // Predicated region
      $region45: #{conbine_feature_forward.1} parent=11 // pred_check
        %p457 = pneg %p266
      $region46: #{conbine_feature_forward.1} parent=11 // pred_check_branch
        %459 = sbr.rel (%p457) target = $region48
      $region47: #{conbine_feature_forward.1} parent=11 // pred_region
        _
      $region48: #{conbine_feature_forward.1} parent=11 // pred_fallthru
        _
      // Predicated region
      $region49: #{conbine_feature_forward.1} parent=11 // pred_check
        %p460 = pneg %p287
      $region50: #{conbine_feature_forward.1} parent=11 // pred_check_branch
        %462 = sbr.rel (%p460) target = $region52
      $region51: #{conbine_feature_forward.1} parent=11 // pred_region
        _
      $region52: #{conbine_feature_forward.1} parent=11 // pred_fallthru
        _
      // Predicated region
      $region53: #{conbine_feature_forward.1} parent=11 // pred_check
        %p463 = pneg %p308
      $region54: #{conbine_feature_forward.1} parent=11 // pred_check_branch
        %465 = sbr.rel (%p463) target = $region56
      $region55: #{conbine_feature_forward.1} parent=11 // pred_region
        _
      $region56: #{conbine_feature_forward.1} parent=11 // pred_fallthru
        _
      // Predicated region
      $region57: #{conbine_feature_forward.1} parent=11 // pred_check
        %p466 = pneg %p329
      $region58: #{conbine_feature_forward.1} parent=11 // pred_check_branch
        %468 = sbr.rel (%p466) target = $region60
      $region59: #{conbine_feature_forward.1} parent=11 // pred_region
        _
      $region60: #{conbine_feature_forward.1} parent=11 // pred_fallthru
        _
      // Predicated region
      $region61: #{conbine_feature_forward.1} parent=11 // pred_check
        %p469 = pneg %p350
      $region62: #{conbine_feature_forward.1} parent=11 // pred_check_branch
        %471 = sbr.rel (%p469) target = $region64
      $region63: #{conbine_feature_forward.1} parent=11 // pred_region
        _
      $region64: #{conbine_feature_forward.1} parent=11 // pred_fallthru
        _
      // Predicated region
      $region65: #{conbine_feature_forward.1} parent=11 // pred_check
        %p472 = pneg %p371
      $region66: #{conbine_feature_forward.1} parent=11 // pred_check_branch
        %474 = sbr.rel (%p472) target = $region68
      $region67: #{conbine_feature_forward.1} parent=11 // pred_region
        _
      $region68: #{conbine_feature_forward.1} parent=11 // pred_fallthru
        _
      // Predicated region
      $region69: #{conbine_feature_forward.1} parent=11 // pred_check
        %p475 = pneg %p392
      $region70: #{conbine_feature_forward.1} parent=11 // pred_check_branch
        %477 = sbr.rel (%p475) target = $region72
      $region71: #{conbine_feature_forward.1} parent=11 // pred_region
        _
      $region72: #{conbine_feature_forward.1} parent=11 // pred_fallthru
        _
    $region12: #{conbine_feature_forward.1} parent=5 // pred_fallthru
      _
    %p478 = scmp.lt.s32.totalorder %s25, 2
    // Predicated region
    $region73: #{conbine_feature_forward.1} parent=5 // pred_check
      %p479 = pneg %p478
    $region74: #{conbine_feature_forward.1} parent=5 // pred_check_branch
      %481 = sbr.rel (%p479) target = $region76
    $region75: #{conbine_feature_forward.1} parent=5 // pred_region
      // Predicated region
      $region77: #{conbine_feature_forward.1} parent=75 // pred_check
        %p482 = pneg %p45
      $region78: #{conbine_feature_forward.1} parent=75 // pred_check_branch
        %484 = sbr.rel (%p482) target = $region80
      $region79: #{conbine_feature_forward.1} parent=75 // pred_region
        %p485 = scmp.lt.s32.totalorder %s25, 1
        %s486 = scalar_select %p485, %s25, 1
        %s487 = smul.addr %s486, 8
        %s488 = smul.addr %s487, 4
        %s489 = scalar_lea.vmem %s0, %s488
      $region80: #{conbine_feature_forward.1} parent=75 // pred_fallthru
        _
      // Predicated region
      $region81: #{conbine_feature_forward.1} parent=75 // pred_check
        %p490 = pneg %p71
      $region82: #{conbine_feature_forward.1} parent=75 // pred_check_branch
        %492 = sbr.rel (%p490) target = $region84
      $region83: #{conbine_feature_forward.1} parent=75 // pred_region
        %p493 = scmp.lt.s32.totalorder %s25, 1
        %s494 = scalar_select %p493, %s25, 1
        %s495 = smul.addr %s494, 8
        %s496 = smul.addr %s495, 4
        %s497 = scalar_lea.vmem %s1, %s496
      $region84: #{conbine_feature_forward.1} parent=75 // pred_fallthru
        _
    $region76: #{conbine_feature_forward.1} parent=5 // pred_fallthru
      _
    %p498 = scmp.le.s32.totalorder 1, %s25
    %p499 = scmp.lt.s32.totalorder %s25, 3
    %p500 = pnand %p498, %p499
    %p501 = pneg %p500
    // Predicated region
    $region85: #{conbine_feature_forward.1} parent=5 // pred_check
      _
    $region86: #{conbine_feature_forward.1} parent=5 // pred_check_branch
      %503 = sbr.rel (%p500) target = $region88
    $region87: #{conbine_feature_forward.1} parent=5 // pred_region
      %s504 = ssub.s32 %s25, 1
      %p505 = scmp.lt.s32.totalorder %s30, 1
      %s506 = scalar_select %p505, %s30, 1
      %s507 = smul.addr %s506, 8
      %s508 = smul.addr %s507, 4
      %s509 = scalar_lea.vmem %s0, %s508
      %p510 = pneg %p51
      %p511 = pneg %p48
      %p512 = scmp.lt.s32.totalorder %s30, 1
      %s513 = scalar_select %p512, %s30, 1
      %s514 = smul.addr %s513, 8
      %s515 = smul.addr %s514, 4
      %s516 = scalar_lea.vmem %s1, %s515
      %p517 = pneg %p77
      %p518 = pneg %p74
      %p519 = pneg %p98
      %p520 = pneg %p95
      %p521 = pneg %p119
      %p522 = pneg %p116
      %p523 = pneg %p140
      %p524 = pneg %p137
      %p525 = pneg %p161
      %p526 = pneg %p158
      %p527 = pneg %p182
      %p528 = pneg %p179
      %p529 = pneg %p203
      %p530 = pneg %p200
      %p531 = pneg %p224
      %p532 = pneg %p221
      %p533 = pneg %p245
      %p534 = pneg %p242
      %p535 = pneg %p266
      %p536 = pneg %p263
      %p537 = pneg %p287
      %p538 = pneg %p284
      %p539 = pneg %p308
      %p540 = pneg %p305
      %p541 = pneg %p329
      %p542 = pneg %p326
      %p543 = pneg %p350
      %p544 = pneg %p347
      %p545 = pneg %p371
      %p546 = pneg %p368
      %p547 = pneg %p392
      %p548 = pneg %p389
      %p549 = pneg %p418
      %p550 = pneg %p415
      %p551 = scmp.lt.s32.totalorder %s30, 1
      %s552 = scalar_select %p551, %s30, 1
      %s553 = smul.addr %s552, 4
      %s554 = smul.addr %s553, 4
      %s555 = scalar_lea.vmem %s17, %s554
      %p556 = scmp.lt.s32.totalorder %s30, 1
      %s557 = scalar_select %p556, %s30, 1
      %s558 = smul.addr %s557, 8
      %s559 = smul.addr %s558, 4
      %s560 = scalar_lea.vmem %s0, %s559
      %p561 = scmp.lt.s32.totalorder %s30, 1
      %s562 = scalar_select %p561, %s30, 1
      %s563 = smul.addr %s562, 8
      %s564 = smul.addr %s563, 4
      %s565 = scalar_lea.vmem %s1, %s564
      %p566 = scmp.lt.s32.totalorder %s30, 1
      %s567 = scalar_select %p566, %s30, 1
      %s568 = smul.addr %s567, 4
      %s569 = smul.addr %s568, 4
      %s570 = scalar_lea.vmem %s17, %s569
      %v571 = vld [vmem:[%s560] sm:$0xff]
      %v572 = vld [vmem:[%s560 + $0x8] sm:$0xff]
      %v573 = vld [vmem:[%s560 + $0x10] sm:$0xff]
      %v574 = vld [vmem:[%s560 + $0x18] sm:$0xff]
      %v575 = vunpack.c.l.bf16 %v571
      %v576 = vunpack.c.h.bf16 %v571
      %v577 = vunpack.c.l.bf16 %v572
      %v578 = vunpack.c.h.bf16 %v572
      %v579 = vunpack.c.l.bf16 %v573
      %v580 = vunpack.c.h.bf16 %v573
      %v581 = vunpack.c.l.bf16 %v574
      %v582 = vunpack.c.h.bf16 %v574
      %v583 = vld [vmem:[%s2] sm:$0x3]
      %v584 = vld [vmem:[%s3] sm:$0x3]
      %v585 = vld [vmem:[%s4] sm:$0xff]
      %v586 = vld [vmem:[%s4 + $0x8] sm:$0xff]
      %vm587 = vcmask 261120
      %v589 = vsel %vm587, %v585, 0
      %v592 = vsel %vm587, %v586, 0
      %594 = vmatprep.subr.mxu0 0.0
      %595 = vmatpush1.msra.mxu0 0.0
      %596 = vmatprep.subr.mxu0 0.0
      %597 = vmatpush1.msra.mxu0 0.0
      %598 = vmatprep.subr.mxu0 0.0
      %599 = vmatpush1.msra.mxu0 0.0
      %600 = vmatprep.subr.mxu0 0.0
      %601 = vmatpush1.msra.mxu0 0.0
      %602 = vmatprep.subr.mxu0 0.0
      %603 = vmatpush1.msra.mxu0 0.0
      %604 = vmatprep.subr.mxu0 0.0
      %605 = vmatpush1.msra.mxu0 0.0
      %606 = vmatprep.subr.mxu0 0.0
      %607 = vmatpush1.msra.mxu0 0.0
      %608 = vmatprep.subr.mxu0 0.0
      %609 = vmatpush1.msra.mxu0 0.0
      %610 = vmatprep.subr.mxu0 0.0
      %611 = vmatpush1.msra.mxu0 0.0
      %612 = vmatprep.subr.mxu0 0.0
      %613 = vmatpush1.msra.mxu0 0.0
      %614 = vmatprep.subr.mxu0 0.0
      %615 = vmatpush1.msra.mxu0 0.0
      %616 = vmatprep.subr.mxu0 0.0
      %617 = vmatpush1.msra.mxu0 0.0
      %618 = vmatprep.subr.mxu0 %v582
      %619 = vmatpush1.msra.mxu0 %v581
      %620 = vmatprep.subr.mxu0 %v580
      %621 = vmatpush1.msra.mxu0 %v579
      %622 = vmatprep.subr.mxu0 %v578
      %623 = vmatpush1.msra.mxu0 %v577
      %624 = vmatprep.subr.mxu0 %v576
      %625 = vmatpush1.msra.mxu0 %v575
      %626 = vmatprep.subr.mxu0 0.0
      %627 = vmatpush2.msra.mxu0 0.0
      %628 = vmatprep.subr.mxu0 0.0
      %629 = vmatpush2.msra.mxu0 0.0
      %630 = vmatprep.subr.mxu0 0.0
      %631 = vmatpush2.msra.mxu0 0.0
      %632 = vmatprep.subr.mxu0 0.0
      %633 = vmatpush2.msra.mxu0 0.0
      %634 = vmatprep.subr.mxu0 0.0
      %635 = vmatpush2.msra.mxu0 0.0
      %636 = vmatprep.subr.mxu0 0.0
      %637 = vmatpush2.msra.mxu0 0.0
      %638 = vmatprep.subr.mxu0 0.0
      %639 = vmatpush2.msra.mxu0 0.0
      %640 = vmatprep.subr.mxu0 0.0
      %641 = vmatpush2.msra.mxu0 0.0
      %642 = vmatprep.subr.mxu0 0.0
      %643 = vmatpush2.msra.mxu0 0.0
      %644 = vmatprep.subr.mxu0 0.0
      %645 = vmatpush2.msra.mxu0 0.0
      %646 = vmatprep.subr.mxu0 0.0
      %647 = vmatpush2.msra.mxu0 0.0
      %648 = vmatprep.subr.mxu0 0.0
      %649 = vmatpush2.msra.mxu0 0.0
      %650 = vmatprep.subr.mxu0 0.0
      %651 = vmatpush2.msra.mxu0 0.0
      %652 = vmatprep.subr.mxu0 0.0
      %653 = vmatpush2.msra.mxu0 0.0
      %654 = vmatprep.subr.mxu0 0.0
      %655 = vmatpush2.msra.mxu0 0.0
      %656 = vmatprep.subr.mxu0 0.0
      %657 = vmatpush2.msra.mxu0 0.0
      %658 = vmatprep.mubr.f32.mxu0 0.0
      %659 = vmatmul.mubr.f32.gmra.mxu0 %v589
      %v660 = vpop.f32.mrf.mxu0
      %v661 = vadd.f32 0.0, %v660
      %v662 = vpop.f32.mrf.mxu0
      %v663 = vadd.f32 0.0, %v662
      %664 = vmatprep.mubr.f32.mxu0 0.0
      %665 = vmatmul.mubr.f32.gmra.mxu0 %v592
      %v666 = vpop.f32.mrf.mxu0
      %v667 = vadd.f32 0.0, %v666
      %v668 = vpop.f32.mrf.mxu0
      %v669 = vadd.f32 0.0, %v668
      %670 = vdwg.mxu0
      %vm671 = vcmp.ge.s32.totalorder %v584, 1
      %vm672 = vcmp.lt.s32.totalorder %v584, 15
      %vm673 = vcmp.ge.s32.totalorder %v583, 1
      %vm674 = vcmp.lt.s32.totalorder %v583, 15
      %675 = vrot.lane.b32.xlu0 %v661, 17
      %v676 = vpop.permute.xlu0 %675
      %677 = vrot.lane.b32.xlu0 %v663, 17
      %v678 = vpop.permute.xlu0 %677
      %v679 = vlaneseq
      %v680 = vand.u32 %v679, 127
      %vm681 = vcmp.lt.s32.totalorder %v680, 17
      %v682 = vsel %vm681, %v676, %v678
      %v683 = vsel %vm681, %v678, %v676
      %vm684 = vmand %vm673, %vm671
      %v685 = vsel %vm684, 1, 0
      %v686 = vlaneseq
      %v687 = vshrl.u32 %v686, 7
      %v688 = vsub.s32 0, %v687
      %v689 = vrot.slane %v685, %v688
      %v690 = vlaneseq
      %v691 = vshrl.u32 %v690, 7
      %v692 = vsub.s32 1, %v691
      %v693 = vrot.slane %v685, %v692
      %vm694 = vcmp.eq.s32.totalorder %v689, 1
      %vm695 = vcmp.eq.s32.totalorder %v693, 1
      %v696 = vsel %vm694, %v683, 0.0
      %v697 = vsel %vm695, %v682, 0.0
      %v698 = vld [vmem:[%s5] sm:$0xff]
      %699 = vrot.lane.b32.xlu0 %v661, 16
      %v700 = vpop.permute.xlu0 %699
      %701 = vrot.lane.b32.xlu0 %v663, 16
      %v702 = vpop.permute.xlu0 %701
      %vm703 = vcmp.lt.s32.totalorder %v680, 16
      %v704 = vsel %vm703, %v700, %v702
      %v705 = vsel %vm703, %v702, %v700
      %v706 = vsel %vm673, 1, 0
      %v707 = vlaneseq
      %v708 = vshrl.u32 %v707, 7
      %v709 = vsub.s32 0, %v708
      %v710 = vrot.slane %v706, %v709
      %v711 = vlaneseq
      %v712 = vshrl.u32 %v711, 7
      %v713 = vsub.s32 1, %v712
      %v714 = vrot.slane %v706, %v713
      %vm715 = vcmp.eq.s32.totalorder %v710, 1
      %vm716 = vcmp.eq.s32.totalorder %v714, 1
      %v717 = vsel %vm715, %v705, 0.0
      %v718 = vsel %vm716, %v704, 0.0
      %s719 = scalar_lea.vmem %s5, 8
      %v720 = vld [vmem:[%s719] sm:$0xff]
      %vm721 = vcmask 64512
      %v723 = vsel %vm721, %v720, 0
      %725 = vmatprep.subr.mxu0 0.0
      %726 = vmatpush1.msra.mxu0 0.0
      %727 = vmatprep.subr.mxu0 0.0
      %728 = vmatpush1.msra.mxu0 0.0
      %729 = vmatprep.subr.mxu0 0.0
      %730 = vmatpush1.msra.mxu0 0.0
      %731 = vmatprep.subr.mxu0 0.0
      %732 = vmatpush1.msra.mxu0 0.0
      %733 = vmatprep.subr.mxu0 0.0
      %734 = vmatpush1.msra.mxu0 0.0
      %735 = vmatprep.subr.mxu0 0.0
      %736 = vmatpush1.msra.mxu0 0.0
      %737 = vmatprep.subr.mxu0 0.0
      %738 = vmatpush1.msra.mxu0 0.0
      %739 = vmatprep.subr.mxu0 0.0
      %740 = vmatpush1.msra.mxu0 0.0
      %741 = vmatprep.subr.mxu0 0.0
      %742 = vmatpush1.msra.mxu0 0.0
      %743 = vmatprep.subr.mxu0 0.0
      %744 = vmatpush1.msra.mxu0 0.0
      %745 = vmatprep.subr.mxu0 0.0
      %746 = vmatpush1.msra.mxu0 0.0
      %747 = vmatprep.subr.mxu0 0.0
      %748 = vmatpush1.msra.mxu0 0.0
      %749 = vmatprep.subr.mxu0 0.0
      %750 = vmatpush1.msra.mxu0 0.0
      %751 = vmatprep.subr.mxu0 0.0
      %752 = vmatpush1.msra.mxu0 0.0
      %753 = vmatprep.subr.mxu0 0.0
      %754 = vmatpush1.msra.mxu0 0.0
      %755 = vmatprep.subr.mxu0 %v718
      %756 = vmatpush1.msra.mxu0 %v717
      %757 = vmatprep.subr.mxu0 0.0
      %758 = vmatpush2.msra.mxu0 0.0
      %759 = vmatprep.subr.mxu0 0.0
      %760 = vmatpush2.msra.mxu0 0.0
      %761 = vmatprep.subr.mxu0 0.0
      %762 = vmatpush2.msra.mxu0 0.0
      %763 = vmatprep.subr.mxu0 0.0
      %764 = vmatpush2.msra.mxu0 0.0
      %765 = vmatprep.subr.mxu0 0.0
      %766 = vmatpush2.msra.mxu0 0.0
      %767 = vmatprep.subr.mxu0 0.0
      %768 = vmatpush2.msra.mxu0 0.0
      %769 = vmatprep.subr.mxu0 0.0
      %770 = vmatpush2.msra.mxu0 0.0
      %771 = vmatprep.subr.mxu0 0.0
      %772 = vmatpush2.msra.mxu0 0.0
      %773 = vmatprep.subr.mxu0 0.0
      %774 = vmatpush2.msra.mxu0 0.0
      %775 = vmatprep.subr.mxu0 0.0
      %776 = vmatpush2.msra.mxu0 0.0
      %777 = vmatprep.subr.mxu0 0.0
      %778 = vmatpush2.msra.mxu0 0.0
      %779 = vmatprep.subr.mxu0 0.0
      %780 = vmatpush2.msra.mxu0 0.0
      %781 = vmatprep.subr.mxu0 0.0
      %782 = vmatpush2.msra.mxu0 0.0
      %783 = vmatprep.subr.mxu0 0.0
      %784 = vmatpush2.msra.mxu0 0.0
      %785 = vmatprep.subr.mxu0 0.0
      %786 = vmatpush2.msra.mxu0 0.0
      %787 = vmatprep.subr.mxu0 0.0
      %788 = vmatpush2.msra.mxu0 0.0
      %789 = vmatprep.mubr.f32.mxu0 0.0
      %790 = vmatmul.mubr.f32.gmra.mxu0 %v723
      %v791 = vpop.f32.mrf.mxu0
      %v792 = vadd.f32 0.0, %v791
      %v793 = vpop.f32.mrf.mxu0
      %v794 = vadd.f32 0.0, %v793
      %795 = vdwg.mxu0
      %v797 = vsel %vm721, %v698, 0
      %799 = vmatprep.subr.mxu0 0.0
      %800 = vmatpush1.msra.mxu0 0.0
      %801 = vmatprep.subr.mxu0 0.0
      %802 = vmatpush1.msra.mxu0 0.0
      %803 = vmatprep.subr.mxu0 0.0
      %804 = vmatpush1.msra.mxu0 0.0
      %805 = vmatprep.subr.mxu0 0.0
      %806 = vmatpush1.msra.mxu0 0.0
      %807 = vmatprep.subr.mxu0 0.0
      %808 = vmatpush1.msra.mxu0 0.0
      %809 = vmatprep.subr.mxu0 0.0
      %810 = vmatpush1.msra.mxu0 0.0
      %811 = vmatprep.subr.mxu0 0.0
      %812 = vmatpush1.msra.mxu0 0.0
      %813 = vmatprep.subr.mxu0 0.0
      %814 = vmatpush1.msra.mxu0 0.0
      %815 = vmatprep.subr.mxu0 0.0
      %816 = vmatpush1.msra.mxu0 0.0
      %817 = vmatprep.subr.mxu0 0.0
      %818 = vmatpush1.msra.mxu0 0.0
      %819 = vmatprep.subr.mxu0 0.0
      %820 = vmatpush1.msra.mxu0 0.0
      %821 = vmatprep.subr.mxu0 0.0
      %822 = vmatpush1.msra.mxu0 0.0
      %823 = vmatprep.subr.mxu0 0.0
      %824 = vmatpush1.msra.mxu0 0.0
      %825 = vmatprep.subr.mxu0 0.0
      %826 = vmatpush1.msra.mxu0 0.0
      %827 = vmatprep.subr.mxu0 0.0
      %828 = vmatpush1.msra.mxu0 0.0
      %829 = vmatprep.subr.mxu0 %v697
      %830 = vmatpush1.msra.mxu0 %v696
      %831 = vmatprep.subr.mxu0 0.0
      %832 = vmatpush2.msra.mxu0 0.0
      %833 = vmatprep.subr.mxu0 0.0
      %834 = vmatpush2.msra.mxu0 0.0
      %835 = vmatprep.subr.mxu0 0.0
      %836 = vmatpush2.msra.mxu0 0.0
      %837 = vmatprep.subr.mxu0 0.0
      %838 = vmatpush2.msra.mxu0 0.0
      %839 = vmatprep.subr.mxu0 0.0
      %840 = vmatpush2.msra.mxu0 0.0
      %841 = vmatprep.subr.mxu0 0.0
      %842 = vmatpush2.msra.mxu0 0.0
      %843 = vmatprep.subr.mxu0 0.0
      %844 = vmatpush2.msra.mxu0 0.0
      %845 = vmatprep.subr.mxu0 0.0
      %846 = vmatpush2.msra.mxu0 0.0
      %847 = vmatprep.subr.mxu0 0.0
      %848 = vmatpush2.msra.mxu0 0.0
      %849 = vmatprep.subr.mxu0 0.0
      %850 = vmatpush2.msra.mxu0 0.0
      %851 = vmatprep.subr.mxu0 0.0
      %852 = vmatpush2.msra.mxu0 0.0
      %853 = vmatprep.subr.mxu0 0.0
      %854 = vmatpush2.msra.mxu0 0.0
      %855 = vmatprep.subr.mxu0 0.0
      %856 = vmatpush2.msra.mxu0 0.0
      %857 = vmatprep.subr.mxu0 0.0
      %858 = vmatpush2.msra.mxu0 0.0
      %859 = vmatprep.subr.mxu0 0.0
      %860 = vmatpush2.msra.mxu0 0.0
      %861 = vmatprep.subr.mxu0 0.0
      %862 = vmatpush2.msra.mxu0 0.0
      %863 = vmatprep.mubr.f32.mxu0 0.0
      %864 = vmatmul.mubr.f32.gmra.mxu0 %v797
      %v865 = vpop.f32.mrf.mxu0
      %v866 = vadd.f32 %v792, %v865
      %v867 = vpop.f32.mrf.mxu0
      %v868 = vadd.f32 %v794, %v867
      %869 = vdwg.mxu0
      %870 = vrot.lane.b32.xlu0 %v661, 15
      %v871 = vpop.permute.xlu0 %870
      %872 = vrot.lane.b32.xlu0 %v663, 15
      %v873 = vpop.permute.xlu0 %872
      %vm874 = vcmp.lt.s32.totalorder %v680, 15
      %v875 = vsel %vm874, %v871, %v873
      %v876 = vsel %vm874, %v873, %v871
      %vm877 = vmand %vm673, %vm672
      %v878 = vsel %vm877, 1, 0
      %v879 = vlaneseq
      %v880 = vshrl.u32 %v879, 7
      %v881 = vsub.s32 0, %v880
      %v882 = vrot.slane %v878, %v881
      %v883 = vlaneseq
      %v884 = vshrl.u32 %v883, 7
      %v885 = vsub.s32 1, %v884
      %v886 = vrot.slane %v878, %v885
      %vm887 = vcmp.eq.s32.totalorder %v882, 1
      %vm888 = vcmp.eq.s32.totalorder %v886, 1
      %v889 = vsel %vm887, %v876, 0.0
      %v890 = vsel %vm888, %v875, 0.0
      %s891 = scalar_lea.vmem %s5, 16
      %v892 = vld [vmem:[%s891] sm:$0xff]
      %v894 = vsel %vm721, %v892, 0
      %896 = vmatprep.subr.mxu0 0.0
      %897 = vmatpush1.msra.mxu0 0.0
      %898 = vmatprep.subr.mxu0 0.0
      %899 = vmatpush1.msra.mxu0 0.0
      %900 = vmatprep.subr.mxu0 0.0
      %901 = vmatpush1.msra.mxu0 0.0
      %902 = vmatprep.subr.mxu0 0.0
      %903 = vmatpush1.msra.mxu0 0.0
      %904 = vmatprep.subr.mxu0 0.0
      %905 = vmatpush1.msra.mxu0 0.0
      %906 = vmatprep.subr.mxu0 0.0
      %907 = vmatpush1.msra.mxu0 0.0
      %908 = vmatprep.subr.mxu0 0.0
      %909 = vmatpush1.msra.mxu0 0.0
      %910 = vmatprep.subr.mxu0 0.0
      %911 = vmatpush1.msra.mxu0 0.0
      %912 = vmatprep.subr.mxu0 0.0
      %913 = vmatpush1.msra.mxu0 0.0
      %914 = vmatprep.subr.mxu0 0.0
      %915 = vmatpush1.msra.mxu0 0.0
      %916 = vmatprep.subr.mxu0 0.0
      %917 = vmatpush1.msra.mxu0 0.0
      %918 = vmatprep.subr.mxu0 0.0
      %919 = vmatpush1.msra.mxu0 0.0
      %920 = vmatprep.subr.mxu0 0.0
      %921 = vmatpush1.msra.mxu0 0.0
      %922 = vmatprep.subr.mxu0 0.0
      %923 = vmatpush1.msra.mxu0 0.0
      %924 = vmatprep.subr.mxu0 0.0
      %925 = vmatpush1.msra.mxu0 0.0
      %926 = vmatprep.subr.mxu0 %v890
      %927 = vmatpush1.msra.mxu0 %v889
      %928 = vmatprep.subr.mxu0 0.0
      %929 = vmatpush2.msra.mxu0 0.0
      %930 = vmatprep.subr.mxu0 0.0
      %931 = vmatpush2.msra.mxu0 0.0
      %932 = vmatprep.subr.mxu0 0.0
      %933 = vmatpush2.msra.mxu0 0.0
      %934 = vmatprep.subr.mxu0 0.0
      %935 = vmatpush2.msra.mxu0 0.0
      %936 = vmatprep.subr.mxu0 0.0
      %937 = vmatpush2.msra.mxu0 0.0
      %938 = vmatprep.subr.mxu0 0.0
      %939 = vmatpush2.msra.mxu0 0.0
      %940 = vmatprep.subr.mxu0 0.0
      %941 = vmatpush2.msra.mxu0 0.0
      %942 = vmatprep.subr.mxu0 0.0
      %943 = vmatpush2.msra.mxu0 0.0
      %944 = vmatprep.subr.mxu0 0.0
      %945 = vmatpush2.msra.mxu0 0.0
      %946 = vmatprep.subr.mxu0 0.0
      %947 = vmatpush2.msra.mxu0 0.0
      %948 = vmatprep.subr.mxu0 0.0
      %949 = vmatpush2.msra.mxu0 0.0
      %950 = vmatprep.subr.mxu0 0.0
      %951 = vmatpush2.msra.mxu0 0.0
      %952 = vmatprep.subr.mxu0 0.0
      %953 = vmatpush2.msra.mxu0 0.0
      %954 = vmatprep.subr.mxu0 0.0
      %955 = vmatpush2.msra.mxu0 0.0
      %956 = vmatprep.subr.mxu0 0.0
      %957 = vmatpush2.msra.mxu0 0.0
      %958 = vmatprep.subr.mxu0 0.0
      %959 = vmatpush2.msra.mxu0 0.0
      %960 = vmatprep.mubr.f32.mxu0 0.0
      %961 = vmatmul.mubr.f32.gmra.mxu0 %v894
      %v962 = vpop.f32.mrf.mxu0
      %v963 = vadd.f32 0.0, %v962
      %v964 = vpop.f32.mrf.mxu0
      %v965 = vadd.f32 0.0, %v964
      %966 = vdwg.mxu0
      %v967 = vadd.f32 %v866, %v963
      %v968 = vadd.f32 %v868, %v965
      %969 = vrot.lane.b32.xlu0 %v661, 1
      %v970 = vpop.permute.xlu0 %969
      %971 = vrot.lane.b32.xlu0 %v663, 1
      %v972 = vpop.permute.xlu0 %971
      %vm973 = vcmp.lt.s32.totalorder %v680, 1
      %v974 = vsel %vm973, %v970, %v972
      %v975 = vsel %vm973, %v972, %v970
      %v976 = vsel %vm671, 1, 0
      %v977 = vlaneseq
      %v978 = vshrl.u32 %v977, 7
      %v979 = vsub.s32 0, %v978
      %v980 = vrot.slane %v976, %v979
      %v981 = vlaneseq
      %v982 = vshrl.u32 %v981, 7
      %v983 = vsub.s32 1, %v982
      %v984 = vrot.slane %v976, %v983
      %vm985 = vcmp.eq.s32.totalorder %v980, 1
      %vm986 = vcmp.eq.s32.totalorder %v984, 1
      %v987 = vsel %vm985, %v975, 0.0
      %v988 = vsel %vm986, %v974, 0.0
      %s989 = scalar_lea.vmem %s5, 24
      %v990 = vld [vmem:[%s989] sm:$0xff]
      %v992 = vsel %vm721, %v990, 0
      %994 = vmatprep.subr.mxu0 0.0
      %995 = vmatpush1.msra.mxu0 0.0
      %996 = vmatprep.subr.mxu0 0.0
      %997 = vmatpush1.msra.mxu0 0.0
      %998 = vmatprep.subr.mxu0 0.0
      %999 = vmatpush1.msra.mxu0 0.0
      %1000 = vmatprep.subr.mxu0 0.0
      %1001 = vmatpush1.msra.mxu0 0.0
      %1002 = vmatprep.subr.mxu0 0.0
      %1003 = vmatpush1.msra.mxu0 0.0
      %1004 = vmatprep.subr.mxu0 0.0
      %1005 = vmatpush1.msra.mxu0 0.0
      %1006 = vmatprep.subr.mxu0 0.0
      %1007 = vmatpush1.msra.mxu0 0.0
      %1008 = vmatprep.subr.mxu0 0.0
      %1009 = vmatpush1.msra.mxu0 0.0
      %1010 = vmatprep.subr.mxu0 0.0
      %1011 = vmatpush1.msra.mxu0 0.0
      %1012 = vmatprep.subr.mxu0 0.0
      %1013 = vmatpush1.msra.mxu0 0.0
      %1014 = vmatprep.subr.mxu0 0.0
      %1015 = vmatpush1.msra.mxu0 0.0
      %1016 = vmatprep.subr.mxu0 0.0
      %1017 = vmatpush1.msra.mxu0 0.0
      %1018 = vmatprep.subr.mxu0 0.0
      %1019 = vmatpush1.msra.mxu0 0.0
      %1020 = vmatprep.subr.mxu0 0.0
      %1021 = vmatpush1.msra.mxu0 0.0
      %1022 = vmatprep.subr.mxu0 0.0
      %1023 = vmatpush1.msra.mxu0 0.0
      %1024 = vmatprep.subr.mxu0 %v988
      %1025 = vmatpush1.msra.mxu0 %v987
      %1026 = vmatprep.subr.mxu0 0.0
      %1027 = vmatpush2.msra.mxu0 0.0
      %1028 = vmatprep.subr.mxu0 0.0
      %1029 = vmatpush2.msra.mxu0 0.0
      %1030 = vmatprep.subr.mxu0 0.0
      %1031 = vmatpush2.msra.mxu0 0.0
      %1032 = vmatprep.subr.mxu0 0.0
      %1033 = vmatpush2.msra.mxu0 0.0
      %1034 = vmatprep.subr.mxu0 0.0
      %1035 = vmatpush2.msra.mxu0 0.0
      %1036 = vmatprep.subr.mxu0 0.0
      %1037 = vmatpush2.msra.mxu0 0.0
      %1038 = vmatprep.subr.mxu0 0.0
      %1039 = vmatpush2.msra.mxu0 0.0
      %1040 = vmatprep.subr.mxu0 0.0
      %1041 = vmatpush2.msra.mxu0 0.0
      %1042 = vmatprep.subr.mxu0 0.0
      %1043 = vmatpush2.msra.mxu0 0.0
      %1044 = vmatprep.subr.mxu0 0.0
      %1045 = vmatpush2.msra.mxu0 0.0
      %1046 = vmatprep.subr.mxu0 0.0
      %1047 = vmatpush2.msra.mxu0 0.0
      %1048 = vmatprep.subr.mxu0 0.0
      %1049 = vmatpush2.msra.mxu0 0.0
      %1050 = vmatprep.subr.mxu0 0.0
      %1051 = vmatpush2.msra.mxu0 0.0
      %1052 = vmatprep.subr.mxu0 0.0
      %1053 = vmatpush2.msra.mxu0 0.0
      %1054 = vmatprep.subr.mxu0 0.0
      %1055 = vmatpush2.msra.mxu0 0.0
      %1056 = vmatprep.subr.mxu0 0.0
      %1057 = vmatpush2.msra.mxu0 0.0
      %1058 = vmatprep.mubr.f32.mxu0 0.0
      %1059 = vmatmul.mubr.f32.gmra.mxu0 %v992
      %v1060 = vpop.f32.mrf.mxu0
      %v1061 = vadd.f32 0.0, %v1060
      %v1062 = vpop.f32.mrf.mxu0
      %v1063 = vadd.f32 0.0, %v1062
      %1064 = vdwg.mxu0
      %v1065 = vadd.f32 %v967, %v1061
      %v1066 = vadd.f32 %v968, %v1063
      %s1067 = scalar_lea.vmem %s5, 32
      %v1068 = vld [vmem:[%s1067] sm:$0xff]
      %v1070 = vsel %vm721, %v1068, 0
      %1072 = vmatprep.subr.mxu0 0.0
      %1073 = vmatpush1.msra.mxu0 0.0
      %1074 = vmatprep.subr.mxu0 0.0
      %1075 = vmatpush1.msra.mxu0 0.0
      %1076 = vmatprep.subr.mxu0 0.0
      %1077 = vmatpush1.msra.mxu0 0.0
      %1078 = vmatprep.subr.mxu0 0.0
      %1079 = vmatpush1.msra.mxu0 0.0
      %1080 = vmatprep.subr.mxu0 0.0
      %1081 = vmatpush1.msra.mxu0 0.0
      %1082 = vmatprep.subr.mxu0 0.0
      %1083 = vmatpush1.msra.mxu0 0.0
      %1084 = vmatprep.subr.mxu0 0.0
      %1085 = vmatpush1.msra.mxu0 0.0
      %1086 = vmatprep.subr.mxu0 0.0
      %1087 = vmatpush1.msra.mxu0 0.0
      %1088 = vmatprep.subr.mxu0 0.0
      %1089 = vmatpush1.msra.mxu0 0.0
      %1090 = vmatprep.subr.mxu0 0.0
      %1091 = vmatpush1.msra.mxu0 0.0
      %1092 = vmatprep.subr.mxu0 0.0
      %1093 = vmatpush1.msra.mxu0 0.0
      %1094 = vmatprep.subr.mxu0 0.0
      %1095 = vmatpush1.msra.mxu0 0.0
      %1096 = vmatprep.subr.mxu0 0.0
      %1097 = vmatpush1.msra.mxu0 0.0
      %1098 = vmatprep.subr.mxu0 0.0
      %1099 = vmatpush1.msra.mxu0 0.0
      %1100 = vmatprep.subr.mxu0 0.0
      %1101 = vmatpush1.msra.mxu0 0.0
      %1102 = vmatprep.subr.mxu0 %v663
      %1103 = vmatpush1.msra.mxu0 %v661
      %1104 = vmatprep.subr.mxu0 0.0
      %1105 = vmatpush2.msra.mxu0 0.0
      %1106 = vmatprep.subr.mxu0 0.0
      %1107 = vmatpush2.msra.mxu0 0.0
      %1108 = vmatprep.subr.mxu0 0.0
      %1109 = vmatpush2.msra.mxu0 0.0
      %1110 = vmatprep.subr.mxu0 0.0
      %1111 = vmatpush2.msra.mxu0 0.0
      %1112 = vmatprep.subr.mxu0 0.0
      %1113 = vmatpush2.msra.mxu0 0.0
      %1114 = vmatprep.subr.mxu0 0.0
      %1115 = vmatpush2.msra.mxu0 0.0
      %1116 = vmatprep.subr.mxu0 0.0
      %1117 = vmatpush2.msra.mxu0 0.0
      %1118 = vmatprep.subr.mxu0 0.0
      %1119 = vmatpush2.msra.mxu0 0.0
      %1120 = vmatprep.subr.mxu0 0.0
      %1121 = vmatpush2.msra.mxu0 0.0
      %1122 = vmatprep.subr.mxu0 0.0
      %1123 = vmatpush2.msra.mxu0 0.0
      %1124 = vmatprep.subr.mxu0 0.0
      %1125 = vmatpush2.msra.mxu0 0.0
      %1126 = vmatprep.subr.mxu0 0.0
      %1127 = vmatpush2.msra.mxu0 0.0
      %1128 = vmatprep.subr.mxu0 0.0
      %1129 = vmatpush2.msra.mxu0 0.0
      %1130 = vmatprep.subr.mxu0 0.0
      %1131 = vmatpush2.msra.mxu0 0.0
      %1132 = vmatprep.subr.mxu0 0.0
      %1133 = vmatpush2.msra.mxu0 0.0
      %1134 = vmatprep.subr.mxu0 0.0
      %1135 = vmatpush2.msra.mxu0 0.0
      %1136 = vmatprep.mubr.f32.mxu0 0.0
      %1137 = vmatmul.mubr.f32.gmra.mxu0 %v1070
      %v1138 = vpop.f32.mrf.mxu0
      %v1139 = vadd.f32 0.0, %v1138
      %v1140 = vpop.f32.mrf.mxu0
      %v1141 = vadd.f32 0.0, %v1140
      %1142 = vdwg.mxu0
      %v1143 = vadd.f32 %v1065, %v1139
      %v1144 = vadd.f32 %v1066, %v1141
      %1145 = vrot.lane.b32.xlu0 %v661, 127
      %v1146 = vpop.permute.xlu0 %1145
      %1147 = vrot.lane.b32.xlu0 %v663, 127
      %v1148 = vpop.permute.xlu0 %1147
      %vm1149 = vcmp.lt.s32.totalorder %v680, 127
      %v1150 = vsel %vm1149, %v1146, %v1148
      %v1151 = vsel %vm1149, %v1148, %v1146
      %v1152 = vsel %vm672, 1, 0
      %v1153 = vlaneseq
      %v1154 = vshrl.u32 %v1153, 7
      %v1155 = vsub.s32 0, %v1154
      %v1156 = vrot.slane %v1152, %v1155
      %v1157 = vlaneseq
      %v1158 = vshrl.u32 %v1157, 7
      %v1159 = vsub.s32 1, %v1158
      %v1160 = vrot.slane %v1152, %v1159
      %vm1161 = vcmp.eq.s32.totalorder %v1156, 1
      %vm1162 = vcmp.eq.s32.totalorder %v1160, 1
      %v1163 = vsel %vm1161, %v1150, 0.0
      %v1164 = vsel %vm1162, %v1151, 0.0
      %s1165 = scalar_lea.vmem %s5, 40
      %v1166 = vld [vmem:[%s1165] sm:$0xff]
      %v1168 = vsel %vm721, %v1166, 0
      %1170 = vmatprep.subr.mxu0 0.0
      %1171 = vmatpush1.msra.mxu0 0.0
      %1172 = vmatprep.subr.mxu0 0.0
      %1173 = vmatpush1.msra.mxu0 0.0
      %1174 = vmatprep.subr.mxu0 0.0
      %1175 = vmatpush1.msra.mxu0 0.0
      %1176 = vmatprep.subr.mxu0 0.0
      %1177 = vmatpush1.msra.mxu0 0.0
      %1178 = vmatprep.subr.mxu0 0.0
      %1179 = vmatpush1.msra.mxu0 0.0
      %1180 = vmatprep.subr.mxu0 0.0
      %1181 = vmatpush1.msra.mxu0 0.0
      %1182 = vmatprep.subr.mxu0 0.0
      %1183 = vmatpush1.msra.mxu0 0.0
      %1184 = vmatprep.subr.mxu0 0.0
      %1185 = vmatpush1.msra.mxu0 0.0
      %1186 = vmatprep.subr.mxu0 0.0
      %1187 = vmatpush1.msra.mxu0 0.0
      %1188 = vmatprep.subr.mxu0 0.0
      %1189 = vmatpush1.msra.mxu0 0.0
      %1190 = vmatprep.subr.mxu0 0.0
      %1191 = vmatpush1.msra.mxu0 0.0
      %1192 = vmatprep.subr.mxu0 0.0
      %1193 = vmatpush1.msra.mxu0 0.0
      %1194 = vmatprep.subr.mxu0 0.0
      %1195 = vmatpush1.msra.mxu0 0.0
      %1196 = vmatprep.subr.mxu0 0.0
      %1197 = vmatpush1.msra.mxu0 0.0
      %1198 = vmatprep.subr.mxu0 0.0
      %1199 = vmatpush1.msra.mxu0 0.0
      %1200 = vmatprep.subr.mxu0 %v1164
      %1201 = vmatpush1.msra.mxu0 %v1163
      %1202 = vmatprep.subr.mxu0 0.0
      %1203 = vmatpush2.msra.mxu0 0.0
      %1204 = vmatprep.subr.mxu0 0.0
      %1205 = vmatpush2.msra.mxu0 0.0
      %1206 = vmatprep.subr.mxu0 0.0
      %1207 = vmatpush2.msra.mxu0 0.0
      %1208 = vmatprep.subr.mxu0 0.0
      %1209 = vmatpush2.msra.mxu0 0.0
      %1210 = vmatprep.subr.mxu0 0.0
      %1211 = vmatpush2.msra.mxu0 0.0
      %1212 = vmatprep.subr.mxu0 0.0
      %1213 = vmatpush2.msra.mxu0 0.0
      %1214 = vmatprep.subr.mxu0 0.0
      %1215 = vmatpush2.msra.mxu0 0.0
      %1216 = vmatprep.subr.mxu0 0.0
      %1217 = vmatpush2.msra.mxu0 0.0
      %1218 = vmatprep.subr.mxu0 0.0
      %1219 = vmatpush2.msra.mxu0 0.0
      %1220 = vmatprep.subr.mxu0 0.0
      %1221 = vmatpush2.msra.mxu0 0.0
      %1222 = vmatprep.subr.mxu0 0.0
      %1223 = vmatpush2.msra.mxu0 0.0
      %1224 = vmatprep.subr.mxu0 0.0
      %1225 = vmatpush2.msra.mxu0 0.0
      %1226 = vmatprep.subr.mxu0 0.0
      %1227 = vmatpush2.msra.mxu0 0.0
      %1228 = vmatprep.subr.mxu0 0.0
      %1229 = vmatpush2.msra.mxu0 0.0
      %1230 = vmatprep.subr.mxu0 0.0
      %1231 = vmatpush2.msra.mxu0 0.0
      %1232 = vmatprep.subr.mxu0 0.0
      %1233 = vmatpush2.msra.mxu0 0.0
      %1234 = vmatprep.mubr.f32.mxu0 0.0
      %1235 = vmatmul.mubr.f32.gmra.mxu0 %v1168
      %v1236 = vpop.f32.mrf.mxu0
      %v1237 = vadd.f32 0.0, %v1236
      %v1238 = vpop.f32.mrf.mxu0
      %v1239 = vadd.f32 0.0, %v1238
      %1240 = vdwg.mxu0
      %v1241 = vadd.f32 %v1143, %v1237
      %v1242 = vadd.f32 %v1144, %v1239
      %1243 = vrot.lane.b32.xlu0 %v661, 113
      %v1244 = vpop.permute.xlu0 %1243
      %1245 = vrot.lane.b32.xlu0 %v663, 113
      %v1246 = vpop.permute.xlu0 %1245
      %vm1247 = vcmp.lt.s32.totalorder %v680, 113
      %v1248 = vsel %vm1247, %v1244, %v1246
      %v1249 = vsel %vm1247, %v1246, %v1244
      %vm1250 = vmand %vm674, %vm671
      %v1251 = vsel %vm1250, 1, 0
      %v1252 = vlaneseq
      %v1253 = vshrl.u32 %v1252, 7
      %v1254 = vsub.s32 0, %v1253
      %v1255 = vrot.slane %v1251, %v1254
      %v1256 = vlaneseq
      %v1257 = vshrl.u32 %v1256, 7
      %v1258 = vsub.s32 1, %v1257
      %v1259 = vrot.slane %v1251, %v1258
      %vm1260 = vcmp.eq.s32.totalorder %v1255, 1
      %vm1261 = vcmp.eq.s32.totalorder %v1259, 1
      %v1262 = vsel %vm1260, %v1248, 0.0
      %v1263 = vsel %vm1261, %v1249, 0.0
      %s1264 = scalar_lea.vmem %s5, 48
      %v1265 = vld [vmem:[%s1264] sm:$0xff]
      %v1267 = vsel %vm721, %v1265, 0
      %1269 = vmatprep.subr.mxu0 0.0
      %1270 = vmatpush1.msra.mxu0 0.0
      %1271 = vmatprep.subr.mxu0 0.0
      %1272 = vmatpush1.msra.mxu0 0.0
      %1273 = vmatprep.subr.mxu0 0.0
      %1274 = vmatpush1.msra.mxu0 0.0
      %1275 = vmatprep.subr.mxu0 0.0
      %1276 = vmatpush1.msra.mxu0 0.0
      %1277 = vmatprep.subr.mxu0 0.0
      %1278 = vmatpush1.msra.mxu0 0.0
      %1279 = vmatprep.subr.mxu0 0.0
      %1280 = vmatpush1.msra.mxu0 0.0
      %1281 = vmatprep.subr.mxu0 0.0
      %1282 = vmatpush1.msra.mxu0 0.0
      %1283 = vmatprep.subr.mxu0 0.0
      %1284 = vmatpush1.msra.mxu0 0.0
      %1285 = vmatprep.subr.mxu0 0.0
      %1286 = vmatpush1.msra.mxu0 0.0
      %1287 = vmatprep.subr.mxu0 0.0
      %1288 = vmatpush1.msra.mxu0 0.0
      %1289 = vmatprep.subr.mxu0 0.0
      %1290 = vmatpush1.msra.mxu0 0.0
      %1291 = vmatprep.subr.mxu0 0.0
      %1292 = vmatpush1.msra.mxu0 0.0
      %1293 = vmatprep.subr.mxu0 0.0
      %1294 = vmatpush1.msra.mxu0 0.0
      %1295 = vmatprep.subr.mxu0 0.0
      %1296 = vmatpush1.msra.mxu0 0.0
      %1297 = vmatprep.subr.mxu0 0.0
      %1298 = vmatpush1.msra.mxu0 0.0
      %1299 = vmatprep.subr.mxu0 %v1263
      %1300 = vmatpush1.msra.mxu0 %v1262
      %1301 = vmatprep.subr.mxu0 0.0
      %1302 = vmatpush2.msra.mxu0 0.0
      %1303 = vmatprep.subr.mxu0 0.0
      %1304 = vmatpush2.msra.mxu0 0.0
      %1305 = vmatprep.subr.mxu0 0.0
      %1306 = vmatpush2.msra.mxu0 0.0
      %1307 = vmatprep.subr.mxu0 0.0
      %1308 = vmatpush2.msra.mxu0 0.0
      %1309 = vmatprep.subr.mxu0 0.0
      %1310 = vmatpush2.msra.mxu0 0.0
      %1311 = vmatprep.subr.mxu0 0.0
      %1312 = vmatpush2.msra.mxu0 0.0
      %1313 = vmatprep.subr.mxu0 0.0
      %1314 = vmatpush2.msra.mxu0 0.0
      %1315 = vmatprep.subr.mxu0 0.0
      %1316 = vmatpush2.msra.mxu0 0.0
      %1317 = vmatprep.subr.mxu0 0.0
      %1318 = vmatpush2.msra.mxu0 0.0
      %1319 = vmatprep.subr.mxu0 0.0
      %1320 = vmatpush2.msra.mxu0 0.0
      %1321 = vmatprep.subr.mxu0 0.0
      %1322 = vmatpush2.msra.mxu0 0.0
      %1323 = vmatprep.subr.mxu0 0.0
      %1324 = vmatpush2.msra.mxu0 0.0
      %1325 = vmatprep.subr.mxu0 0.0
      %1326 = vmatpush2.msra.mxu0 0.0
      %1327 = vmatprep.subr.mxu0 0.0
      %1328 = vmatpush2.msra.mxu0 0.0
      %1329 = vmatprep.subr.mxu0 0.0
      %1330 = vmatpush2.msra.mxu0 0.0
      %1331 = vmatprep.subr.mxu0 0.0
      %1332 = vmatpush2.msra.mxu0 0.0
      %1333 = vmatprep.mubr.f32.mxu0 0.0
      %1334 = vmatmul.mubr.f32.gmra.mxu0 %v1267
      %v1335 = vpop.f32.mrf.mxu0
      %v1336 = vadd.f32 0.0, %v1335
      %v1337 = vpop.f32.mrf.mxu0
      %v1338 = vadd.f32 0.0, %v1337
      %1339 = vdwg.mxu0
      %v1340 = vadd.f32 %v1241, %v1336
      %v1341 = vadd.f32 %v1242, %v1338
      %1342 = vrot.lane.b32.xlu0 %v661, 112
      %v1343 = vpop.permute.xlu0 %1342
      %1344 = vrot.lane.b32.xlu0 %v663, 112
      %v1345 = vpop.permute.xlu0 %1344
      %vm1346 = vcmp.lt.s32.totalorder %v680, 112
      %v1347 = vsel %vm1346, %v1343, %v1345
      %v1348 = vsel %vm1346, %v1345, %v1343
      %v1349 = vsel %vm674, 1, 0
      %v1350 = vlaneseq
      %v1351 = vshrl.u32 %v1350, 7
      %v1352 = vsub.s32 0, %v1351
      %v1353 = vrot.slane %v1349, %v1352
      %v1354 = vlaneseq
      %v1355 = vshrl.u32 %v1354, 7
      %v1356 = vsub.s32 1, %v1355
      %v1357 = vrot.slane %v1349, %v1356
      %vm1358 = vcmp.eq.s32.totalorder %v1353, 1
      %vm1359 = vcmp.eq.s32.totalorder %v1357, 1
      %v1360 = vsel %vm1358, %v1347, 0.0
      %v1361 = vsel %vm1359, %v1348, 0.0
      %s1362 = scalar_lea.vmem %s5, 56
      %v1363 = vld [vmem:[%s1362] sm:$0xff]
      %v1365 = vsel %vm721, %v1363, 0
      %1367 = vmatprep.subr.mxu0 0.0
      %1368 = vmatpush1.msra.mxu0 0.0
      %1369 = vmatprep.subr.mxu0 0.0
      %1370 = vmatpush1.msra.mxu0 0.0
      %1371 = vmatprep.subr.mxu0 0.0
      %1372 = vmatpush1.msra.mxu0 0.0
      %1373 = vmatprep.subr.mxu0 0.0
      %1374 = vmatpush1.msra.mxu0 0.0
      %1375 = vmatprep.subr.mxu0 0.0
      %1376 = vmatpush1.msra.mxu0 0.0
      %1377 = vmatprep.subr.mxu0 0.0
      %1378 = vmatpush1.msra.mxu0 0.0
      %1379 = vmatprep.subr.mxu0 0.0
      %1380 = vmatpush1.msra.mxu0 0.0
      %1381 = vmatprep.subr.mxu0 0.0
      %1382 = vmatpush1.msra.mxu0 0.0
      %1383 = vmatprep.subr.mxu0 0.0
      %1384 = vmatpush1.msra.mxu0 0.0
      %1385 = vmatprep.subr.mxu0 0.0
      %1386 = vmatpush1.msra.mxu0 0.0
      %1387 = vmatprep.subr.mxu0 0.0
      %1388 = vmatpush1.msra.mxu0 0.0
      %1389 = vmatprep.subr.mxu0 0.0
      %1390 = vmatpush1.msra.mxu0 0.0
      %1391 = vmatprep.subr.mxu0 0.0
      %1392 = vmatpush1.msra.mxu0 0.0
      %1393 = vmatprep.subr.mxu0 0.0
      %1394 = vmatpush1.msra.mxu0 0.0
      %1395 = vmatprep.subr.mxu0 0.0
      %1396 = vmatpush1.msra.mxu0 0.0
      %1397 = vmatprep.subr.mxu0 %v1361
      %1398 = vmatpush1.msra.mxu0 %v1360
      %1399 = vmatprep.subr.mxu0 0.0
      %1400 = vmatpush2.msra.mxu0 0.0
      %1401 = vmatprep.subr.mxu0 0.0
      %1402 = vmatpush2.msra.mxu0 0.0
      %1403 = vmatprep.subr.mxu0 0.0
      %1404 = vmatpush2.msra.mxu0 0.0
      %1405 = vmatprep.subr.mxu0 0.0
      %1406 = vmatpush2.msra.mxu0 0.0
      %1407 = vmatprep.subr.mxu0 0.0
      %1408 = vmatpush2.msra.mxu0 0.0
      %1409 = vmatprep.subr.mxu0 0.0
      %1410 = vmatpush2.msra.mxu0 0.0
      %1411 = vmatprep.subr.mxu0 0.0
      %1412 = vmatpush2.msra.mxu0 0.0
      %1413 = vmatprep.subr.mxu0 0.0
      %1414 = vmatpush2.msra.mxu0 0.0
      %1415 = vmatprep.subr.mxu0 0.0
      %1416 = vmatpush2.msra.mxu0 0.0
      %1417 = vmatprep.subr.mxu0 0.0
      %1418 = vmatpush2.msra.mxu0 0.0
      %1419 = vmatprep.subr.mxu0 0.0
      %1420 = vmatpush2.msra.mxu0 0.0
      %1421 = vmatprep.subr.mxu0 0.0
      %1422 = vmatpush2.msra.mxu0 0.0
      %1423 = vmatprep.subr.mxu0 0.0
      %1424 = vmatpush2.msra.mxu0 0.0
      %1425 = vmatprep.subr.mxu0 0.0
      %1426 = vmatpush2.msra.mxu0 0.0
      %1427 = vmatprep.subr.mxu0 0.0
      %1428 = vmatpush2.msra.mxu0 0.0
      %1429 = vmatprep.subr.mxu0 0.0
      %1430 = vmatpush2.msra.mxu0 0.0
      %1431 = vmatprep.mubr.f32.mxu0 0.0
      %1432 = vmatmul.mubr.f32.gmra.mxu0 %v1365
      %v1433 = vpop.f32.mrf.mxu0
      %v1434 = vadd.f32 0.0, %v1433
      %v1435 = vpop.f32.mrf.mxu0
      %v1436 = vadd.f32 0.0, %v1435
      %1437 = vdwg.mxu0
      %v1438 = vadd.f32 %v1340, %v1434
      %v1439 = vadd.f32 %v1341, %v1436
      %1440 = vrot.lane.b32.xlu0 %v661, 111
      %v1441 = vpop.permute.xlu0 %1440
      %1442 = vrot.lane.b32.xlu0 %v663, 111
      %v1443 = vpop.permute.xlu0 %1442
      %vm1444 = vcmp.lt.s32.totalorder %v680, 111
      %v1445 = vsel %vm1444, %v1441, %v1443
      %v1446 = vsel %vm1444, %v1443, %v1441
      %vm1447 = vmand %vm674, %vm672
      %v1448 = vsel %vm1447, 1, 0
      %v1449 = vlaneseq
      %v1450 = vshrl.u32 %v1449, 7
      %v1451 = vsub.s32 0, %v1450
      %v1452 = vrot.slane %v1448, %v1451
      %v1453 = vlaneseq
      %v1454 = vshrl.u32 %v1453, 7
      %v1455 = vsub.s32 1, %v1454
      %v1456 = vrot.slane %v1448, %v1455
      %vm1457 = vcmp.eq.s32.totalorder %v1452, 1
      %vm1458 = vcmp.eq.s32.totalorder %v1456, 1
      %v1459 = vsel %vm1457, %v1445, 0.0
      %v1460 = vsel %vm1458, %v1446, 0.0
      %s1461 = scalar_lea.vmem %s5, 64
      %v1462 = vld [vmem:[%s1461] sm:$0xff]
      %v1464 = vsel %vm721, %v1462, 0
      %1466 = vmatprep.subr.mxu0 0.0
      %1467 = vmatpush1.msra.mxu0 0.0
      %1468 = vmatprep.subr.mxu0 0.0
      %1469 = vmatpush1.msra.mxu0 0.0
      %1470 = vmatprep.subr.mxu0 0.0
      %1471 = vmatpush1.msra.mxu0 0.0
      %1472 = vmatprep.subr.mxu0 0.0
      %1473 = vmatpush1.msra.mxu0 0.0
      %1474 = vmatprep.subr.mxu0 0.0
      %1475 = vmatpush1.msra.mxu0 0.0
      %1476 = vmatprep.subr.mxu0 0.0
      %1477 = vmatpush1.msra.mxu0 0.0
      %1478 = vmatprep.subr.mxu0 0.0
      %1479 = vmatpush1.msra.mxu0 0.0
      %1480 = vmatprep.subr.mxu0 0.0
      %1481 = vmatpush1.msra.mxu0 0.0
      %1482 = vmatprep.subr.mxu0 0.0
      %1483 = vmatpush1.msra.mxu0 0.0
      %1484 = vmatprep.subr.mxu0 0.0
      %1485 = vmatpush1.msra.mxu0 0.0
      %1486 = vmatprep.subr.mxu0 0.0
      %1487 = vmatpush1.msra.mxu0 0.0
      %1488 = vmatprep.subr.mxu0 0.0
      %1489 = vmatpush1.msra.mxu0 0.0
      %1490 = vmatprep.subr.mxu0 0.0
      %1491 = vmatpush1.msra.mxu0 0.0
      %1492 = vmatprep.subr.mxu0 0.0
      %1493 = vmatpush1.msra.mxu0 0.0
      %1494 = vmatprep.subr.mxu0 0.0
      %1495 = vmatpush1.msra.mxu0 0.0
      %1496 = vmatprep.subr.mxu0 %v1460
      %1497 = vmatpush1.msra.mxu0 %v1459
      %1498 = vmatprep.subr.mxu0 0.0
      %1499 = vmatpush2.msra.mxu0 0.0
      %1500 = vmatprep.subr.mxu0 0.0
      %1501 = vmatpush2.msra.mxu0 0.0
      %1502 = vmatprep.subr.mxu0 0.0
      %1503 = vmatpush2.msra.mxu0 0.0
      %1504 = vmatprep.subr.mxu0 0.0
      %1505 = vmatpush2.msra.mxu0 0.0
      %1506 = vmatprep.subr.mxu0 0.0
      %1507 = vmatpush2.msra.mxu0 0.0
      %1508 = vmatprep.subr.mxu0 0.0
      %1509 = vmatpush2.msra.mxu0 0.0
      %1510 = vmatprep.subr.mxu0 0.0
      %1511 = vmatpush2.msra.mxu0 0.0
      %1512 = vmatprep.subr.mxu0 0.0
      %1513 = vmatpush2.msra.mxu0 0.0
      %1514 = vmatprep.subr.mxu0 0.0
      %1515 = vmatpush2.msra.mxu0 0.0
      %1516 = vmatprep.subr.mxu0 0.0
      %1517 = vmatpush2.msra.mxu0 0.0
      %1518 = vmatprep.subr.mxu0 0.0
      %1519 = vmatpush2.msra.mxu0 0.0
      %1520 = vmatprep.subr.mxu0 0.0
      %1521 = vmatpush2.msra.mxu0 0.0
      %1522 = vmatprep.subr.mxu0 0.0
      %1523 = vmatpush2.msra.mxu0 0.0
      %1524 = vmatprep.subr.mxu0 0.0
      %1525 = vmatpush2.msra.mxu0 0.0
      %1526 = vmatprep.subr.mxu0 0.0
      %1527 = vmatpush2.msra.mxu0 0.0
      %1528 = vmatprep.subr.mxu0 0.0
      %1529 = vmatpush2.msra.mxu0 0.0
      %1530 = vmatprep.mubr.f32.mxu0 0.0
      %1531 = vmatmul.mubr.f32.gmra.mxu0 %v1464
      %v1532 = vpop.f32.mrf.mxu0
      %v1533 = vadd.f32 0.0, %v1532
      %v1534 = vpop.f32.mrf.mxu0
      %v1535 = vadd.f32 0.0, %v1534
      %1536 = vdwg.mxu0
      %v1537 = vadd.f32 %v1438, %v1533
      %v1538 = vadd.f32 %v1439, %v1535
      %vm1539 = vcmp.ge.s32.totalorder %v584, 2
      %vm1540 = vcmp.lt.s32.totalorder %v584, 14
      %vm1541 = vcmp.ge.s32.totalorder %v583, 2
      %vm1542 = vcmp.lt.s32.totalorder %v583, 14
      %1543 = vrot.lane.b32.xlu0 %v667, 34
      %v1544 = vpop.permute.xlu0 %1543
      %1545 = vrot.lane.b32.xlu0 %v669, 34
      %v1546 = vpop.permute.xlu0 %1545
      %vm1547 = vcmp.lt.s32.totalorder %v680, 34
      %v1548 = vsel %vm1547, %v1544, %v1546
      %v1549 = vsel %vm1547, %v1546, %v1544
      %vm1550 = vmand %vm1541, %vm1539
      %v1551 = vsel %vm1550, 1, 0
      %v1552 = vlaneseq
      %v1553 = vshrl.u32 %v1552, 7
      %v1554 = vsub.s32 0, %v1553
      %v1555 = vrot.slane %v1551, %v1554
      %v1556 = vlaneseq
      %v1557 = vshrl.u32 %v1556, 7
      %v1558 = vsub.s32 1, %v1557
      %v1559 = vrot.slane %v1551, %v1558
      %vm1560 = vcmp.eq.s32.totalorder %v1555, 1
      %vm1561 = vcmp.eq.s32.totalorder %v1559, 1
      %v1562 = vsel %vm1560, %v1549, 0.0
      %v1563 = vsel %vm1561, %v1548, 0.0
      %v1564 = vld [vmem:[%s6] sm:$0xff]
      %1565 = vrot.lane.b32.xlu0 %v667, 32
      %v1566 = vpop.permute.xlu0 %1565
      %1567 = vrot.lane.b32.xlu0 %v669, 32
      %v1568 = vpop.permute.xlu0 %1567
      %vm1569 = vcmp.lt.s32.totalorder %v680, 32
      %v1570 = vsel %vm1569, %v1566, %v1568
      %v1571 = vsel %vm1569, %v1568, %v1566
      %v1572 = vsel %vm1541, 1, 0
      %v1573 = vlaneseq
      %v1574 = vshrl.u32 %v1573, 7
      %v1575 = vsub.s32 0, %v1574
      %v1576 = vrot.slane %v1572, %v1575
      %v1577 = vlaneseq
      %v1578 = vshrl.u32 %v1577, 7
      %v1579 = vsub.s32 1, %v1578
      %v1580 = vrot.slane %v1572, %v1579
      %vm1581 = vcmp.eq.s32.totalorder %v1576, 1
      %vm1582 = vcmp.eq.s32.totalorder %v1580, 1
      %v1583 = vsel %vm1581, %v1571, 0.0
      %v1584 = vsel %vm1582, %v1570, 0.0
      %s1585 = scalar_lea.vmem %s6, 8
      %v1586 = vld [vmem:[%s1585] sm:$0xff]
      %v1588 = vsel %vm721, %v1586, 0
      %1590 = vmatprep.subr.mxu0 0.0
      %1591 = vmatpush1.msra.mxu0 0.0
      %1592 = vmatprep.subr.mxu0 0.0
      %1593 = vmatpush1.msra.mxu0 0.0
      %1594 = vmatprep.subr.mxu0 0.0
      %1595 = vmatpush1.msra.mxu0 0.0
      %1596 = vmatprep.subr.mxu0 0.0
      %1597 = vmatpush1.msra.mxu0 0.0
      %1598 = vmatprep.subr.mxu0 0.0
      %1599 = vmatpush1.msra.mxu0 0.0
      %1600 = vmatprep.subr.mxu0 0.0
      %1601 = vmatpush1.msra.mxu0 0.0
      %1602 = vmatprep.subr.mxu0 0.0
      %1603 = vmatpush1.msra.mxu0 0.0
      %1604 = vmatprep.subr.mxu0 0.0
      %1605 = vmatpush1.msra.mxu0 0.0
      %1606 = vmatprep.subr.mxu0 0.0
      %1607 = vmatpush1.msra.mxu0 0.0
      %1608 = vmatprep.subr.mxu0 0.0
      %1609 = vmatpush1.msra.mxu0 0.0
      %1610 = vmatprep.subr.mxu0 0.0
      %1611 = vmatpush1.msra.mxu0 0.0
      %1612 = vmatprep.subr.mxu0 0.0
      %1613 = vmatpush1.msra.mxu0 0.0
      %1614 = vmatprep.subr.mxu0 0.0
      %1615 = vmatpush1.msra.mxu0 0.0
      %1616 = vmatprep.subr.mxu0 0.0
      %1617 = vmatpush1.msra.mxu0 0.0
      %1618 = vmatprep.subr.mxu0 0.0
      %1619 = vmatpush1.msra.mxu0 0.0
      %1620 = vmatprep.subr.mxu0 %v1584
      %1621 = vmatpush1.msra.mxu0 %v1583
      %1622 = vmatprep.subr.mxu0 0.0
      %1623 = vmatpush2.msra.mxu0 0.0
      %1624 = vmatprep.subr.mxu0 0.0
      %1625 = vmatpush2.msra.mxu0 0.0
      %1626 = vmatprep.subr.mxu0 0.0
      %1627 = vmatpush2.msra.mxu0 0.0
      %1628 = vmatprep.subr.mxu0 0.0
      %1629 = vmatpush2.msra.mxu0 0.0
      %1630 = vmatprep.subr.mxu0 0.0
      %1631 = vmatpush2.msra.mxu0 0.0
      %1632 = vmatprep.subr.mxu0 0.0
      %1633 = vmatpush2.msra.mxu0 0.0
      %1634 = vmatprep.subr.mxu0 0.0
      %1635 = vmatpush2.msra.mxu0 0.0
      %1636 = vmatprep.subr.mxu0 0.0
      %1637 = vmatpush2.msra.mxu0 0.0
      %1638 = vmatprep.subr.mxu0 0.0
      %1639 = vmatpush2.msra.mxu0 0.0
      %1640 = vmatprep.subr.mxu0 0.0
      %1641 = vmatpush2.msra.mxu0 0.0
      %1642 = vmatprep.subr.mxu0 0.0
      %1643 = vmatpush2.msra.mxu0 0.0
      %1644 = vmatprep.subr.mxu0 0.0
      %1645 = vmatpush2.msra.mxu0 0.0
      %1646 = vmatprep.subr.mxu0 0.0
      %1647 = vmatpush2.msra.mxu0 0.0
      %1648 = vmatprep.subr.mxu0 0.0
      %1649 = vmatpush2.msra.mxu0 0.0
      %1650 = vmatprep.subr.mxu0 0.0
      %1651 = vmatpush2.msra.mxu0 0.0
      %1652 = vmatprep.subr.mxu0 0.0
      %1653 = vmatpush2.msra.mxu0 0.0
      %1654 = vmatprep.mubr.f32.mxu0 0.0
      %1655 = vmatmul.mubr.f32.gmra.mxu0 %v1588
      %v1656 = vpop.f32.mrf.mxu0
      %v1657 = vadd.f32 0.0, %v1656
      %v1658 = vpop.f32.mrf.mxu0
      %v1659 = vadd.f32 0.0, %v1658
      %1660 = vdwg.mxu0
      %v1662 = vsel %vm721, %v1564, 0
      %1664 = vmatprep.subr.mxu0 0.0
      %1665 = vmatpush1.msra.mxu0 0.0
      %1666 = vmatprep.subr.mxu0 0.0
      %1667 = vmatpush1.msra.mxu0 0.0
      %1668 = vmatprep.subr.mxu0 0.0
      %1669 = vmatpush1.msra.mxu0 0.0
      %1670 = vmatprep.subr.mxu0 0.0
      %1671 = vmatpush1.msra.mxu0 0.0
      %1672 = vmatprep.subr.mxu0 0.0
      %1673 = vmatpush1.msra.mxu0 0.0
      %1674 = vmatprep.subr.mxu0 0.0
      %1675 = vmatpush1.msra.mxu0 0.0
      %1676 = vmatprep.subr.mxu0 0.0
      %1677 = vmatpush1.msra.mxu0 0.0
      %1678 = vmatprep.subr.mxu0 0.0
      %1679 = vmatpush1.msra.mxu0 0.0
      %1680 = vmatprep.subr.mxu0 0.0
      %1681 = vmatpush1.msra.mxu0 0.0
      %1682 = vmatprep.subr.mxu0 0.0
      %1683 = vmatpush1.msra.mxu0 0.0
      %1684 = vmatprep.subr.mxu0 0.0
      %1685 = vmatpush1.msra.mxu0 0.0
      %1686 = vmatprep.subr.mxu0 0.0
      %1687 = vmatpush1.msra.mxu0 0.0
      %1688 = vmatprep.subr.mxu0 0.0
      %1689 = vmatpush1.msra.mxu0 0.0
      %1690 = vmatprep.subr.mxu0 0.0
      %1691 = vmatpush1.msra.mxu0 0.0
      %1692 = vmatprep.subr.mxu0 0.0
      %1693 = vmatpush1.msra.mxu0 0.0
      %1694 = vmatprep.subr.mxu0 %v1563
      %1695 = vmatpush1.msra.mxu0 %v1562
      %1696 = vmatprep.subr.mxu0 0.0
      %1697 = vmatpush2.msra.mxu0 0.0
      %1698 = vmatprep.subr.mxu0 0.0
      %1699 = vmatpush2.msra.mxu0 0.0
      %1700 = vmatprep.subr.mxu0 0.0
      %1701 = vmatpush2.msra.mxu0 0.0
      %1702 = vmatprep.subr.mxu0 0.0
      %1703 = vmatpush2.msra.mxu0 0.0
      %1704 = vmatprep.subr.mxu0 0.0
      %1705 = vmatpush2.msra.mxu0 0.0
      %1706 = vmatprep.subr.mxu0 0.0
      %1707 = vmatpush2.msra.mxu0 0.0
      %1708 = vmatprep.subr.mxu0 0.0
      %1709 = vmatpush2.msra.mxu0 0.0
      %1710 = vmatprep.subr.mxu0 0.0
      %1711 = vmatpush2.msra.mxu0 0.0
      %1712 = vmatprep.subr.mxu0 0.0
      %1713 = vmatpush2.msra.mxu0 0.0
      %1714 = vmatprep.subr.mxu0 0.0
      %1715 = vmatpush2.msra.mxu0 0.0
      %1716 = vmatprep.subr.mxu0 0.0
      %1717 = vmatpush2.msra.mxu0 0.0
      %1718 = vmatprep.subr.mxu0 0.0
      %1719 = vmatpush2.msra.mxu0 0.0
      %1720 = vmatprep.subr.mxu0 0.0
      %1721 = vmatpush2.msra.mxu0 0.0
      %1722 = vmatprep.subr.mxu0 0.0
      %1723 = vmatpush2.msra.mxu0 0.0
      %1724 = vmatprep.subr.mxu0 0.0
      %1725 = vmatpush2.msra.mxu0 0.0
      %1726 = vmatprep.subr.mxu0 0.0
      %1727 = vmatpush2.msra.mxu0 0.0
      %1728 = vmatprep.mubr.f32.mxu0 0.0
      %1729 = vmatmul.mubr.f32.gmra.mxu0 %v1662
      %v1730 = vpop.f32.mrf.mxu0
      %v1731 = vadd.f32 %v1657, %v1730
      %v1732 = vpop.f32.mrf.mxu0
      %v1733 = vadd.f32 %v1659, %v1732
      %1734 = vdwg.mxu0
      %1735 = vrot.lane.b32.xlu0 %v667, 30
      %v1736 = vpop.permute.xlu0 %1735
      %1737 = vrot.lane.b32.xlu0 %v669, 30
      %v1738 = vpop.permute.xlu0 %1737
      %vm1739 = vcmp.lt.s32.totalorder %v680, 30
      %v1740 = vsel %vm1739, %v1736, %v1738
      %v1741 = vsel %vm1739, %v1738, %v1736
      %vm1742 = vmand %vm1541, %vm1540
      %v1743 = vsel %vm1742, 1, 0
      %v1744 = vlaneseq
      %v1745 = vshrl.u32 %v1744, 7
      %v1746 = vsub.s32 0, %v1745
      %v1747 = vrot.slane %v1743, %v1746
      %v1748 = vlaneseq
      %v1749 = vshrl.u32 %v1748, 7
      %v1750 = vsub.s32 1, %v1749
      %v1751 = vrot.slane %v1743, %v1750
      %vm1752 = vcmp.eq.s32.totalorder %v1747, 1
      %vm1753 = vcmp.eq.s32.totalorder %v1751, 1
      %v1754 = vsel %vm1752, %v1741, 0.0
      %v1755 = vsel %vm1753, %v1740, 0.0
      %s1756 = scalar_lea.vmem %s6, 16
      %v1757 = vld [vmem:[%s1756] sm:$0xff]
      %v1759 = vsel %vm721, %v1757, 0
      %1761 = vmatprep.subr.mxu0 0.0
      %1762 = vmatpush1.msra.mxu0 0.0
      %1763 = vmatprep.subr.mxu0 0.0
      %1764 = vmatpush1.msra.mxu0 0.0
      %1765 = vmatprep.subr.mxu0 0.0
      %1766 = vmatpush1.msra.mxu0 0.0
      %1767 = vmatprep.subr.mxu0 0.0
      %1768 = vmatpush1.msra.mxu0 0.0
      %1769 = vmatprep.subr.mxu0 0.0
      %1770 = vmatpush1.msra.mxu0 0.0
      %1771 = vmatprep.subr.mxu0 0.0
      %1772 = vmatpush1.msra.mxu0 0.0
      %1773 = vmatprep.subr.mxu0 0.0
      %1774 = vmatpush1.msra.mxu0 0.0
      %1775 = vmatprep.subr.mxu0 0.0
      %1776 = vmatpush1.msra.mxu0 0.0
      %1777 = vmatprep.subr.mxu0 0.0
      %1778 = vmatpush1.msra.mxu0 0.0
      %1779 = vmatprep.subr.mxu0 0.0
      %1780 = vmatpush1.msra.mxu0 0.0
      %1781 = vmatprep.subr.mxu0 0.0
      %1782 = vmatpush1.msra.mxu0 0.0
      %1783 = vmatprep.subr.mxu0 0.0
      %1784 = vmatpush1.msra.mxu0 0.0
      %1785 = vmatprep.subr.mxu0 0.0
      %1786 = vmatpush1.msra.mxu0 0.0
      %1787 = vmatprep.subr.mxu0 0.0
      %1788 = vmatpush1.msra.mxu0 0.0
      %1789 = vmatprep.subr.mxu0 0.0
      %1790 = vmatpush1.msra.mxu0 0.0
      %1791 = vmatprep.subr.mxu0 %v1755
      %1792 = vmatpush1.msra.mxu0 %v1754
      %1793 = vmatprep.subr.mxu0 0.0
      %1794 = vmatpush2.msra.mxu0 0.0
      %1795 = vmatprep.subr.mxu0 0.0
      %1796 = vmatpush2.msra.mxu0 0.0
      %1797 = vmatprep.subr.mxu0 0.0
      %1798 = vmatpush2.msra.mxu0 0.0
      %1799 = vmatprep.subr.mxu0 0.0
      %1800 = vmatpush2.msra.mxu0 0.0
      %1801 = vmatprep.subr.mxu0 0.0
      %1802 = vmatpush2.msra.mxu0 0.0
      %1803 = vmatprep.subr.mxu0 0.0
      %1804 = vmatpush2.msra.mxu0 0.0
      %1805 = vmatprep.subr.mxu0 0.0
      %1806 = vmatpush2.msra.mxu0 0.0
      %1807 = vmatprep.subr.mxu0 0.0
      %1808 = vmatpush2.msra.mxu0 0.0
      %1809 = vmatprep.subr.mxu0 0.0
      %1810 = vmatpush2.msra.mxu0 0.0
      %1811 = vmatprep.subr.mxu0 0.0
      %1812 = vmatpush2.msra.mxu0 0.0
      %1813 = vmatprep.subr.mxu0 0.0
      %1814 = vmatpush2.msra.mxu0 0.0
      %1815 = vmatprep.subr.mxu0 0.0
      %1816 = vmatpush2.msra.mxu0 0.0
      %1817 = vmatprep.subr.mxu0 0.0
      %1818 = vmatpush2.msra.mxu0 0.0
      %1819 = vmatprep.subr.mxu0 0.0
      %1820 = vmatpush2.msra.mxu0 0.0
      %1821 = vmatprep.subr.mxu0 0.0
      %1822 = vmatpush2.msra.mxu0 0.0
      %1823 = vmatprep.subr.mxu0 0.0
      %1824 = vmatpush2.msra.mxu0 0.0
      %1825 = vmatprep.mubr.f32.mxu0 0.0
      %1826 = vmatmul.mubr.f32.gmra.mxu0 %v1759
      %v1827 = vpop.f32.mrf.mxu0
      %v1828 = vadd.f32 0.0, %v1827
      %v1829 = vpop.f32.mrf.mxu0
      %v1830 = vadd.f32 0.0, %v1829
      %1831 = vdwg.mxu0
      %v1832 = vadd.f32 %v1731, %v1828
      %v1833 = vadd.f32 %v1733, %v1830
      %1834 = vrot.lane.b32.xlu0 %v667, 2
      %v1835 = vpop.permute.xlu0 %1834
      %1836 = vrot.lane.b32.xlu0 %v669, 2
      %v1837 = vpop.permute.xlu0 %1836
      %vm1838 = vcmp.lt.s32.totalorder %v680, 2
      %v1839 = vsel %vm1838, %v1835, %v1837
      %v1840 = vsel %vm1838, %v1837, %v1835
      %v1841 = vsel %vm1539, 1, 0
      %v1842 = vlaneseq
      %v1843 = vshrl.u32 %v1842, 7
      %v1844 = vsub.s32 0, %v1843
      %v1845 = vrot.slane %v1841, %v1844
      %v1846 = vlaneseq
      %v1847 = vshrl.u32 %v1846, 7
      %v1848 = vsub.s32 1, %v1847
      %v1849 = vrot.slane %v1841, %v1848
      %vm1850 = vcmp.eq.s32.totalorder %v1845, 1
      %vm1851 = vcmp.eq.s32.totalorder %v1849, 1
      %v1852 = vsel %vm1850, %v1840, 0.0
      %v1853 = vsel %vm1851, %v1839, 0.0
      %s1854 = scalar_lea.vmem %s6, 24
      %v1855 = vld [vmem:[%s1854] sm:$0xff]
      %v1857 = vsel %vm721, %v1855, 0
      %1859 = vmatprep.subr.mxu0 0.0
      %1860 = vmatpush1.msra.mxu0 0.0
      %1861 = vmatprep.subr.mxu0 0.0
      %1862 = vmatpush1.msra.mxu0 0.0
      %1863 = vmatprep.subr.mxu0 0.0
      %1864 = vmatpush1.msra.mxu0 0.0
      %1865 = vmatprep.subr.mxu0 0.0
      %1866 = vmatpush1.msra.mxu0 0.0
      %1867 = vmatprep.subr.mxu0 0.0
      %1868 = vmatpush1.msra.mxu0 0.0
      %1869 = vmatprep.subr.mxu0 0.0
      %1870 = vmatpush1.msra.mxu0 0.0
      %1871 = vmatprep.subr.mxu0 0.0
      %1872 = vmatpush1.msra.mxu0 0.0
      %1873 = vmatprep.subr.mxu0 0.0
      %1874 = vmatpush1.msra.mxu0 0.0
      %1875 = vmatprep.subr.mxu0 0.0
      %1876 = vmatpush1.msra.mxu0 0.0
      %1877 = vmatprep.subr.mxu0 0.0
      %1878 = vmatpush1.msra.mxu0 0.0
      %1879 = vmatprep.subr.mxu0 0.0
      %1880 = vmatpush1.msra.mxu0 0.0
      %1881 = vmatprep.subr.mxu0 0.0
      %1882 = vmatpush1.msra.mxu0 0.0
      %1883 = vmatprep.subr.mxu0 0.0
      %1884 = vmatpush1.msra.mxu0 0.0
      %1885 = vmatprep.subr.mxu0 0.0
      %1886 = vmatpush1.msra.mxu0 0.0
      %1887 = vmatprep.subr.mxu0 0.0
      %1888 = vmatpush1.msra.mxu0 0.0
      %1889 = vmatprep.subr.mxu0 %v1853
      %1890 = vmatpush1.msra.mxu0 %v1852
      %1891 = vmatprep.subr.mxu0 0.0
      %1892 = vmatpush2.msra.mxu0 0.0
      %1893 = vmatprep.subr.mxu0 0.0
      %1894 = vmatpush2.msra.mxu0 0.0
      %1895 = vmatprep.subr.mxu0 0.0
      %1896 = vmatpush2.msra.mxu0 0.0
      %1897 = vmatprep.subr.mxu0 0.0
      %1898 = vmatpush2.msra.mxu0 0.0
      %1899 = vmatprep.subr.mxu0 0.0
      %1900 = vmatpush2.msra.mxu0 0.0
      %1901 = vmatprep.subr.mxu0 0.0
      %1902 = vmatpush2.msra.mxu0 0.0
      %1903 = vmatprep.subr.mxu0 0.0
      %1904 = vmatpush2.msra.mxu0 0.0
      %1905 = vmatprep.subr.mxu0 0.0
      %1906 = vmatpush2.msra.mxu0 0.0
      %1907 = vmatprep.subr.mxu0 0.0
      %1908 = vmatpush2.msra.mxu0 0.0
      %1909 = vmatprep.subr.mxu0 0.0
      %1910 = vmatpush2.msra.mxu0 0.0
      %1911 = vmatprep.subr.mxu0 0.0
      %1912 = vmatpush2.msra.mxu0 0.0
      %1913 = vmatprep.subr.mxu0 0.0
      %1914 = vmatpush2.msra.mxu0 0.0
      %1915 = vmatprep.subr.mxu0 0.0
      %1916 = vmatpush2.msra.mxu0 0.0
      %1917 = vmatprep.subr.mxu0 0.0
      %1918 = vmatpush2.msra.mxu0 0.0
      %1919 = vmatprep.subr.mxu0 0.0
      %1920 = vmatpush2.msra.mxu0 0.0
      %1921 = vmatprep.subr.mxu0 0.0
      %1922 = vmatpush2.msra.mxu0 0.0
      %1923 = vmatprep.mubr.f32.mxu0 0.0
      %1924 = vmatmul.mubr.f32.gmra.mxu0 %v1857
      %v1925 = vpop.f32.mrf.mxu0
      %v1926 = vadd.f32 0.0, %v1925
      %v1927 = vpop.f32.mrf.mxu0
      %v1928 = vadd.f32 0.0, %v1927
      %1929 = vdwg.mxu0
      %v1930 = vadd.f32 %v1832, %v1926
      %v1931 = vadd.f32 %v1833, %v1928
      %s1932 = scalar_lea.vmem %s6, 32
      %v1933 = vld [vmem:[%s1932] sm:$0xff]
      %v1935 = vsel %vm721, %v1933, 0
      %1937 = vmatprep.subr.mxu0 0.0
      %1938 = vmatpush1.msra.mxu0 0.0
      %1939 = vmatprep.subr.mxu0 0.0
      %1940 = vmatpush1.msra.mxu0 0.0
      %1941 = vmatprep.subr.mxu0 0.0
      %1942 = vmatpush1.msra.mxu0 0.0
      %1943 = vmatprep.subr.mxu0 0.0
      %1944 = vmatpush1.msra.mxu0 0.0
      %1945 = vmatprep.subr.mxu0 0.0
      %1946 = vmatpush1.msra.mxu0 0.0
      %1947 = vmatprep.subr.mxu0 0.0
      %1948 = vmatpush1.msra.mxu0 0.0
      %1949 = vmatprep.subr.mxu0 0.0
      %1950 = vmatpush1.msra.mxu0 0.0
      %1951 = vmatprep.subr.mxu0 0.0
      %1952 = vmatpush1.msra.mxu0 0.0
      %1953 = vmatprep.subr.mxu0 0.0
      %1954 = vmatpush1.msra.mxu0 0.0
      %1955 = vmatprep.subr.mxu0 0.0
      %1956 = vmatpush1.msra.mxu0 0.0
      %1957 = vmatprep.subr.mxu0 0.0
      %1958 = vmatpush1.msra.mxu0 0.0
      %1959 = vmatprep.subr.mxu0 0.0
      %1960 = vmatpush1.msra.mxu0 0.0
      %1961 = vmatprep.subr.mxu0 0.0
      %1962 = vmatpush1.msra.mxu0 0.0
      %1963 = vmatprep.subr.mxu0 0.0
      %1964 = vmatpush1.msra.mxu0 0.0
      %1965 = vmatprep.subr.mxu0 0.0
      %1966 = vmatpush1.msra.mxu0 0.0
      %1967 = vmatprep.subr.mxu0 %v669
      %1968 = vmatpush1.msra.mxu0 %v667
      %1969 = vmatprep.subr.mxu0 0.0
      %1970 = vmatpush2.msra.mxu0 0.0
      %1971 = vmatprep.subr.mxu0 0.0
      %1972 = vmatpush2.msra.mxu0 0.0
      %1973 = vmatprep.subr.mxu0 0.0
      %1974 = vmatpush2.msra.mxu0 0.0
      %1975 = vmatprep.subr.mxu0 0.0
      %1976 = vmatpush2.msra.mxu0 0.0
      %1977 = vmatprep.subr.mxu0 0.0
      %1978 = vmatpush2.msra.mxu0 0.0
      %1979 = vmatprep.subr.mxu0 0.0
      %1980 = vmatpush2.msra.mxu0 0.0
      %1981 = vmatprep.subr.mxu0 0.0
      %1982 = vmatpush2.msra.mxu0 0.0
      %1983 = vmatprep.subr.mxu0 0.0
      %1984 = vmatpush2.msra.mxu0 0.0
      %1985 = vmatprep.subr.mxu0 0.0
      %1986 = vmatpush2.msra.mxu0 0.0
      %1987 = vmatprep.subr.mxu0 0.0
      %1988 = vmatpush2.msra.mxu0 0.0
      %1989 = vmatprep.subr.mxu0 0.0
      %1990 = vmatpush2.msra.mxu0 0.0
      %1991 = vmatprep.subr.mxu0 0.0
      %1992 = vmatpush2.msra.mxu0 0.0
      %1993 = vmatprep.subr.mxu0 0.0
      %1994 = vmatpush2.msra.mxu0 0.0
      %1995 = vmatprep.subr.mxu0 0.0
      %1996 = vmatpush2.msra.mxu0 0.0
      %1997 = vmatprep.subr.mxu0 0.0
      %1998 = vmatpush2.msra.mxu0 0.0
      %1999 = vmatprep.subr.mxu0 0.0
      %2000 = vmatpush2.msra.mxu0 0.0
      %2001 = vmatprep.mubr.f32.mxu0 0.0
      %2002 = vmatmul.mubr.f32.gmra.mxu0 %v1935
      %v2003 = vpop.f32.mrf.mxu0
      %v2004 = vadd.f32 0.0, %v2003
      %v2005 = vpop.f32.mrf.mxu0
      %v2006 = vadd.f32 0.0, %v2005
      %2007 = vdwg.mxu0
      %v2008 = vadd.f32 %v1930, %v2004
      %v2009 = vadd.f32 %v1931, %v2006
      %2010 = vrot.lane.b32.xlu0 %v667, 126
      %v2011 = vpop.permute.xlu0 %2010
      %2012 = vrot.lane.b32.xlu0 %v669, 126
      %v2013 = vpop.permute.xlu0 %2012
      %vm2014 = vcmp.lt.s32.totalorder %v680, 126
      %v2015 = vsel %vm2014, %v2011, %v2013
      %v2016 = vsel %vm2014, %v2013, %v2011
      %v2017 = vsel %vm1540, 1, 0
      %v2018 = vlaneseq
      %v2019 = vshrl.u32 %v2018, 7
      %v2020 = vsub.s32 0, %v2019
      %v2021 = vrot.slane %v2017, %v2020
      %v2022 = vlaneseq
      %v2023 = vshrl.u32 %v2022, 7
      %v2024 = vsub.s32 1, %v2023
      %v2025 = vrot.slane %v2017, %v2024
      %vm2026 = vcmp.eq.s32.totalorder %v2021, 1
      %vm2027 = vcmp.eq.s32.totalorder %v2025, 1
      %v2028 = vsel %vm2026, %v2015, 0.0
      %v2029 = vsel %vm2027, %v2016, 0.0
      %s2030 = scalar_lea.vmem %s6, 40
      %v2031 = vld [vmem:[%s2030] sm:$0xff]
      %v2033 = vsel %vm721, %v2031, 0
      %2035 = vmatprep.subr.mxu0 0.0
      %2036 = vmatpush1.msra.mxu0 0.0
      %2037 = vmatprep.subr.mxu0 0.0
      %2038 = vmatpush1.msra.mxu0 0.0
      %2039 = vmatprep.subr.mxu0 0.0
      %2040 = vmatpush1.msra.mxu0 0.0
      %2041 = vmatprep.subr.mxu0 0.0
      %2042 = vmatpush1.msra.mxu0 0.0
      %2043 = vmatprep.subr.mxu0 0.0
      %2044 = vmatpush1.msra.mxu0 0.0
      %2045 = vmatprep.subr.mxu0 0.0
      %2046 = vmatpush1.msra.mxu0 0.0
      %2047 = vmatprep.subr.mxu0 0.0
      %2048 = vmatpush1.msra.mxu0 0.0
      %2049 = vmatprep.subr.mxu0 0.0
      %2050 = vmatpush1.msra.mxu0 0.0
      %2051 = vmatprep.subr.mxu0 0.0
      %2052 = vmatpush1.msra.mxu0 0.0
      %2053 = vmatprep.subr.mxu0 0.0
      %2054 = vmatpush1.msra.mxu0 0.0
      %2055 = vmatprep.subr.mxu0 0.0
      %2056 = vmatpush1.msra.mxu0 0.0
      %2057 = vmatprep.subr.mxu0 0.0
      %2058 = vmatpush1.msra.mxu0 0.0
      %2059 = vmatprep.subr.mxu0 0.0
      %2060 = vmatpush1.msra.mxu0 0.0
      %2061 = vmatprep.subr.mxu0 0.0
      %2062 = vmatpush1.msra.mxu0 0.0
      %2063 = vmatprep.subr.mxu0 0.0
      %2064 = vmatpush1.msra.mxu0 0.0
      %2065 = vmatprep.subr.mxu0 %v2029
      %2066 = vmatpush1.msra.mxu0 %v2028
      %2067 = vmatprep.subr.mxu0 0.0
      %2068 = vmatpush2.msra.mxu0 0.0
      %2069 = vmatprep.subr.mxu0 0.0
      %2070 = vmatpush2.msra.mxu0 0.0
      %2071 = vmatprep.subr.mxu0 0.0
      %2072 = vmatpush2.msra.mxu0 0.0
      %2073 = vmatprep.subr.mxu0 0.0
      %2074 = vmatpush2.msra.mxu0 0.0
      %2075 = vmatprep.subr.mxu0 0.0
      %2076 = vmatpush2.msra.mxu0 0.0
      %2077 = vmatprep.subr.mxu0 0.0
      %2078 = vmatpush2.msra.mxu0 0.0
      %2079 = vmatprep.subr.mxu0 0.0
      %2080 = vmatpush2.msra.mxu0 0.0
      %2081 = vmatprep.subr.mxu0 0.0
      %2082 = vmatpush2.msra.mxu0 0.0
      %2083 = vmatprep.subr.mxu0 0.0
      %2084 = vmatpush2.msra.mxu0 0.0
      %2085 = vmatprep.subr.mxu0 0.0
      %2086 = vmatpush2.msra.mxu0 0.0
      %2087 = vmatprep.subr.mxu0 0.0
      %2088 = vmatpush2.msra.mxu0 0.0
      %2089 = vmatprep.subr.mxu0 0.0
      %2090 = vmatpush2.msra.mxu0 0.0
      %2091 = vmatprep.subr.mxu0 0.0
      %2092 = vmatpush2.msra.mxu0 0.0
      %2093 = vmatprep.subr.mxu0 0.0
      %2094 = vmatpush2.msra.mxu0 0.0
      %2095 = vmatprep.subr.mxu0 0.0
      %2096 = vmatpush2.msra.mxu0 0.0
      %2097 = vmatprep.subr.mxu0 0.0
      %2098 = vmatpush2.msra.mxu0 0.0
      %2099 = vmatprep.mubr.f32.mxu0 0.0
      %2100 = vmatmul.mubr.f32.gmra.mxu0 %v2033
      %v2101 = vpop.f32.mrf.mxu0
      %v2102 = vadd.f32 0.0, %v2101
      %v2103 = vpop.f32.mrf.mxu0
      %v2104 = vadd.f32 0.0, %v2103
      %2105 = vdwg.mxu0
      %v2106 = vadd.f32 %v2008, %v2102
      %v2107 = vadd.f32 %v2009, %v2104
      %2108 = vrot.lane.b32.xlu0 %v667, 98
      %v2109 = vpop.permute.xlu0 %2108
      %2110 = vrot.lane.b32.xlu0 %v669, 98
      %v2111 = vpop.permute.xlu0 %2110
      %vm2112 = vcmp.lt.s32.totalorder %v680, 98
      %v2113 = vsel %vm2112, %v2109, %v2111
      %v2114 = vsel %vm2112, %v2111, %v2109
      %vm2115 = vmand %vm1542, %vm1539
      %v2116 = vsel %vm2115, 1, 0
      %v2117 = vlaneseq
      %v2118 = vshrl.u32 %v2117, 7
      %v2119 = vsub.s32 0, %v2118
      %v2120 = vrot.slane %v2116, %v2119
      %v2121 = vlaneseq
      %v2122 = vshrl.u32 %v2121, 7
      %v2123 = vsub.s32 1, %v2122
      %v2124 = vrot.slane %v2116, %v2123
      %vm2125 = vcmp.eq.s32.totalorder %v2120, 1
      %vm2126 = vcmp.eq.s32.totalorder %v2124, 1
      %v2127 = vsel %vm2125, %v2113, 0.0
      %v2128 = vsel %vm2126, %v2114, 0.0
      %s2129 = scalar_lea.vmem %s6, 48
      %v2130 = vld [vmem:[%s2129] sm:$0xff]
      %v2132 = vsel %vm721, %v2130, 0
      %2134 = vmatprep.subr.mxu0 0.0
      %2135 = vmatpush1.msra.mxu0 0.0
      %2136 = vmatprep.subr.mxu0 0.0
      %2137 = vmatpush1.msra.mxu0 0.0
      %2138 = vmatprep.subr.mxu0 0.0
      %2139 = vmatpush1.msra.mxu0 0.0
      %2140 = vmatprep.subr.mxu0 0.0
      %2141 = vmatpush1.msra.mxu0 0.0
      %2142 = vmatprep.subr.mxu0 0.0
      %2143 = vmatpush1.msra.mxu0 0.0
      %2144 = vmatprep.subr.mxu0 0.0
      %2145 = vmatpush1.msra.mxu0 0.0
      %2146 = vmatprep.subr.mxu0 0.0
      %2147 = vmatpush1.msra.mxu0 0.0
      %2148 = vmatprep.subr.mxu0 0.0
      %2149 = vmatpush1.msra.mxu0 0.0
      %2150 = vmatprep.subr.mxu0 0.0
      %2151 = vmatpush1.msra.mxu0 0.0
      %2152 = vmatprep.subr.mxu0 0.0
      %2153 = vmatpush1.msra.mxu0 0.0
      %2154 = vmatprep.subr.mxu0 0.0
      %2155 = vmatpush1.msra.mxu0 0.0
      %2156 = vmatprep.subr.mxu0 0.0
      %2157 = vmatpush1.msra.mxu0 0.0
      %2158 = vmatprep.subr.mxu0 0.0
      %2159 = vmatpush1.msra.mxu0 0.0
      %2160 = vmatprep.subr.mxu0 0.0
      %2161 = vmatpush1.msra.mxu0 0.0
      %2162 = vmatprep.subr.mxu0 0.0
      %2163 = vmatpush1.msra.mxu0 0.0
      %2164 = vmatprep.subr.mxu0 %v2128
      %2165 = vmatpush1.msra.mxu0 %v2127
      %2166 = vmatprep.subr.mxu0 0.0
      %2167 = vmatpush2.msra.mxu0 0.0
      %2168 = vmatprep.subr.mxu0 0.0
      %2169 = vmatpush2.msra.mxu0 0.0
      %2170 = vmatprep.subr.mxu0 0.0
      %2171 = vmatpush2.msra.mxu0 0.0
      %2172 = vmatprep.subr.mxu0 0.0
      %2173 = vmatpush2.msra.mxu0 0.0
      %2174 = vmatprep.subr.mxu0 0.0
      %2175 = vmatpush2.msra.mxu0 0.0
      %2176 = vmatprep.subr.mxu0 0.0
      %2177 = vmatpush2.msra.mxu0 0.0
      %2178 = vmatprep.subr.mxu0 0.0
      %2179 = vmatpush2.msra.mxu0 0.0
      %2180 = vmatprep.subr.mxu0 0.0
      %2181 = vmatpush2.msra.mxu0 0.0
      %2182 = vmatprep.subr.mxu0 0.0
      %2183 = vmatpush2.msra.mxu0 0.0
      %2184 = vmatprep.subr.mxu0 0.0
      %2185 = vmatpush2.msra.mxu0 0.0
      %2186 = vmatprep.subr.mxu0 0.0
      %2187 = vmatpush2.msra.mxu0 0.0
      %2188 = vmatprep.subr.mxu0 0.0
      %2189 = vmatpush2.msra.mxu0 0.0
      %2190 = vmatprep.subr.mxu0 0.0
      %2191 = vmatpush2.msra.mxu0 0.0
      %2192 = vmatprep.subr.mxu0 0.0
      %2193 = vmatpush2.msra.mxu0 0.0
      %2194 = vmatprep.subr.mxu0 0.0
      %2195 = vmatpush2.msra.mxu0 0.0
      %2196 = vmatprep.subr.mxu0 0.0
      %2197 = vmatpush2.msra.mxu0 0.0
      %2198 = vmatprep.mubr.f32.mxu0 0.0
      %2199 = vmatmul.mubr.f32.gmra.mxu0 %v2132
      %v2200 = vpop.f32.mrf.mxu0
      %v2201 = vadd.f32 0.0, %v2200
      %v2202 = vpop.f32.mrf.mxu0
      %v2203 = vadd.f32 0.0, %v2202
      %2204 = vdwg.mxu0
      %v2205 = vadd.f32 %v2106, %v2201
      %v2206 = vadd.f32 %v2107, %v2203
      %2207 = vrot.lane.b32.xlu0 %v667, 96
      %v2208 = vpop.permute.xlu0 %2207
      %2209 = vrot.lane.b32.xlu0 %v669, 96
      %v2210 = vpop.permute.xlu0 %2209
      %vm2211 = vcmp.lt.s32.totalorder %v680, 96
      %v2212 = vsel %vm2211, %v2208, %v2210
      %v2213 = vsel %vm2211, %v2210, %v2208
      %v2214 = vsel %vm1542, 1, 0
      %v2215 = vlaneseq
      %v2216 = vshrl.u32 %v2215, 7
      %v2217 = vsub.s32 0, %v2216
      %v2218 = vrot.slane %v2214, %v2217
      %v2219 = vlaneseq
      %v2220 = vshrl.u32 %v2219, 7
      %v2221 = vsub.s32 1, %v2220
      %v2222 = vrot.slane %v2214, %v2221
      %vm2223 = vcmp.eq.s32.totalorder %v2218, 1
      %vm2224 = vcmp.eq.s32.totalorder %v2222, 1
      %v2225 = vsel %vm2223, %v2212, 0.0
      %v2226 = vsel %vm2224, %v2213, 0.0
      %s2227 = scalar_lea.vmem %s6, 56
      %v2228 = vld [vmem:[%s2227] sm:$0xff]
      %v2230 = vsel %vm721, %v2228, 0
      %2232 = vmatprep.subr.mxu0 0.0
      %2233 = vmatpush1.msra.mxu0 0.0
      %2234 = vmatprep.subr.mxu0 0.0
      %2235 = vmatpush1.msra.mxu0 0.0
      %2236 = vmatprep.subr.mxu0 0.0
      %2237 = vmatpush1.msra.mxu0 0.0
      %2238 = vmatprep.subr.mxu0 0.0
      %2239 = vmatpush1.msra.mxu0 0.0
      %2240 = vmatprep.subr.mxu0 0.0
      %2241 = vmatpush1.msra.mxu0 0.0
      %2242 = vmatprep.subr.mxu0 0.0
      %2243 = vmatpush1.msra.mxu0 0.0
      %2244 = vmatprep.subr.mxu0 0.0
      %2245 = vmatpush1.msra.mxu0 0.0
      %2246 = vmatprep.subr.mxu0 0.0
      %2247 = vmatpush1.msra.mxu0 0.0
      %2248 = vmatprep.subr.mxu0 0.0
      %2249 = vmatpush1.msra.mxu0 0.0
      %2250 = vmatprep.subr.mxu0 0.0
      %2251 = vmatpush1.msra.mxu0 0.0
      %2252 = vmatprep.subr.mxu0 0.0
      %2253 = vmatpush1.msra.mxu0 0.0
      %2254 = vmatprep.subr.mxu0 0.0
      %2255 = vmatpush1.msra.mxu0 0.0
      %2256 = vmatprep.subr.mxu0 0.0
      %2257 = vmatpush1.msra.mxu0 0.0
      %2258 = vmatprep.subr.mxu0 0.0
      %2259 = vmatpush1.msra.mxu0 0.0
      %2260 = vmatprep.subr.mxu0 0.0
      %2261 = vmatpush1.msra.mxu0 0.0
      %2262 = vmatprep.subr.mxu0 %v2226
      %2263 = vmatpush1.msra.mxu0 %v2225
      %2264 = vmatprep.subr.mxu0 0.0
      %2265 = vmatpush2.msra.mxu0 0.0
      %2266 = vmatprep.subr.mxu0 0.0
      %2267 = vmatpush2.msra.mxu0 0.0
      %2268 = vmatprep.subr.mxu0 0.0
      %2269 = vmatpush2.msra.mxu0 0.0
      %2270 = vmatprep.subr.mxu0 0.0
      %2271 = vmatpush2.msra.mxu0 0.0
      %2272 = vmatprep.subr.mxu0 0.0
      %2273 = vmatpush2.msra.mxu0 0.0
      %2274 = vmatprep.subr.mxu0 0.0
      %2275 = vmatpush2.msra.mxu0 0.0
      %2276 = vmatprep.subr.mxu0 0.0
      %2277 = vmatpush2.msra.mxu0 0.0
      %2278 = vmatprep.subr.mxu0 0.0
      %2279 = vmatpush2.msra.mxu0 0.0
      %2280 = vmatprep.subr.mxu0 0.0
      %2281 = vmatpush2.msra.mxu0 0.0
      %2282 = vmatprep.subr.mxu0 0.0
      %2283 = vmatpush2.msra.mxu0 0.0
      %2284 = vmatprep.subr.mxu0 0.0
      %2285 = vmatpush2.msra.mxu0 0.0
      %2286 = vmatprep.subr.mxu0 0.0
      %2287 = vmatpush2.msra.mxu0 0.0
      %2288 = vmatprep.subr.mxu0 0.0
      %2289 = vmatpush2.msra.mxu0 0.0
      %2290 = vmatprep.subr.mxu0 0.0
      %2291 = vmatpush2.msra.mxu0 0.0
      %2292 = vmatprep.subr.mxu0 0.0
      %2293 = vmatpush2.msra.mxu0 0.0
      %2294 = vmatprep.subr.mxu0 0.0
      %2295 = vmatpush2.msra.mxu0 0.0
      %2296 = vmatprep.mubr.f32.mxu0 0.0
      %2297 = vmatmul.mubr.f32.gmra.mxu0 %v2230
      %v2298 = vpop.f32.mrf.mxu0
      %v2299 = vadd.f32 0.0, %v2298
      %v2300 = vpop.f32.mrf.mxu0
      %v2301 = vadd.f32 0.0, %v2300
      %2302 = vdwg.mxu0
      %v2303 = vadd.f32 %v2205, %v2299
      %v2304 = vadd.f32 %v2206, %v2301
      %2305 = vrot.lane.b32.xlu0 %v667, 94
      %v2306 = vpop.permute.xlu0 %2305
      %2307 = vrot.lane.b32.xlu0 %v669, 94
      %v2308 = vpop.permute.xlu0 %2307
      %vm2309 = vcmp.lt.s32.totalorder %v680, 94
      %v2310 = vsel %vm2309, %v2306, %v2308
      %v2311 = vsel %vm2309, %v2308, %v2306
      %vm2312 = vmand %vm1542, %vm1540
      %v2313 = vsel %vm2312, 1, 0
      %v2314 = vlaneseq
      %v2315 = vshrl.u32 %v2314, 7
      %v2316 = vsub.s32 0, %v2315
      %v2317 = vrot.slane %v2313, %v2316
      %v2318 = vlaneseq
      %v2319 = vshrl.u32 %v2318, 7
      %v2320 = vsub.s32 1, %v2319
      %v2321 = vrot.slane %v2313, %v2320
      %vm2322 = vcmp.eq.s32.totalorder %v2317, 1
      %vm2323 = vcmp.eq.s32.totalorder %v2321, 1
      %v2324 = vsel %vm2322, %v2310, 0.0
      %v2325 = vsel %vm2323, %v2311, 0.0
      %s2326 = scalar_lea.vmem %s6, 64
      %v2327 = vld [vmem:[%s2326] sm:$0xff]
      %v2329 = vsel %vm721, %v2327, 0
      %2331 = vmatprep.subr.mxu0 0.0
      %2332 = vmatpush1.msra.mxu0 0.0
      %2333 = vmatprep.subr.mxu0 0.0
      %2334 = vmatpush1.msra.mxu0 0.0
      %2335 = vmatprep.subr.mxu0 0.0
      %2336 = vmatpush1.msra.mxu0 0.0
      %2337 = vmatprep.subr.mxu0 0.0
      %2338 = vmatpush1.msra.mxu0 0.0
      %2339 = vmatprep.subr.mxu0 0.0
      %2340 = vmatpush1.msra.mxu0 0.0
      %2341 = vmatprep.subr.mxu0 0.0
      %2342 = vmatpush1.msra.mxu0 0.0
      %2343 = vmatprep.subr.mxu0 0.0
      %2344 = vmatpush1.msra.mxu0 0.0
      %2345 = vmatprep.subr.mxu0 0.0
      %2346 = vmatpush1.msra.mxu0 0.0
      %2347 = vmatprep.subr.mxu0 0.0
      %2348 = vmatpush1.msra.mxu0 0.0
      %2349 = vmatprep.subr.mxu0 0.0
      %2350 = vmatpush1.msra.mxu0 0.0
      %2351 = vmatprep.subr.mxu0 0.0
      %2352 = vmatpush1.msra.mxu0 0.0
      %2353 = vmatprep.subr.mxu0 0.0
      %2354 = vmatpush1.msra.mxu0 0.0
      %2355 = vmatprep.subr.mxu0 0.0
      %2356 = vmatpush1.msra.mxu0 0.0
      %2357 = vmatprep.subr.mxu0 0.0
      %2358 = vmatpush1.msra.mxu0 0.0
      %2359 = vmatprep.subr.mxu0 0.0
      %2360 = vmatpush1.msra.mxu0 0.0
      %2361 = vmatprep.subr.mxu0 %v2325
      %2362 = vmatpush1.msra.mxu0 %v2324
      %2363 = vmatprep.subr.mxu0 0.0
      %2364 = vmatpush2.msra.mxu0 0.0
      %2365 = vmatprep.subr.mxu0 0.0
      %2366 = vmatpush2.msra.mxu0 0.0
      %2367 = vmatprep.subr.mxu0 0.0
      %2368 = vmatpush2.msra.mxu0 0.0
      %2369 = vmatprep.subr.mxu0 0.0
      %2370 = vmatpush2.msra.mxu0 0.0
      %2371 = vmatprep.subr.mxu0 0.0
      %2372 = vmatpush2.msra.mxu0 0.0
      %2373 = vmatprep.subr.mxu0 0.0
      %2374 = vmatpush2.msra.mxu0 0.0
      %2375 = vmatprep.subr.mxu0 0.0
      %2376 = vmatpush2.msra.mxu0 0.0
      %2377 = vmatprep.subr.mxu0 0.0
      %2378 = vmatpush2.msra.mxu0 0.0
      %2379 = vmatprep.subr.mxu0 0.0
      %2380 = vmatpush2.msra.mxu0 0.0
      %2381 = vmatprep.subr.mxu0 0.0
      %2382 = vmatpush2.msra.mxu0 0.0
      %2383 = vmatprep.subr.mxu0 0.0
      %2384 = vmatpush2.msra.mxu0 0.0
      %2385 = vmatprep.subr.mxu0 0.0
      %2386 = vmatpush2.msra.mxu0 0.0
      %2387 = vmatprep.subr.mxu0 0.0
      %2388 = vmatpush2.msra.mxu0 0.0
      %2389 = vmatprep.subr.mxu0 0.0
      %2390 = vmatpush2.msra.mxu0 0.0
      %2391 = vmatprep.subr.mxu0 0.0
      %2392 = vmatpush2.msra.mxu0 0.0
      %2393 = vmatprep.subr.mxu0 0.0
      %2394 = vmatpush2.msra.mxu0 0.0
      %2395 = vmatprep.mubr.f32.mxu0 0.0
      %2396 = vmatmul.mubr.f32.gmra.mxu0 %v2329
      %v2397 = vpop.f32.mrf.mxu0
      %v2398 = vadd.f32 0.0, %v2397
      %v2399 = vpop.f32.mrf.mxu0
      %v2400 = vadd.f32 0.0, %v2399
      %2401 = vdwg.mxu0
      %v2402 = vadd.f32 %v2303, %v2398
      %v2403 = vadd.f32 %v2304, %v2400
      %v2404 = vld [vmem:[%s7] sm:$0xff]
      %v2405 = vld [vmem:[%s7 + $0x8] sm:$0xff]
      %2407 = vset.pattern.permute.xlu0 0
      %2408 = vperm.xlu0 %2407, %v2404
      %v2409 = vpop.permute.xlu0 %2408
      %2412 = vset.pattern.permute.xlu0 0
      %2413 = vperm.xlu0 %2412, %v2405
      %v2414 = vpop.permute.xlu0 %2413
      %v2416 = vmul.f32 %v1537, %v2409
      %v2417 = vmul.f32 %v1538, %v2409
      %v2418 = vmul.f32 %v2402, %v2414
      %v2419 = vmul.f32 %v2403, %v2414
      %v2420 = vld [vmem:[%s8] sm:$0xff]
      %v2421 = vld [vmem:[%s8 + $0x8] sm:$0xff]
      %2423 = vset.pattern.permute.xlu0 0
      %2424 = vperm.xlu0 %2423, %v2420
      %v2425 = vpop.permute.xlu0 %2424
      %2428 = vset.pattern.permute.xlu0 0
      %2429 = vperm.xlu0 %2428, %v2421
      %v2430 = vpop.permute.xlu0 %2429
      %v2432 = vadd.f32 %v2416, %v2425
      %v2433 = vadd.f32 %v2417, %v2425
      %v2434 = vadd.f32 %v2418, %v2430
      %v2435 = vadd.f32 %v2419, %v2430
      %v2436 = vld [vmem:[%s565] sm:$0xff]
      %v2437 = vld [vmem:[%s565 + $0x8] sm:$0xff]
      %v2438 = vld [vmem:[%s565 + $0x10] sm:$0xff]
      %v2439 = vld [vmem:[%s565 + $0x18] sm:$0xff]
      %v2440 = vunpack.c.l.bf16 %v2436
      %v2441 = vunpack.c.h.bf16 %v2436
      %v2442 = vunpack.c.l.bf16 %v2437
      %v2443 = vunpack.c.h.bf16 %v2437
      %v2444 = vunpack.c.l.bf16 %v2438
      %v2445 = vunpack.c.h.bf16 %v2438
      %v2446 = vunpack.c.l.bf16 %v2439
      %v2447 = vunpack.c.h.bf16 %v2439
      %v2448 = vld [vmem:[%s9] sm:$0xff]
      %v2449 = vld [vmem:[%s9 + $0x8] sm:$0xff]
      %v2451 = vsel %vm587, %v2448, 0
      %v2454 = vsel %vm587, %v2449, 0
      %2456 = vmatprep.subr.mxu0 0.0
      %2457 = vmatpush1.msra.mxu0 0.0
      %2458 = vmatprep.subr.mxu0 0.0
      %2459 = vmatpush1.msra.mxu0 0.0
      %2460 = vmatprep.subr.mxu0 0.0
      %2461 = vmatpush1.msra.mxu0 0.0
      %2462 = vmatprep.subr.mxu0 0.0
      %2463 = vmatpush1.msra.mxu0 0.0
      %2464 = vmatprep.subr.mxu0 0.0
      %2465 = vmatpush1.msra.mxu0 0.0
      %2466 = vmatprep.subr.mxu0 0.0
      %2467 = vmatpush1.msra.mxu0 0.0
      %2468 = vmatprep.subr.mxu0 0.0
      %2469 = vmatpush1.msra.mxu0 0.0
      %2470 = vmatprep.subr.mxu0 0.0
      %2471 = vmatpush1.msra.mxu0 0.0
      %2472 = vmatprep.subr.mxu0 0.0
      %2473 = vmatpush1.msra.mxu0 0.0
      %2474 = vmatprep.subr.mxu0 0.0
      %2475 = vmatpush1.msra.mxu0 0.0
      %2476 = vmatprep.subr.mxu0 0.0
      %2477 = vmatpush1.msra.mxu0 0.0
      %2478 = vmatprep.subr.mxu0 0.0
      %2479 = vmatpush1.msra.mxu0 0.0
      %2480 = vmatprep.subr.mxu0 %v2447
      %2481 = vmatpush1.msra.mxu0 %v2446
      %2482 = vmatprep.subr.mxu0 %v2445
      %2483 = vmatpush1.msra.mxu0 %v2444
      %2484 = vmatprep.subr.mxu0 %v2443
      %2485 = vmatpush1.msra.mxu0 %v2442
      %2486 = vmatprep.subr.mxu0 %v2441
      %2487 = vmatpush1.msra.mxu0 %v2440
      %2488 = vmatprep.subr.mxu0 0.0
      %2489 = vmatpush2.msra.mxu0 0.0
      %2490 = vmatprep.subr.mxu0 0.0
      %2491 = vmatpush2.msra.mxu0 0.0
      %2492 = vmatprep.subr.mxu0 0.0
      %2493 = vmatpush2.msra.mxu0 0.0
      %2494 = vmatprep.subr.mxu0 0.0
      %2495 = vmatpush2.msra.mxu0 0.0
      %2496 = vmatprep.subr.mxu0 0.0
      %2497 = vmatpush2.msra.mxu0 0.0
      %2498 = vmatprep.subr.mxu0 0.0
      %2499 = vmatpush2.msra.mxu0 0.0
      %2500 = vmatprep.subr.mxu0 0.0
      %2501 = vmatpush2.msra.mxu0 0.0
      %2502 = vmatprep.subr.mxu0 0.0
      %2503 = vmatpush2.msra.mxu0 0.0
      %2504 = vmatprep.subr.mxu0 0.0
      %2505 = vmatpush2.msra.mxu0 0.0
      %2506 = vmatprep.subr.mxu0 0.0
      %2507 = vmatpush2.msra.mxu0 0.0
      %2508 = vmatprep.subr.mxu0 0.0
      %2509 = vmatpush2.msra.mxu0 0.0
      %2510 = vmatprep.subr.mxu0 0.0
      %2511 = vmatpush2.msra.mxu0 0.0
      %2512 = vmatprep.subr.mxu0 0.0
      %2513 = vmatpush2.msra.mxu0 0.0
      %2514 = vmatprep.subr.mxu0 0.0
      %2515 = vmatpush2.msra.mxu0 0.0
      %2516 = vmatprep.subr.mxu0 0.0
      %2517 = vmatpush2.msra.mxu0 0.0
      %2518 = vmatprep.subr.mxu0 0.0
      %2519 = vmatpush2.msra.mxu0 0.0
      %2520 = vmatprep.mubr.f32.mxu0 0.0
      %2521 = vmatmul.mubr.f32.gmra.mxu0 %v2451
      %v2522 = vpop.f32.mrf.mxu0
      %v2523 = vadd.f32 0.0, %v2522
      %v2524 = vpop.f32.mrf.mxu0
      %v2525 = vadd.f32 0.0, %v2524
      %2526 = vmatprep.mubr.f32.mxu0 0.0
      %2527 = vmatmul.mubr.f32.gmra.mxu0 %v2454
      %v2528 = vpop.f32.mrf.mxu0
      %v2529 = vadd.f32 0.0, %v2528
      %v2530 = vpop.f32.mrf.mxu0
      %v2531 = vadd.f32 0.0, %v2530
      %2532 = vdwg.mxu0
      %v2533 = vld [vmem:[%s10] sm:$0xff]
      %v2534 = vld [vmem:[%s10 + $0x8] sm:$0xff]
      %2536 = vset.pattern.permute.xlu0 0
      %2537 = vperm.xlu0 %2536, %v2533
      %v2538 = vpop.permute.xlu0 %2537
      %2541 = vset.pattern.permute.xlu0 0
      %2542 = vperm.xlu0 %2541, %v2534
      %v2543 = vpop.permute.xlu0 %2542
      %v2545 = vmul.f32 %v2523, %v2538
      %v2546 = vmul.f32 %v2525, %v2538
      %v2547 = vmul.f32 %v2529, %v2543
      %v2548 = vmul.f32 %v2531, %v2543
      %v2549 = vld [vmem:[%s11] sm:$0xff]
      %v2550 = vld [vmem:[%s11 + $0x8] sm:$0xff]
      %2552 = vset.pattern.permute.xlu0 0
      %2553 = vperm.xlu0 %2552, %v2549
      %v2554 = vpop.permute.xlu0 %2553
      %2557 = vset.pattern.permute.xlu0 0
      %2558 = vperm.xlu0 %2557, %v2550
      %v2559 = vpop.permute.xlu0 %2558
      %v2561 = vadd.f32 %v2545, %v2554
      %v2562 = vadd.f32 %v2546, %v2554
      %v2563 = vadd.f32 %v2547, %v2559
      %v2564 = vadd.f32 %v2548, %v2559
      %v2565 = vadd.f32 %v2432, %v2561
      %v2566 = vadd.f32 %v2433, %v2562
      %v2567 = vadd.f32 %v2434, %v2563
      %v2568 = vadd.f32 %v2435, %v2564
      %vm2569 = vcmp.ge.f32.partialorder %v2565, 0.0
      %vm2570 = vcmp.ge.f32.partialorder %v2566, 0.0
      %vm2571 = vcmp.ge.f32.partialorder %v2567, 0.0
      %vm2572 = vcmp.ge.f32.partialorder %v2568, 0.0
      %v2573 = vld [vmem:[%s12] sm:$0xff]
      %v2574 = vld [vmem:[%s12 + $0x8] sm:$0xff]
      %2576 = vset.pattern.permute.xlu0 0
      %2577 = vperm.xlu0 %2576, %v2573
      %v2578 = vpop.permute.xlu0 %2577
      %2581 = vset.pattern.permute.xlu0 0
      %2582 = vperm.xlu0 %2581, %v2574
      %v2583 = vpop.permute.xlu0 %2582
      %v2585 = vmul.f32 %v2578, %v2565
      %v2586 = vmul.f32 %v2578, %v2566
      %v2587 = vmul.f32 %v2583, %v2567
      %v2588 = vmul.f32 %v2583, %v2568
      %v2589 = vsel %vm2569, %v2565, %v2585
      %v2590 = vsel %vm2570, %v2566, %v2586
      %v2591 = vsel %vm2571, %v2567, %v2587
      %v2592 = vsel %vm2572, %v2568, %v2588
      %2593 = vrot.lane.b32.xlu0 %v2589, 17
      %v2594 = vpop.permute.xlu0 %2593
      %2595 = vrot.lane.b32.xlu0 %v2591, 17
      %v2596 = vpop.permute.xlu0 %2595
      %2597 = vrot.lane.b32.xlu0 %v2590, 17
      %v2598 = vpop.permute.xlu0 %2597
      %2599 = vrot.lane.b32.xlu0 %v2592, 17
      %v2600 = vpop.permute.xlu0 %2599
      %v2601 = vsel %vm681, %v2594, %v2598
      %v2602 = vsel %vm681, %v2596, %v2600
      %v2603 = vsel %vm681, %v2598, %v2594
      %v2604 = vsel %vm681, %v2600, %v2596
      %v2605 = vsel %vm694, %v2603, 0.0
      %v2606 = vsel %vm695, %v2601, 0.0
      %v2607 = vsel %vm694, %v2604, 0.0
      %v2608 = vsel %vm695, %v2602, 0.0
      %v2609 = vld [vmem:[%s13] sm:$0xff]
      %v2610 = vld [vmem:[%s13 + $0x8] sm:$0xff]
      %2611 = vrot.lane.b32.xlu0 %v2589, 16
      %v2612 = vpop.permute.xlu0 %2611
      %2613 = vrot.lane.b32.xlu0 %v2591, 16
      %v2614 = vpop.permute.xlu0 %2613
      %2615 = vrot.lane.b32.xlu0 %v2590, 16
      %v2616 = vpop.permute.xlu0 %2615
      %2617 = vrot.lane.b32.xlu0 %v2592, 16
      %v2618 = vpop.permute.xlu0 %2617
      %v2619 = vsel %vm703, %v2612, %v2616
      %v2620 = vsel %vm703, %v2614, %v2618
      %v2621 = vsel %vm703, %v2616, %v2612
      %v2622 = vsel %vm703, %v2618, %v2614
      %v2623 = vsel %vm715, %v2621, 0.0
      %v2624 = vsel %vm716, %v2619, 0.0
      %v2625 = vsel %vm715, %v2622, 0.0
      %v2626 = vsel %vm716, %v2620, 0.0
      %s2627 = scalar_lea.vmem %s13, 16
      %v2628 = vld [vmem:[%s2627] sm:$0xff]
      %v2629 = vld [vmem:[%s2627 + $0x8] sm:$0xff]
      %vm2630 = vcmask 130048
      %v2632 = vsel %vm2630, %v2628, 0
      %v2635 = vsel %vm2630, %v2629, 0
      %2637 = vmatprep.subr.mxu0 0.0
      %2638 = vmatpush1.msra.mxu0 0.0
      %2639 = vmatprep.subr.mxu0 0.0
      %2640 = vmatpush1.msra.mxu0 0.0
      %2641 = vmatprep.subr.mxu0 0.0
      %2642 = vmatpush1.msra.mxu0 0.0
      %2643 = vmatprep.subr.mxu0 0.0
      %2644 = vmatpush1.msra.mxu0 0.0
      %2645 = vmatprep.subr.mxu0 0.0
      %2646 = vmatpush1.msra.mxu0 0.0
      %2647 = vmatprep.subr.mxu0 0.0
      %2648 = vmatpush1.msra.mxu0 0.0
      %2649 = vmatprep.subr.mxu0 0.0
      %2650 = vmatpush1.msra.mxu0 0.0
      %2651 = vmatprep.subr.mxu0 0.0
      %2652 = vmatpush1.msra.mxu0 0.0
      %2653 = vmatprep.subr.mxu0 0.0
      %2654 = vmatpush1.msra.mxu0 0.0
      %2655 = vmatprep.subr.mxu0 0.0
      %2656 = vmatpush1.msra.mxu0 0.0
      %2657 = vmatprep.subr.mxu0 0.0
      %2658 = vmatpush1.msra.mxu0 0.0
      %2659 = vmatprep.subr.mxu0 0.0
      %2660 = vmatpush1.msra.mxu0 0.0
      %2661 = vmatprep.subr.mxu0 0.0
      %2662 = vmatpush1.msra.mxu0 0.0
      %2663 = vmatprep.subr.mxu0 0.0
      %2664 = vmatpush1.msra.mxu0 0.0
      %2665 = vmatprep.subr.mxu0 %v2626
      %2666 = vmatpush1.msra.mxu0 %v2625
      %2667 = vmatprep.subr.mxu0 %v2624
      %2668 = vmatpush1.msra.mxu0 %v2623
      %2669 = vmatprep.subr.mxu0 0.0
      %2670 = vmatpush2.msra.mxu0 0.0
      %2671 = vmatprep.subr.mxu0 0.0
      %2672 = vmatpush2.msra.mxu0 0.0
      %2673 = vmatprep.subr.mxu0 0.0
      %2674 = vmatpush2.msra.mxu0 0.0
      %2675 = vmatprep.subr.mxu0 0.0
      %2676 = vmatpush2.msra.mxu0 0.0
      %2677 = vmatprep.subr.mxu0 0.0
      %2678 = vmatpush2.msra.mxu0 0.0
      %2679 = vmatprep.subr.mxu0 0.0
      %2680 = vmatpush2.msra.mxu0 0.0
      %2681 = vmatprep.subr.mxu0 0.0
      %2682 = vmatpush2.msra.mxu0 0.0
      %2683 = vmatprep.subr.mxu0 0.0
      %2684 = vmatpush2.msra.mxu0 0.0
      %2685 = vmatprep.subr.mxu0 0.0
      %2686 = vmatpush2.msra.mxu0 0.0
      %2687 = vmatprep.subr.mxu0 0.0
      %2688 = vmatpush2.msra.mxu0 0.0
      %2689 = vmatprep.subr.mxu0 0.0
      %2690 = vmatpush2.msra.mxu0 0.0
      %2691 = vmatprep.subr.mxu0 0.0
      %2692 = vmatpush2.msra.mxu0 0.0
      %2693 = vmatprep.subr.mxu0 0.0
      %2694 = vmatpush2.msra.mxu0 0.0
      %2695 = vmatprep.subr.mxu0 0.0
      %2696 = vmatpush2.msra.mxu0 0.0
      %2697 = vmatprep.subr.mxu0 0.0
      %2698 = vmatpush2.msra.mxu0 0.0
      %2699 = vmatprep.subr.mxu0 0.0
      %2700 = vmatpush2.msra.mxu0 0.0
      %2701 = vmatprep.mubr.f32.mxu0 0.0
      %2702 = vmatmul.mubr.f32.gmra.mxu0 %v2632
      %v2703 = vpop.f32.mrf.mxu0
      %v2704 = vadd.f32 0.0, %v2703
      %v2705 = vpop.f32.mrf.mxu0
      %v2706 = vadd.f32 0.0, %v2705
      %2707 = vmatprep.mubr.f32.mxu0 0.0
      %2708 = vmatmul.mubr.f32.gmra.mxu0 %v2635
      %v2709 = vpop.f32.mrf.mxu0
      %v2710 = vadd.f32 0.0, %v2709
      %v2711 = vpop.f32.mrf.mxu0
      %v2712 = vadd.f32 0.0, %v2711
      %2713 = vdwg.mxu0
      %v2715 = vsel %vm2630, %v2609, 0
      %v2718 = vsel %vm2630, %v2610, 0
      %2720 = vmatprep.subr.mxu0 0.0
      %2721 = vmatpush1.msra.mxu0 0.0
      %2722 = vmatprep.subr.mxu0 0.0
      %2723 = vmatpush1.msra.mxu0 0.0
      %2724 = vmatprep.subr.mxu0 0.0
      %2725 = vmatpush1.msra.mxu0 0.0
      %2726 = vmatprep.subr.mxu0 0.0
      %2727 = vmatpush1.msra.mxu0 0.0
      %2728 = vmatprep.subr.mxu0 0.0
      %2729 = vmatpush1.msra.mxu0 0.0
      %2730 = vmatprep.subr.mxu0 0.0
      %2731 = vmatpush1.msra.mxu0 0.0
      %2732 = vmatprep.subr.mxu0 0.0
      %2733 = vmatpush1.msra.mxu0 0.0
      %2734 = vmatprep.subr.mxu0 0.0
      %2735 = vmatpush1.msra.mxu0 0.0
      %2736 = vmatprep.subr.mxu0 0.0
      %2737 = vmatpush1.msra.mxu0 0.0
      %2738 = vmatprep.subr.mxu0 0.0
      %2739 = vmatpush1.msra.mxu0 0.0
      %2740 = vmatprep.subr.mxu0 0.0
      %2741 = vmatpush1.msra.mxu0 0.0
      %2742 = vmatprep.subr.mxu0 0.0
      %2743 = vmatpush1.msra.mxu0 0.0
      %2744 = vmatprep.subr.mxu0 0.0
      %2745 = vmatpush1.msra.mxu0 0.0
      %2746 = vmatprep.subr.mxu0 0.0
      %2747 = vmatpush1.msra.mxu0 0.0
      %2748 = vmatprep.subr.mxu0 %v2608
      %2749 = vmatpush1.msra.mxu0 %v2607
      %2750 = vmatprep.subr.mxu0 %v2606
      %2751 = vmatpush1.msra.mxu0 %v2605
      %2752 = vmatprep.subr.mxu0 0.0
      %2753 = vmatpush2.msra.mxu0 0.0
      %2754 = vmatprep.subr.mxu0 0.0
      %2755 = vmatpush2.msra.mxu0 0.0
      %2756 = vmatprep.subr.mxu0 0.0
      %2757 = vmatpush2.msra.mxu0 0.0
      %2758 = vmatprep.subr.mxu0 0.0
      %2759 = vmatpush2.msra.mxu0 0.0
      %2760 = vmatprep.subr.mxu0 0.0
      %2761 = vmatpush2.msra.mxu0 0.0
      %2762 = vmatprep.subr.mxu0 0.0
      %2763 = vmatpush2.msra.mxu0 0.0
      %2764 = vmatprep.subr.mxu0 0.0
      %2765 = vmatpush2.msra.mxu0 0.0
      %2766 = vmatprep.subr.mxu0 0.0
      %2767 = vmatpush2.msra.mxu0 0.0
      %2768 = vmatprep.subr.mxu0 0.0
      %2769 = vmatpush2.msra.mxu0 0.0
      %2770 = vmatprep.subr.mxu0 0.0
      %2771 = vmatpush2.msra.mxu0 0.0
      %2772 = vmatprep.subr.mxu0 0.0
      %2773 = vmatpush2.msra.mxu0 0.0
      %2774 = vmatprep.subr.mxu0 0.0
      %2775 = vmatpush2.msra.mxu0 0.0
      %2776 = vmatprep.subr.mxu0 0.0
      %2777 = vmatpush2.msra.mxu0 0.0
      %2778 = vmatprep.subr.mxu0 0.0
      %2779 = vmatpush2.msra.mxu0 0.0
      %2780 = vmatprep.subr.mxu0 0.0
      %2781 = vmatpush2.msra.mxu0 0.0
      %2782 = vmatprep.subr.mxu0 0.0
      %2783 = vmatpush2.msra.mxu0 0.0
      %2784 = vmatprep.mubr.f32.mxu0 0.0
      %2785 = vmatmul.mubr.f32.gmra.mxu0 %v2715
      %v2786 = vpop.f32.mrf.mxu0
      %v2787 = vadd.f32 %v2704, %v2786
      %v2788 = vpop.f32.mrf.mxu0
      %v2789 = vadd.f32 %v2706, %v2788
      %2790 = vmatprep.mubr.f32.mxu0 0.0
      %2791 = vmatmul.mubr.f32.gmra.mxu0 %v2718
      %v2792 = vpop.f32.mrf.mxu0
      %v2793 = vadd.f32 %v2710, %v2792
      %v2794 = vpop.f32.mrf.mxu0
      %v2795 = vadd.f32 %v2712, %v2794
      %2796 = vdwg.mxu0
      %2797 = vrot.lane.b32.xlu0 %v2589, 15
      %v2798 = vpop.permute.xlu0 %2797
      %2799 = vrot.lane.b32.xlu0 %v2591, 15
      %v2800 = vpop.permute.xlu0 %2799
      %2801 = vrot.lane.b32.xlu0 %v2590, 15
      %v2802 = vpop.permute.xlu0 %2801
      %2803 = vrot.lane.b32.xlu0 %v2592, 15
      %v2804 = vpop.permute.xlu0 %2803
      %v2805 = vsel %vm874, %v2798, %v2802
      %v2806 = vsel %vm874, %v2800, %v2804
      %v2807 = vsel %vm874, %v2802, %v2798
      %v2808 = vsel %vm874, %v2804, %v2800
      %v2809 = vsel %vm887, %v2807, 0.0
      %v2810 = vsel %vm888, %v2805, 0.0
      %v2811 = vsel %vm887, %v2808, 0.0
      %v2812 = vsel %vm888, %v2806, 0.0
      %s2813 = scalar_lea.vmem %s13, 32
      %v2814 = vld [vmem:[%s2813] sm:$0xff]
      %v2815 = vld [vmem:[%s2813 + $0x8] sm:$0xff]
      %v2817 = vsel %vm2630, %v2814, 0
      %v2820 = vsel %vm2630, %v2815, 0
      %2822 = vmatprep.subr.mxu0 0.0
      %2823 = vmatpush1.msra.mxu0 0.0
      %2824 = vmatprep.subr.mxu0 0.0
      %2825 = vmatpush1.msra.mxu0 0.0
      %2826 = vmatprep.subr.mxu0 0.0
      %2827 = vmatpush1.msra.mxu0 0.0
      %2828 = vmatprep.subr.mxu0 0.0
      %2829 = vmatpush1.msra.mxu0 0.0
      %2830 = vmatprep.subr.mxu0 0.0
      %2831 = vmatpush1.msra.mxu0 0.0
      %2832 = vmatprep.subr.mxu0 0.0
      %2833 = vmatpush1.msra.mxu0 0.0
      %2834 = vmatprep.subr.mxu0 0.0
      %2835 = vmatpush1.msra.mxu0 0.0
      %2836 = vmatprep.subr.mxu0 0.0
      %2837 = vmatpush1.msra.mxu0 0.0
      %2838 = vmatprep.subr.mxu0 0.0
      %2839 = vmatpush1.msra.mxu0 0.0
      %2840 = vmatprep.subr.mxu0 0.0
      %2841 = vmatpush1.msra.mxu0 0.0
      %2842 = vmatprep.subr.mxu0 0.0
      %2843 = vmatpush1.msra.mxu0 0.0
      %2844 = vmatprep.subr.mxu0 0.0
      %2845 = vmatpush1.msra.mxu0 0.0
      %2846 = vmatprep.subr.mxu0 0.0
      %2847 = vmatpush1.msra.mxu0 0.0
      %2848 = vmatprep.subr.mxu0 0.0
      %2849 = vmatpush1.msra.mxu0 0.0
      %2850 = vmatprep.subr.mxu0 %v2812
      %2851 = vmatpush1.msra.mxu0 %v2811
      %2852 = vmatprep.subr.mxu0 %v2810
      %2853 = vmatpush1.msra.mxu0 %v2809
      %2854 = vmatprep.subr.mxu0 0.0
      %2855 = vmatpush2.msra.mxu0 0.0
      %2856 = vmatprep.subr.mxu0 0.0
      %2857 = vmatpush2.msra.mxu0 0.0
      %2858 = vmatprep.subr.mxu0 0.0
      %2859 = vmatpush2.msra.mxu0 0.0
      %2860 = vmatprep.subr.mxu0 0.0
      %2861 = vmatpush2.msra.mxu0 0.0
      %2862 = vmatprep.subr.mxu0 0.0
      %2863 = vmatpush2.msra.mxu0 0.0
      %2864 = vmatprep.subr.mxu0 0.0
      %2865 = vmatpush2.msra.mxu0 0.0
      %2866 = vmatprep.subr.mxu0 0.0
      %2867 = vmatpush2.msra.mxu0 0.0
      %2868 = vmatprep.subr.mxu0 0.0
      %2869 = vmatpush2.msra.mxu0 0.0
      %2870 = vmatprep.subr.mxu0 0.0
      %2871 = vmatpush2.msra.mxu0 0.0
      %2872 = vmatprep.subr.mxu0 0.0
      %2873 = vmatpush2.msra.mxu0 0.0
      %2874 = vmatprep.subr.mxu0 0.0
      %2875 = vmatpush2.msra.mxu0 0.0
      %2876 = vmatprep.subr.mxu0 0.0
      %2877 = vmatpush2.msra.mxu0 0.0
      %2878 = vmatprep.subr.mxu0 0.0
      %2879 = vmatpush2.msra.mxu0 0.0
      %2880 = vmatprep.subr.mxu0 0.0
      %2881 = vmatpush2.msra.mxu0 0.0
      %2882 = vmatprep.subr.mxu0 0.0
      %2883 = vmatpush2.msra.mxu0 0.0
      %2884 = vmatprep.subr.mxu0 0.0
      %2885 = vmatpush2.msra.mxu0 0.0
      %2886 = vmatprep.mubr.f32.mxu0 0.0
      %2887 = vmatmul.mubr.f32.gmra.mxu0 %v2817
      %v2888 = vpop.f32.mrf.mxu0
      %v2889 = vadd.f32 0.0, %v2888
      %v2890 = vpop.f32.mrf.mxu0
      %v2891 = vadd.f32 0.0, %v2890
      %2892 = vmatprep.mubr.f32.mxu0 0.0
      %2893 = vmatmul.mubr.f32.gmra.mxu0 %v2820
      %v2894 = vpop.f32.mrf.mxu0
      %v2895 = vadd.f32 0.0, %v2894
      %v2896 = vpop.f32.mrf.mxu0
      %v2897 = vadd.f32 0.0, %v2896
      %2898 = vdwg.mxu0
      %v2899 = vadd.f32 %v2787, %v2889
      %v2900 = vadd.f32 %v2789, %v2891
      %v2901 = vadd.f32 %v2793, %v2895
      %v2902 = vadd.f32 %v2795, %v2897
      %2903 = vrot.lane.b32.xlu0 %v2589, 1
      %v2904 = vpop.permute.xlu0 %2903
      %2905 = vrot.lane.b32.xlu0 %v2591, 1
      %v2906 = vpop.permute.xlu0 %2905
      %2907 = vrot.lane.b32.xlu0 %v2590, 1
      %v2908 = vpop.permute.xlu0 %2907
      %2909 = vrot.lane.b32.xlu0 %v2592, 1
      %v2910 = vpop.permute.xlu0 %2909
      %v2911 = vsel %vm973, %v2904, %v2908
      %v2912 = vsel %vm973, %v2906, %v2910
      %v2913 = vsel %vm973, %v2908, %v2904
      %v2914 = vsel %vm973, %v2910, %v2906
      %v2915 = vsel %vm985, %v2913, 0.0
      %v2916 = vsel %vm986, %v2911, 0.0
      %v2917 = vsel %vm985, %v2914, 0.0
      %v2918 = vsel %vm986, %v2912, 0.0
      %s2919 = scalar_lea.vmem %s13, 48
      %v2920 = vld [vmem:[%s2919] sm:$0xff]
      %v2921 = vld [vmem:[%s2919 + $0x8] sm:$0xff]
      %v2923 = vsel %vm2630, %v2920, 0
      %v2926 = vsel %vm2630, %v2921, 0
      %2928 = vmatprep.subr.mxu0 0.0
      %2929 = vmatpush1.msra.mxu0 0.0
      %2930 = vmatprep.subr.mxu0 0.0
      %2931 = vmatpush1.msra.mxu0 0.0
      %2932 = vmatprep.subr.mxu0 0.0
      %2933 = vmatpush1.msra.mxu0 0.0
      %2934 = vmatprep.subr.mxu0 0.0
      %2935 = vmatpush1.msra.mxu0 0.0
      %2936 = vmatprep.subr.mxu0 0.0
      %2937 = vmatpush1.msra.mxu0 0.0
      %2938 = vmatprep.subr.mxu0 0.0
      %2939 = vmatpush1.msra.mxu0 0.0
      %2940 = vmatprep.subr.mxu0 0.0
      %2941 = vmatpush1.msra.mxu0 0.0
      %2942 = vmatprep.subr.mxu0 0.0
      %2943 = vmatpush1.msra.mxu0 0.0
      %2944 = vmatprep.subr.mxu0 0.0
      %2945 = vmatpush1.msra.mxu0 0.0
      %2946 = vmatprep.subr.mxu0 0.0
      %2947 = vmatpush1.msra.mxu0 0.0
      %2948 = vmatprep.subr.mxu0 0.0
      %2949 = vmatpush1.msra.mxu0 0.0
      %2950 = vmatprep.subr.mxu0 0.0
      %2951 = vmatpush1.msra.mxu0 0.0
      %2952 = vmatprep.subr.mxu0 0.0
      %2953 = vmatpush1.msra.mxu0 0.0
      %2954 = vmatprep.subr.mxu0 0.0
      %2955 = vmatpush1.msra.mxu0 0.0
      %2956 = vmatprep.subr.mxu0 %v2918
      %2957 = vmatpush1.msra.mxu0 %v2917
      %2958 = vmatprep.subr.mxu0 %v2916
      %2959 = vmatpush1.msra.mxu0 %v2915
      %2960 = vmatprep.subr.mxu0 0.0
      %2961 = vmatpush2.msra.mxu0 0.0
      %2962 = vmatprep.subr.mxu0 0.0
      %2963 = vmatpush2.msra.mxu0 0.0
      %2964 = vmatprep.subr.mxu0 0.0
      %2965 = vmatpush2.msra.mxu0 0.0
      %2966 = vmatprep.subr.mxu0 0.0
      %2967 = vmatpush2.msra.mxu0 0.0
      %2968 = vmatprep.subr.mxu0 0.0
      %2969 = vmatpush2.msra.mxu0 0.0
      %2970 = vmatprep.subr.mxu0 0.0
      %2971 = vmatpush2.msra.mxu0 0.0
      %2972 = vmatprep.subr.mxu0 0.0
      %2973 = vmatpush2.msra.mxu0 0.0
      %2974 = vmatprep.subr.mxu0 0.0
      %2975 = vmatpush2.msra.mxu0 0.0
      %2976 = vmatprep.subr.mxu0 0.0
      %2977 = vmatpush2.msra.mxu0 0.0
      %2978 = vmatprep.subr.mxu0 0.0
      %2979 = vmatpush2.msra.mxu0 0.0
      %2980 = vmatprep.subr.mxu0 0.0
      %2981 = vmatpush2.msra.mxu0 0.0
      %2982 = vmatprep.subr.mxu0 0.0
      %2983 = vmatpush2.msra.mxu0 0.0
      %2984 = vmatprep.subr.mxu0 0.0
      %2985 = vmatpush2.msra.mxu0 0.0
      %2986 = vmatprep.subr.mxu0 0.0
      %2987 = vmatpush2.msra.mxu0 0.0
      %2988 = vmatprep.subr.mxu0 0.0
      %2989 = vmatpush2.msra.mxu0 0.0
      %2990 = vmatprep.subr.mxu0 0.0
      %2991 = vmatpush2.msra.mxu0 0.0
      %2992 = vmatprep.mubr.f32.mxu0 0.0
      %2993 = vmatmul.mubr.f32.gmra.mxu0 %v2923
      %v2994 = vpop.f32.mrf.mxu0
      %v2995 = vadd.f32 0.0, %v2994
      %v2996 = vpop.f32.mrf.mxu0
      %v2997 = vadd.f32 0.0, %v2996
      %2998 = vmatprep.mubr.f32.mxu0 0.0
      %2999 = vmatmul.mubr.f32.gmra.mxu0 %v2926
      %v3000 = vpop.f32.mrf.mxu0
      %v3001 = vadd.f32 0.0, %v3000
      %v3002 = vpop.f32.mrf.mxu0
      %v3003 = vadd.f32 0.0, %v3002
      %3004 = vdwg.mxu0
      %v3005 = vadd.f32 %v2899, %v2995
      %v3006 = vadd.f32 %v2900, %v2997
      %v3007 = vadd.f32 %v2901, %v3001
      %v3008 = vadd.f32 %v2902, %v3003
      %s3009 = scalar_lea.vmem %s13, 64
      %v3010 = vld [vmem:[%s3009] sm:$0xff]
      %v3011 = vld [vmem:[%s3009 + $0x8] sm:$0xff]
      %v3013 = vsel %vm2630, %v3010, 0
      %v3016 = vsel %vm2630, %v3011, 0
      %3018 = vmatprep.subr.mxu0 0.0
      %3019 = vmatpush1.msra.mxu0 0.0
      %3020 = vmatprep.subr.mxu0 0.0
      %3021 = vmatpush1.msra.mxu0 0.0
      %3022 = vmatprep.subr.mxu0 0.0
      %3023 = vmatpush1.msra.mxu0 0.0
      %3024 = vmatprep.subr.mxu0 0.0
      %3025 = vmatpush1.msra.mxu0 0.0
      %3026 = vmatprep.subr.mxu0 0.0
      %3027 = vmatpush1.msra.mxu0 0.0
      %3028 = vmatprep.subr.mxu0 0.0
      %3029 = vmatpush1.msra.mxu0 0.0
      %3030 = vmatprep.subr.mxu0 0.0
      %3031 = vmatpush1.msra.mxu0 0.0
      %3032 = vmatprep.subr.mxu0 0.0
      %3033 = vmatpush1.msra.mxu0 0.0
      %3034 = vmatprep.subr.mxu0 0.0
      %3035 = vmatpush1.msra.mxu0 0.0
      %3036 = vmatprep.subr.mxu0 0.0
      %3037 = vmatpush1.msra.mxu0 0.0
      %3038 = vmatprep.subr.mxu0 0.0
      %3039 = vmatpush1.msra.mxu0 0.0
      %3040 = vmatprep.subr.mxu0 0.0
      %3041 = vmatpush1.msra.mxu0 0.0
      %3042 = vmatprep.subr.mxu0 0.0
      %3043 = vmatpush1.msra.mxu0 0.0
      %3044 = vmatprep.subr.mxu0 0.0
      %3045 = vmatpush1.msra.mxu0 0.0
      %3046 = vmatprep.subr.mxu0 %v2592
      %3047 = vmatpush1.msra.mxu0 %v2591
      %3048 = vmatprep.subr.mxu0 %v2590
      %3049 = vmatpush1.msra.mxu0 %v2589
      %3050 = vmatprep.subr.mxu0 0.0
      %3051 = vmatpush2.msra.mxu0 0.0
      %3052 = vmatprep.subr.mxu0 0.0
      %3053 = vmatpush2.msra.mxu0 0.0
      %3054 = vmatprep.subr.mxu0 0.0
      %3055 = vmatpush2.msra.mxu0 0.0
      %3056 = vmatprep.subr.mxu0 0.0
      %3057 = vmatpush2.msra.mxu0 0.0
      %3058 = vmatprep.subr.mxu0 0.0
      %3059 = vmatpush2.msra.mxu0 0.0
      %3060 = vmatprep.subr.mxu0 0.0
      %3061 = vmatpush2.msra.mxu0 0.0
      %3062 = vmatprep.subr.mxu0 0.0
      %3063 = vmatpush2.msra.mxu0 0.0
      %3064 = vmatprep.subr.mxu0 0.0
      %3065 = vmatpush2.msra.mxu0 0.0
      %3066 = vmatprep.subr.mxu0 0.0
      %3067 = vmatpush2.msra.mxu0 0.0
      %3068 = vmatprep.subr.mxu0 0.0
      %3069 = vmatpush2.msra.mxu0 0.0
      %3070 = vmatprep.subr.mxu0 0.0
      %3071 = vmatpush2.msra.mxu0 0.0
      %3072 = vmatprep.subr.mxu0 0.0
      %3073 = vmatpush2.msra.mxu0 0.0
      %3074 = vmatprep.subr.mxu0 0.0
      %3075 = vmatpush2.msra.mxu0 0.0
      %3076 = vmatprep.subr.mxu0 0.0
      %3077 = vmatpush2.msra.mxu0 0.0
      %3078 = vmatprep.subr.mxu0 0.0
      %3079 = vmatpush2.msra.mxu0 0.0
      %3080 = vmatprep.subr.mxu0 0.0
      %3081 = vmatpush2.msra.mxu0 0.0
      %3082 = vmatprep.mubr.f32.mxu0 0.0
      %3083 = vmatmul.mubr.f32.gmra.mxu0 %v3013
      %v3084 = vpop.f32.mrf.mxu0
      %v3085 = vadd.f32 0.0, %v3084
      %v3086 = vpop.f32.mrf.mxu0
      %v3087 = vadd.f32 0.0, %v3086
      %3088 = vmatprep.mubr.f32.mxu0 0.0
      %3089 = vmatmul.mubr.f32.gmra.mxu0 %v3016
      %v3090 = vpop.f32.mrf.mxu0
      %v3091 = vadd.f32 0.0, %v3090
      %v3092 = vpop.f32.mrf.mxu0
      %v3093 = vadd.f32 0.0, %v3092
      %3094 = vdwg.mxu0
      %v3095 = vadd.f32 %v3005, %v3085
      %v3096 = vadd.f32 %v3006, %v3087
      %v3097 = vadd.f32 %v3007, %v3091
      %v3098 = vadd.f32 %v3008, %v3093
      %3099 = vrot.lane.b32.xlu0 %v2589, 127
      %v3100 = vpop.permute.xlu0 %3099
      %3101 = vrot.lane.b32.xlu0 %v2591, 127
      %v3102 = vpop.permute.xlu0 %3101
      %3103 = vrot.lane.b32.xlu0 %v2590, 127
      %v3104 = vpop.permute.xlu0 %3103
      %3105 = vrot.lane.b32.xlu0 %v2592, 127
      %v3106 = vpop.permute.xlu0 %3105
      %v3107 = vsel %vm1149, %v3100, %v3104
      %v3108 = vsel %vm1149, %v3102, %v3106
      %v3109 = vsel %vm1149, %v3104, %v3100
      %v3110 = vsel %vm1149, %v3106, %v3102
      %v3111 = vsel %vm1161, %v3107, 0.0
      %v3112 = vsel %vm1162, %v3109, 0.0
      %v3113 = vsel %vm1161, %v3108, 0.0
      %v3114 = vsel %vm1162, %v3110, 0.0
      %s3115 = scalar_lea.vmem %s13, 80
      %v3116 = vld [vmem:[%s3115] sm:$0xff]
      %v3117 = vld [vmem:[%s3115 + $0x8] sm:$0xff]
      %v3119 = vsel %vm2630, %v3116, 0
      %v3122 = vsel %vm2630, %v3117, 0
      %3124 = vmatprep.subr.mxu0 0.0
      %3125 = vmatpush1.msra.mxu0 0.0
      %3126 = vmatprep.subr.mxu0 0.0
      %3127 = vmatpush1.msra.mxu0 0.0
      %3128 = vmatprep.subr.mxu0 0.0
      %3129 = vmatpush1.msra.mxu0 0.0
      %3130 = vmatprep.subr.mxu0 0.0
      %3131 = vmatpush1.msra.mxu0 0.0
      %3132 = vmatprep.subr.mxu0 0.0
      %3133 = vmatpush1.msra.mxu0 0.0
      %3134 = vmatprep.subr.mxu0 0.0
      %3135 = vmatpush1.msra.mxu0 0.0
      %3136 = vmatprep.subr.mxu0 0.0
      %3137 = vmatpush1.msra.mxu0 0.0
      %3138 = vmatprep.subr.mxu0 0.0
      %3139 = vmatpush1.msra.mxu0 0.0
      %3140 = vmatprep.subr.mxu0 0.0
      %3141 = vmatpush1.msra.mxu0 0.0
      %3142 = vmatprep.subr.mxu0 0.0
      %3143 = vmatpush1.msra.mxu0 0.0
      %3144 = vmatprep.subr.mxu0 0.0
      %3145 = vmatpush1.msra.mxu0 0.0
      %3146 = vmatprep.subr.mxu0 0.0
      %3147 = vmatpush1.msra.mxu0 0.0
      %3148 = vmatprep.subr.mxu0 0.0
      %3149 = vmatpush1.msra.mxu0 0.0
      %3150 = vmatprep.subr.mxu0 0.0
      %3151 = vmatpush1.msra.mxu0 0.0
      %3152 = vmatprep.subr.mxu0 %v3114
      %3153 = vmatpush1.msra.mxu0 %v3113
      %3154 = vmatprep.subr.mxu0 %v3112
      %3155 = vmatpush1.msra.mxu0 %v3111
      %3156 = vmatprep.subr.mxu0 0.0
      %3157 = vmatpush2.msra.mxu0 0.0
      %3158 = vmatprep.subr.mxu0 0.0
      %3159 = vmatpush2.msra.mxu0 0.0
      %3160 = vmatprep.subr.mxu0 0.0
      %3161 = vmatpush2.msra.mxu0 0.0
      %3162 = vmatprep.subr.mxu0 0.0
      %3163 = vmatpush2.msra.mxu0 0.0
      %3164 = vmatprep.subr.mxu0 0.0
      %3165 = vmatpush2.msra.mxu0 0.0
      %3166 = vmatprep.subr.mxu0 0.0
      %3167 = vmatpush2.msra.mxu0 0.0
      %3168 = vmatprep.subr.mxu0 0.0
      %3169 = vmatpush2.msra.mxu0 0.0
      %3170 = vmatprep.subr.mxu0 0.0
      %3171 = vmatpush2.msra.mxu0 0.0
      %3172 = vmatprep.subr.mxu0 0.0
      %3173 = vmatpush2.msra.mxu0 0.0
      %3174 = vmatprep.subr.mxu0 0.0
      %3175 = vmatpush2.msra.mxu0 0.0
      %3176 = vmatprep.subr.mxu0 0.0
      %3177 = vmatpush2.msra.mxu0 0.0
      %3178 = vmatprep.subr.mxu0 0.0
      %3179 = vmatpush2.msra.mxu0 0.0
      %3180 = vmatprep.subr.mxu0 0.0
      %3181 = vmatpush2.msra.mxu0 0.0
      %3182 = vmatprep.subr.mxu0 0.0
      %3183 = vmatpush2.msra.mxu0 0.0
      %3184 = vmatprep.subr.mxu0 0.0
      %3185 = vmatpush2.msra.mxu0 0.0
      %3186 = vmatprep.subr.mxu0 0.0
      %3187 = vmatpush2.msra.mxu0 0.0
      %3188 = vmatprep.mubr.f32.mxu0 0.0
      %3189 = vmatmul.mubr.f32.gmra.mxu0 %v3119
      %v3190 = vpop.f32.mrf.mxu0
      %v3191 = vadd.f32 0.0, %v3190
      %v3192 = vpop.f32.mrf.mxu0
      %v3193 = vadd.f32 0.0, %v3192
      %3194 = vmatprep.mubr.f32.mxu0 0.0
      %3195 = vmatmul.mubr.f32.gmra.mxu0 %v3122
      %v3196 = vpop.f32.mrf.mxu0
      %v3197 = vadd.f32 0.0, %v3196
      %v3198 = vpop.f32.mrf.mxu0
      %v3199 = vadd.f32 0.0, %v3198
      %3200 = vdwg.mxu0
      %v3201 = vadd.f32 %v3095, %v3191
      %v3202 = vadd.f32 %v3096, %v3193
      %v3203 = vadd.f32 %v3097, %v3197
      %v3204 = vadd.f32 %v3098, %v3199
      %3205 = vrot.lane.b32.xlu0 %v2589, 113
      %v3206 = vpop.permute.xlu0 %3205
      %3207 = vrot.lane.b32.xlu0 %v2591, 113
      %v3208 = vpop.permute.xlu0 %3207
      %3209 = vrot.lane.b32.xlu0 %v2590, 113
      %v3210 = vpop.permute.xlu0 %3209
      %3211 = vrot.lane.b32.xlu0 %v2592, 113
      %v3212 = vpop.permute.xlu0 %3211
      %v3213 = vsel %vm1247, %v3206, %v3210
      %v3214 = vsel %vm1247, %v3208, %v3212
      %v3215 = vsel %vm1247, %v3210, %v3206
      %v3216 = vsel %vm1247, %v3212, %v3208
      %v3217 = vsel %vm1260, %v3213, 0.0
      %v3218 = vsel %vm1261, %v3215, 0.0
      %v3219 = vsel %vm1260, %v3214, 0.0
      %v3220 = vsel %vm1261, %v3216, 0.0
      %s3221 = scalar_lea.vmem %s13, 96
      %v3222 = vld [vmem:[%s3221] sm:$0xff]
      %v3223 = vld [vmem:[%s3221 + $0x8] sm:$0xff]
      %v3225 = vsel %vm2630, %v3222, 0
      %v3228 = vsel %vm2630, %v3223, 0
      %3230 = vmatprep.subr.mxu0 0.0
      %3231 = vmatpush1.msra.mxu0 0.0
      %3232 = vmatprep.subr.mxu0 0.0
      %3233 = vmatpush1.msra.mxu0 0.0
      %3234 = vmatprep.subr.mxu0 0.0
      %3235 = vmatpush1.msra.mxu0 0.0
      %3236 = vmatprep.subr.mxu0 0.0
      %3237 = vmatpush1.msra.mxu0 0.0
      %3238 = vmatprep.subr.mxu0 0.0
      %3239 = vmatpush1.msra.mxu0 0.0
      %3240 = vmatprep.subr.mxu0 0.0
      %3241 = vmatpush1.msra.mxu0 0.0
      %3242 = vmatprep.subr.mxu0 0.0
      %3243 = vmatpush1.msra.mxu0 0.0
      %3244 = vmatprep.subr.mxu0 0.0
      %3245 = vmatpush1.msra.mxu0 0.0
      %3246 = vmatprep.subr.mxu0 0.0
      %3247 = vmatpush1.msra.mxu0 0.0
      %3248 = vmatprep.subr.mxu0 0.0
      %3249 = vmatpush1.msra.mxu0 0.0
      %3250 = vmatprep.subr.mxu0 0.0
      %3251 = vmatpush1.msra.mxu0 0.0
      %3252 = vmatprep.subr.mxu0 0.0
      %3253 = vmatpush1.msra.mxu0 0.0
      %3254 = vmatprep.subr.mxu0 0.0
      %3255 = vmatpush1.msra.mxu0 0.0
      %3256 = vmatprep.subr.mxu0 0.0
      %3257 = vmatpush1.msra.mxu0 0.0
      %3258 = vmatprep.subr.mxu0 %v3220
      %3259 = vmatpush1.msra.mxu0 %v3219
      %3260 = vmatprep.subr.mxu0 %v3218
      %3261 = vmatpush1.msra.mxu0 %v3217
      %3262 = vmatprep.subr.mxu0 0.0
      %3263 = vmatpush2.msra.mxu0 0.0
      %3264 = vmatprep.subr.mxu0 0.0
      %3265 = vmatpush2.msra.mxu0 0.0
      %3266 = vmatprep.subr.mxu0 0.0
      %3267 = vmatpush2.msra.mxu0 0.0
      %3268 = vmatprep.subr.mxu0 0.0
      %3269 = vmatpush2.msra.mxu0 0.0
      %3270 = vmatprep.subr.mxu0 0.0
      %3271 = vmatpush2.msra.mxu0 0.0
      %3272 = vmatprep.subr.mxu0 0.0
      %3273 = vmatpush2.msra.mxu0 0.0
      %3274 = vmatprep.subr.mxu0 0.0
      %3275 = vmatpush2.msra.mxu0 0.0
      %3276 = vmatprep.subr.mxu0 0.0
      %3277 = vmatpush2.msra.mxu0 0.0
      %3278 = vmatprep.subr.mxu0 0.0
      %3279 = vmatpush2.msra.mxu0 0.0
      %3280 = vmatprep.subr.mxu0 0.0
      %3281 = vmatpush2.msra.mxu0 0.0
      %3282 = vmatprep.subr.mxu0 0.0
      %3283 = vmatpush2.msra.mxu0 0.0
      %3284 = vmatprep.subr.mxu0 0.0
      %3285 = vmatpush2.msra.mxu0 0.0
      %3286 = vmatprep.subr.mxu0 0.0
      %3287 = vmatpush2.msra.mxu0 0.0
      %3288 = vmatprep.subr.mxu0 0.0
      %3289 = vmatpush2.msra.mxu0 0.0
      %3290 = vmatprep.subr.mxu0 0.0
      %3291 = vmatpush2.msra.mxu0 0.0
      %3292 = vmatprep.subr.mxu0 0.0
      %3293 = vmatpush2.msra.mxu0 0.0
      %3294 = vmatprep.mubr.f32.mxu0 0.0
      %3295 = vmatmul.mubr.f32.gmra.mxu0 %v3225
      %v3296 = vpop.f32.mrf.mxu0
      %v3297 = vadd.f32 0.0, %v3296
      %v3298 = vpop.f32.mrf.mxu0
      %v3299 = vadd.f32 0.0, %v3298
      %3300 = vmatprep.mubr.f32.mxu0 0.0
      %3301 = vmatmul.mubr.f32.gmra.mxu0 %v3228
      %v3302 = vpop.f32.mrf.mxu0
      %v3303 = vadd.f32 0.0, %v3302
      %v3304 = vpop.f32.mrf.mxu0
      %v3305 = vadd.f32 0.0, %v3304
      %3306 = vdwg.mxu0
      %v3307 = vadd.f32 %v3201, %v3297
      %v3308 = vadd.f32 %v3202, %v3299
      %v3309 = vadd.f32 %v3203, %v3303
      %v3310 = vadd.f32 %v3204, %v3305
      %3311 = vrot.lane.b32.xlu0 %v2589, 112
      %v3312 = vpop.permute.xlu0 %3311
      %3313 = vrot.lane.b32.xlu0 %v2591, 112
      %v3314 = vpop.permute.xlu0 %3313
      %3315 = vrot.lane.b32.xlu0 %v2590, 112
      %v3316 = vpop.permute.xlu0 %3315
      %3317 = vrot.lane.b32.xlu0 %v2592, 112
      %v3318 = vpop.permute.xlu0 %3317
      %v3319 = vsel %vm1346, %v3312, %v3316
      %v3320 = vsel %vm1346, %v3314, %v3318
      %v3321 = vsel %vm1346, %v3316, %v3312
      %v3322 = vsel %vm1346, %v3318, %v3314
      %v3323 = vsel %vm1358, %v3319, 0.0
      %v3324 = vsel %vm1359, %v3321, 0.0
      %v3325 = vsel %vm1358, %v3320, 0.0
      %v3326 = vsel %vm1359, %v3322, 0.0
      %s3327 = scalar_lea.vmem %s13, 112
      %v3328 = vld [vmem:[%s3327] sm:$0xff]
      %v3329 = vld [vmem:[%s3327 + $0x8] sm:$0xff]
      %v3331 = vsel %vm2630, %v3328, 0
      %v3334 = vsel %vm2630, %v3329, 0
      %3336 = vmatprep.subr.mxu0 0.0
      %3337 = vmatpush1.msra.mxu0 0.0
      %3338 = vmatprep.subr.mxu0 0.0
      %3339 = vmatpush1.msra.mxu0 0.0
      %3340 = vmatprep.subr.mxu0 0.0
      %3341 = vmatpush1.msra.mxu0 0.0
      %3342 = vmatprep.subr.mxu0 0.0
      %3343 = vmatpush1.msra.mxu0 0.0
      %3344 = vmatprep.subr.mxu0 0.0
      %3345 = vmatpush1.msra.mxu0 0.0
      %3346 = vmatprep.subr.mxu0 0.0
      %3347 = vmatpush1.msra.mxu0 0.0
      %3348 = vmatprep.subr.mxu0 0.0
      %3349 = vmatpush1.msra.mxu0 0.0
      %3350 = vmatprep.subr.mxu0 0.0
      %3351 = vmatpush1.msra.mxu0 0.0
      %3352 = vmatprep.subr.mxu0 0.0
      %3353 = vmatpush1.msra.mxu0 0.0
      %3354 = vmatprep.subr.mxu0 0.0
      %3355 = vmatpush1.msra.mxu0 0.0
      %3356 = vmatprep.subr.mxu0 0.0
      %3357 = vmatpush1.msra.mxu0 0.0
      %3358 = vmatprep.subr.mxu0 0.0
      %3359 = vmatpush1.msra.mxu0 0.0
      %3360 = vmatprep.subr.mxu0 0.0
      %3361 = vmatpush1.msra.mxu0 0.0
      %3362 = vmatprep.subr.mxu0 0.0
      %3363 = vmatpush1.msra.mxu0 0.0
      %3364 = vmatprep.subr.mxu0 %v3326
      %3365 = vmatpush1.msra.mxu0 %v3325
      %3366 = vmatprep.subr.mxu0 %v3324
      %3367 = vmatpush1.msra.mxu0 %v3323
      %3368 = vmatprep.subr.mxu0 0.0
      %3369 = vmatpush2.msra.mxu0 0.0
      %3370 = vmatprep.subr.mxu0 0.0
      %3371 = vmatpush2.msra.mxu0 0.0
      %3372 = vmatprep.subr.mxu0 0.0
      %3373 = vmatpush2.msra.mxu0 0.0
      %3374 = vmatprep.subr.mxu0 0.0
      %3375 = vmatpush2.msra.mxu0 0.0
      %3376 = vmatprep.subr.mxu0 0.0
      %3377 = vmatpush2.msra.mxu0 0.0
      %3378 = vmatprep.subr.mxu0 0.0
      %3379 = vmatpush2.msra.mxu0 0.0
      %3380 = vmatprep.subr.mxu0 0.0
      %3381 = vmatpush2.msra.mxu0 0.0
      %3382 = vmatprep.subr.mxu0 0.0
      %3383 = vmatpush2.msra.mxu0 0.0
      %3384 = vmatprep.subr.mxu0 0.0
      %3385 = vmatpush2.msra.mxu0 0.0
      %3386 = vmatprep.subr.mxu0 0.0
      %3387 = vmatpush2.msra.mxu0 0.0
      %3388 = vmatprep.subr.mxu0 0.0
      %3389 = vmatpush2.msra.mxu0 0.0
      %3390 = vmatprep.subr.mxu0 0.0
      %3391 = vmatpush2.msra.mxu0 0.0
      %3392 = vmatprep.subr.mxu0 0.0
      %3393 = vmatpush2.msra.mxu0 0.0
      %3394 = vmatprep.subr.mxu0 0.0
      %3395 = vmatpush2.msra.mxu0 0.0
      %3396 = vmatprep.subr.mxu0 0.0
      %3397 = vmatpush2.msra.mxu0 0.0
      %3398 = vmatprep.subr.mxu0 0.0
      %3399 = vmatpush2.msra.mxu0 0.0
      %3400 = vmatprep.mubr.f32.mxu0 0.0
      %3401 = vmatmul.mubr.f32.gmra.mxu0 %v3331
      %v3402 = vpop.f32.mrf.mxu0
      %v3403 = vadd.f32 0.0, %v3402
      %v3404 = vpop.f32.mrf.mxu0
      %v3405 = vadd.f32 0.0, %v3404
      %3406 = vmatprep.mubr.f32.mxu0 0.0
      %3407 = vmatmul.mubr.f32.gmra.mxu0 %v3334
      %v3408 = vpop.f32.mrf.mxu0
      %v3409 = vadd.f32 0.0, %v3408
      %v3410 = vpop.f32.mrf.mxu0
      %v3411 = vadd.f32 0.0, %v3410
      %3412 = vdwg.mxu0
      %v3413 = vadd.f32 %v3307, %v3403
      %v3414 = vadd.f32 %v3308, %v3405
      %v3415 = vadd.f32 %v3309, %v3409
      %v3416 = vadd.f32 %v3310, %v3411
      %3417 = vrot.lane.b32.xlu0 %v2589, 111
      %v3418 = vpop.permute.xlu0 %3417
      %3419 = vrot.lane.b32.xlu0 %v2591, 111
      %v3420 = vpop.permute.xlu0 %3419
      %3421 = vrot.lane.b32.xlu0 %v2590, 111
      %v3422 = vpop.permute.xlu0 %3421
      %3423 = vrot.lane.b32.xlu0 %v2592, 111
      %v3424 = vpop.permute.xlu0 %3423
      %v3425 = vsel %vm1444, %v3418, %v3422
      %v3426 = vsel %vm1444, %v3420, %v3424
      %v3427 = vsel %vm1444, %v3422, %v3418
      %v3428 = vsel %vm1444, %v3424, %v3420
      %v3429 = vsel %vm1457, %v3425, 0.0
      %v3430 = vsel %vm1458, %v3427, 0.0
      %v3431 = vsel %vm1457, %v3426, 0.0
      %v3432 = vsel %vm1458, %v3428, 0.0
      %s3433 = scalar_lea.vmem %s13, 128
      %v3434 = vld [vmem:[%s3433] sm:$0xff]
      %v3435 = vld [vmem:[%s3433 + $0x8] sm:$0xff]
      %v3437 = vsel %vm2630, %v3434, 0
      %v3440 = vsel %vm2630, %v3435, 0
      %3442 = vmatprep.subr.mxu0 0.0
      %3443 = vmatpush1.msra.mxu0 0.0
      %3444 = vmatprep.subr.mxu0 0.0
      %3445 = vmatpush1.msra.mxu0 0.0
      %3446 = vmatprep.subr.mxu0 0.0
      %3447 = vmatpush1.msra.mxu0 0.0
      %3448 = vmatprep.subr.mxu0 0.0
      %3449 = vmatpush1.msra.mxu0 0.0
      %3450 = vmatprep.subr.mxu0 0.0
      %3451 = vmatpush1.msra.mxu0 0.0
      %3452 = vmatprep.subr.mxu0 0.0
      %3453 = vmatpush1.msra.mxu0 0.0
      %3454 = vmatprep.subr.mxu0 0.0
      %3455 = vmatpush1.msra.mxu0 0.0
      %3456 = vmatprep.subr.mxu0 0.0
      %3457 = vmatpush1.msra.mxu0 0.0
      %3458 = vmatprep.subr.mxu0 0.0
      %3459 = vmatpush1.msra.mxu0 0.0
      %3460 = vmatprep.subr.mxu0 0.0
      %3461 = vmatpush1.msra.mxu0 0.0
      %3462 = vmatprep.subr.mxu0 0.0
      %3463 = vmatpush1.msra.mxu0 0.0
      %3464 = vmatprep.subr.mxu0 0.0
      %3465 = vmatpush1.msra.mxu0 0.0
      %3466 = vmatprep.subr.mxu0 0.0
      %3467 = vmatpush1.msra.mxu0 0.0
      %3468 = vmatprep.subr.mxu0 0.0
      %3469 = vmatpush1.msra.mxu0 0.0
      %3470 = vmatprep.subr.mxu0 %v3432
      %3471 = vmatpush1.msra.mxu0 %v3431
      %3472 = vmatprep.subr.mxu0 %v3430
      %3473 = vmatpush1.msra.mxu0 %v3429
      %3474 = vmatprep.subr.mxu0 0.0
      %3475 = vmatpush2.msra.mxu0 0.0
      %3476 = vmatprep.subr.mxu0 0.0
      %3477 = vmatpush2.msra.mxu0 0.0
      %3478 = vmatprep.subr.mxu0 0.0
      %3479 = vmatpush2.msra.mxu0 0.0
      %3480 = vmatprep.subr.mxu0 0.0
      %3481 = vmatpush2.msra.mxu0 0.0
      %3482 = vmatprep.subr.mxu0 0.0
      %3483 = vmatpush2.msra.mxu0 0.0
      %3484 = vmatprep.subr.mxu0 0.0
      %3485 = vmatpush2.msra.mxu0 0.0
      %3486 = vmatprep.subr.mxu0 0.0
      %3487 = vmatpush2.msra.mxu0 0.0
      %3488 = vmatprep.subr.mxu0 0.0
      %3489 = vmatpush2.msra.mxu0 0.0
      %3490 = vmatprep.subr.mxu0 0.0
      %3491 = vmatpush2.msra.mxu0 0.0
      %3492 = vmatprep.subr.mxu0 0.0
      %3493 = vmatpush2.msra.mxu0 0.0
      %3494 = vmatprep.subr.mxu0 0.0
      %3495 = vmatpush2.msra.mxu0 0.0
      %3496 = vmatprep.subr.mxu0 0.0
      %3497 = vmatpush2.msra.mxu0 0.0
      %3498 = vmatprep.subr.mxu0 0.0
      %3499 = vmatpush2.msra.mxu0 0.0
      %3500 = vmatprep.subr.mxu0 0.0
      %3501 = vmatpush2.msra.mxu0 0.0
      %3502 = vmatprep.subr.mxu0 0.0
      %3503 = vmatpush2.msra.mxu0 0.0
      %3504 = vmatprep.subr.mxu0 0.0
      %3505 = vmatpush2.msra.mxu0 0.0
      %3506 = vmatprep.mubr.f32.mxu0 0.0
      %3507 = vmatmul.mubr.f32.gmra.mxu0 %v3437
      %v3508 = vpop.f32.mrf.mxu0
      %v3509 = vadd.f32 0.0, %v3508
      %v3510 = vpop.f32.mrf.mxu0
      %v3511 = vadd.f32 0.0, %v3510
      %3512 = vmatprep.mubr.f32.mxu0 0.0
      %3513 = vmatmul.mubr.f32.gmra.mxu0 %v3440
      %v3514 = vpop.f32.mrf.mxu0
      %v3515 = vadd.f32 0.0, %v3514
      %v3516 = vpop.f32.mrf.mxu0
      %v3517 = vadd.f32 0.0, %v3516
      %3518 = vdwg.mxu0
      %v3519 = vadd.f32 %v3413, %v3509
      %v3520 = vadd.f32 %v3414, %v3511
      %v3521 = vadd.f32 %v3415, %v3515
      %v3522 = vadd.f32 %v3416, %v3517
      %v3523 = vld [vmem:[%s14] sm:$0xff]
      %v3524 = vld [vmem:[%s14 + $0x8] sm:$0xff]
      %3526 = vset.pattern.permute.xlu0 0
      %3527 = vperm.xlu0 %3526, %v3523
      %v3528 = vpop.permute.xlu0 %3527
      %3531 = vset.pattern.permute.xlu0 0
      %3532 = vperm.xlu0 %3531, %v3524
      %v3533 = vpop.permute.xlu0 %3532
      %v3535 = vmul.f32 %v3519, %v3528
      %v3536 = vmul.f32 %v3520, %v3528
      %v3537 = vmul.f32 %v3521, %v3533
      %v3538 = vmul.f32 %v3522, %v3533
      %v3539 = vld [vmem:[%s15] sm:$0xff]
      %v3540 = vld [vmem:[%s15 + $0x8] sm:$0xff]
      %3542 = vset.pattern.permute.xlu0 0
      %3543 = vperm.xlu0 %3542, %v3539
      %v3544 = vpop.permute.xlu0 %3543
      %3547 = vset.pattern.permute.xlu0 0
      %3548 = vperm.xlu0 %3547, %v3540
      %v3549 = vpop.permute.xlu0 %3548
      %v3551 = vadd.f32 %v3535, %v3544
      %v3552 = vadd.f32 %v3536, %v3544
      %v3553 = vadd.f32 %v3537, %v3549
      %v3554 = vadd.f32 %v3538, %v3549
      %vm3555 = vcmp.ge.f32.partialorder %v3551, 0.0
      %vm3556 = vcmp.ge.f32.partialorder %v3552, 0.0
      %vm3557 = vcmp.ge.f32.partialorder %v3553, 0.0
      %vm3558 = vcmp.ge.f32.partialorder %v3554, 0.0
      %v3559 = vld [vmem:[#allocation2] sm:$0x1]
      %v3561 = vlaneseq
      %v3562 = vshrl.u32 %v3561, 7
      %v3563 = vsub.s32 0, %v3562
      %v3564 = vrot.slane %v3559, %v3563
      %3565 = vset.pattern.permute.xlu0 0
      %3566 = vperm.xlu0 %3565, %v3564
      %v3567 = vpop.permute.xlu0 %3566
      %v3569 = vmul.f32 %v3567, %v3551
      %v3570 = vmul.f32 %v3567, %v3552
      %v3571 = vmul.f32 %v3567, %v3553
      %v3572 = vmul.f32 %v3567, %v3554
      %v3573 = vsel %vm3555, %v3551, %v3569
      %v3574 = vsel %vm3556, %v3552, %v3570
      %v3575 = vsel %vm3557, %v3553, %v3571
      %v3576 = vsel %vm3558, %v3554, %v3572
      %v3577 = vpack.c.bf16 %v3575, %v3573
      %v3578 = vpack.c.bf16 %v3576, %v3574
      %v3581 = vunpack.c.l.b16 %v3577
      %v3582 = vunpack.c.l.b16 %v3578
      %v3583 = vunpack.c.h.b16 %v3577
      %v3584 = vunpack.c.h.b16 %v3578
      %v3585 = vpack.c.b16 %v3582, %v3581
      %v3586 = vpack.c.b16 %v3584, %v3583
      %3589 = vst [vmem:[%s570] sm:$0xff] %v3585
      %3590 = vst [vmem:[%s570 + $0x8] sm:$0xff] %v3586
      %p3591 = scmp.lt.s32.totalorder %s30, 1
      %s3592 = scalar_select %p3591, %s30, 1
      %s3593 = smul.addr %s3592, 4
      %s3594 = smul.addr %s3593, 4
      %s3595 = scalar_lea.vmem %s17, %s3594
      // Predicated region
      $region89: #{conbine_feature_forward.1} parent=87 // pred_check
        %p3596 = pneg %p415
      $region90: #{conbine_feature_forward.1} parent=87 // pred_check_branch
        %3598 = sbr.rel (%p3596) target = $region92
      $region91: #{conbine_feature_forward.1} parent=87 // pred_region
        _
      $region92: #{conbine_feature_forward.1} parent=87 // pred_fallthru
        _
    $region88: #{conbine_feature_forward.1} parent=5 // pred_fallthru
      _
    %p3599 = scmp.le.s32.totalorder 2, %s25
    // Predicated region
    $region93: #{conbine_feature_forward.1} parent=5 // pred_check
      %p3600 = pneg %p3599
    $region94: #{conbine_feature_forward.1} parent=5 // pred_check_branch
      %3602 = sbr.rel (%p3600) target = $region96
    $region95: #{conbine_feature_forward.1} parent=5 // pred_region
      %s3603 = ssub.s32 %s25, 2
      // Predicated region
      $region97: #{conbine_feature_forward.1} parent=95 // pred_check
        %p3604 = pneg %p421
      $region98: #{conbine_feature_forward.1} parent=95 // pred_check_branch
        %3606 = sbr.rel (%p3604) target = $region100
      $region99: #{conbine_feature_forward.1} parent=95 // pred_region
        %p3607 = scmp.lt.s32.totalorder %s31, 1
        %s3608 = scalar_select %p3607, %s31, 1
        %s3609 = smul.addr %s3608, 4
        %s3610 = smul.addr %s3609, 4
        %s3611 = scalar_lea.vmem %s17, %s3610
      $region100: #{conbine_feature_forward.1} parent=95 // pred_fallthru
        _
    $region96: #{conbine_feature_forward.1} parent=5 // pred_fallthru
      _
  $region6: #{conbine_feature_forward.1} parent=0 // loop_footer
    %s29 = sadd.s32 1, %s25
  $region7: #{conbine_feature_forward.1} parent=0 // loop_footer_branch
    %24 = sbr.rel target = $region3
  $region8: #{conbine_feature_forward.1} parent=0 // loop_exit
    _

</llo_original>
